<compile_context>
chip_gen: v7x
topology: tpu7x:2x2x1
jax: 0.10.0
libtpu: 0.0.40
codegen_flags: <defaults>
</compile_context>

<pallas_src>
import numpy as np
import jax
import jax.numpy as jnp
from jax.experimental import pallas as pl
from jax.experimental.pallas import tpu as pltpu

# ----- NASCell hyper-parameters (module defaults) -----
C = 32
OP_NODES = 3
AT_NODES = 3
K_PART = 4                           # MixOp partial-channel factor (self.k)
CQ = C // K_PART                     # 8 channels fed through the op mixture
C_CONCAT = C * (OP_NODES + 1)        # 128
N_OP_EDGES = sum(i + 1 for i in range(OP_NODES))   # 6
N_AT_EDGES = sum(i + 1 for i in range(AT_NODES))   # 6
BANK = 2 * C * (OP_NODES + 1)        # 256 rows: per state [state(32); pooled(32)]

# TODO(synk): OPS/ATS primitive dicts and the Channel_shuffle body were not
# provided with the module. Representative, exactly-reproducible choices:
#   OPS = ['none', 'skip_connect', 'avg_pool_3x3', 'conv_1x1']  (on C//k channels)
#   ATS = ['identity', 'channel_gate', 'spatial_gate']          (on C_concat channels)
#   avg_pool_3x3 = 3x3, stride 1, pad 1, count_include_pad=False (DARTS convention;
#   PyTorch nn.AvgPool2d default is count_include_pad=True).
N_OP_PRIMS = 4
N_AT_PRIMS = 3


def channel_shuffle_perm(channels, groups):
    # Channel_shuffle: view (N, g, C//g, H, W) -> transpose(1, 2) -> flatten.
    # out[o] = in[perm[o]]
    return np.arange(channels, dtype=np.int64).reshape(
        groups, channels // groups).T.reshape(-1)


def nas_cell_forward(c_prev, params, weights_op, weights_at, weights_eg):
    N, Cc, H, W = c_prev.shape
    assert Cc == C_CONCAT
    HW = H * W
    M = N * HW
    # Toy kernel keeps the whole lane axis VMEM-resident.
    # TODO(synk): for larger N*H*W, tile M along a "parallel" grid axis
    # (this is also what would light up the 2nd TensorCore on v7x).
    assert M % 128 == 0, "M = N*H*W must be a multiple of 128 (lane width)"

    # ------------------ static (numpy) helpers ------------------
    # 3x3 avg-pool as 9 masked lane-rolls; 1/count folded into the mask
    # (count_include_pad=False, DARTS convention).
    hs = (np.arange(M) // W) % H
    ws = np.arange(M) % W
    offs = [(dh, dw) for dh in (-1, 0, 1) for dw in (-1, 0, 1)]
    valid = np.stack([((hs + dh >= 0) & (hs + dh < H) &
                       (ws + dw >= 0) & (ws + dw < W)) for dh, dw in offs]
                     ).astype(np.float32)                           # (9, M)
    pool_mask = valid / valid.sum(axis=0, keepdims=True)            # (9, M)
    shifts = [int((-(dh * W + dw)) % M) for dh, dw in offs]         # roll amounts

    # per-batch column indicator (column m belongs to image m // HW)
    bsel = (np.arange(M)[None, :] // HW == np.arange(N)[:, None]).astype(np.float32)

    perm = channel_shuffle_perm(C, K_PART)
    P = np.eye(C, dtype=np.float32)[perm]                # (P @ R)[o] = R[perm[o]]
    # state s is stored PRE-shuffle; Qs[s] is its pending channel permutation
    Qs = [np.eye(C, dtype=np.float32)] + [P] * OP_NODES

    # --------- fold arch scalars + shuffle + channel selection -----------
    # bank rows [2C*s : 2C*s+C] hold state s (pre-shuffle), rows
    # [2C*s+C : 2C*(s+1)] hold its 3x3-avg-pooled copy.  One MixOp edge from
    # state s becomes a single (C, BANK) matrix (skip + 1x1-conv + w_avg*pool
    # + untouched-channel passthrough, all scaled by weights_eg); a node is
    # the SUM of its edges' matrices, i.e. one (C,256)@(256,M) matmul.
    eyeq = jnp.eye(CQ, dtype=jnp.float32)
    g_nodes = []
    offset = 0
    for nd in range(OP_NODES):
        g = jnp.zeros((C, BANK), jnp.float32)
        for j in range(nd + 1):
            e = offset + j
            sel = jnp.asarray(Qs[j][:CQ, :])     # (CQ, C): actual first C//k channels
            rest = jnp.asarray(Qs[j][CQ:, :])    # (C-CQ, C): actual remaining channels
            # weights_op[e, 0] -> 'none' (zero op), contributes nothing
            w_skip, w_avg, w_conv = weights_op[e, 1], weights_op[e, 2], weights_op[e, 3]
            # TODO(synk): weights_eg scales the whole concatenated edge output
            # (mixed + untouched channels), matching the previous translation.
            weg = weights_eg[e]
            comb = w_skip * eyeq + w_conv * params['mixop_conv_w'][e].T  # skip+conv folded
            base = 2 * C * j
            g = g.at[:CQ, base:base + C].set(weg * (comb @ sel))
            g = g.at[:CQ, base + C:base + 2 * C].set(weg * w_avg * sel)
            g = g.at[CQ:, base:base + C].set(weg * rest)
        offset += nd + 1
        g_nodes.append(g)
    g_all = jnp.stack(g_nodes)                                   # (OP_NODES, C, BANK)

    # fusion 1x1 conv folded with each state's pending channel shuffle
    wf_cm = params['fusion_w'].T                                 # (Cc_out, Cc_in)
    wfuse = jnp.zeros((Cc, BANK), jnp.float32)
    for s in range(OP_NODES + 1):
        wfuse = wfuse.at[:, 2 * C * s:2 * C * s + C].set(
            wf_cm[:, C * s:C * (s + 1)] @ jnp.asarray(Qs[s]))
    pw_cm = params['process_w'].T                                # (C, Cc)

    xf = jnp.transpose(c_prev, (1, 0, 2, 3)).reshape(Cc, M)      # channels-major input

    # ------------------ the single fused kernel ------------------
    def kernel(wat_ref, x_ref, pw_ref, g_ref, fw_ref, mask_ref, bsel_ref,
               o_ref, bank_ref):

        def pool2d(v):
            # 3x3 avg pool = 9 masked lane-rolls (VPU/XLU), 1/count in the mask.
            acc = None
            for si in range(9):
                sv = v if shifts[si] == 0 else pltpu.roll(v, shifts[si], 1)
                t = mask_ref[si:si + 1, :] * sv
                acc = t if acc is None else acc + t
            return acc

        # ---- op stage: process conv + 3 nodes (6 MixOp edges), VMEM resident ----
        bank_ref[...] = jnp.zeros_like(bank_ref)     # zero-padded K columns stay exact
        r0 = jnp.dot(pw_ref[...], x_ref[...],
                     preferred_element_type=jnp.float32)                   # (C, M)
        bank_ref[0:C, :] = r0
        bank_ref[C:2 * C, :] = pool2d(r0)
        for nd in range(OP_NODES):
            r = jnp.dot(g_ref[nd], bank_ref[...],
                        preferred_element_type=jnp.float32)                # (C, M)
            base = 2 * C * (nd + 1)
            bank_ref[base:base + C, :] = r
            bank_ref[base + C:base + 2 * C, :] = pool2d(r)
        f0 = jnp.dot(fw_ref[...], bank_ref[...],
                     preferred_element_type=jnp.float32)                   # (Cc, M)

        # ---- attention stage: 3 nodes (6 MixAt edges), VMEM resident ----
        inv_hw = 1.0 / float(HW)

        def gates(h):
            # spatial gate: per-column (per n,hw) sigmoid of channel mean
            spg = jax.nn.sigmoid(jnp.mean(h, axis=0, keepdims=True))       # (1, M)
            # channel gate: per (n, c) sigmoid of spatial mean, broadcast per image
            chg = jnp.zeros_like(h)
            for n in range(N):
                sel = bsel_ref[n:n + 1, :]                                 # (1, M)
                mn = jnp.sum(h * sel, axis=1, keepdims=True) * inv_hw      # (Cc, 1)
                chg = chg + jax.nn.sigmoid(mn) * sel                       # (Cc, M)
            return chg, spg

        feats = [f0]
        fgates = [gates(f0)]
        off = 0
        for nd in range(AT_NODES):
            acc = None
            for j in range(len(feats)):
                e = off + j
                w_id = wat_ref[e, 0]
                w_ch = wat_ref[e, 1]
                w_sp = wat_ref[e, 2]
                chg, spg = fgates[j]
                term = feats[j] * (w_id + w_ch * chg + w_sp * spg)
                acc = term if acc is None else acc + term
            off += len(feats)
            feats.append(acc)
            if nd + 1 < AT_NODES:
                fgates.append(gates(acc))

        # residual connection with the original input
        o_ref[...] = (x_ref[...] + feats[-1]).astype(o_ref.dtype)

    out_cm = pl.pallas_call(
        kernel,
        out_shape=jax.ShapeDtypeStruct((Cc, M), jnp.float32),
        grid=(1,),
        in_specs=[
            pl.BlockSpec(memory_space=pltpu.MemorySpace.SMEM),         # weights_at (6,3)
            pl.BlockSpec((Cc, M), lambda i: (0, 0)),                   # input, channels-major
            pl.BlockSpec((C, Cc), lambda i: (0, 0)),                   # process conv weight
            pl.BlockSpec((OP_NODES, C, BANK), lambda i: (0, 0, 0)),    # folded per-node mats
            pl.BlockSpec((Cc, BANK), lambda i: (0, 0)),                # folded fusion weight
            pl.BlockSpec((9, M), lambda i: (0, 0)),                    # pool masks
            pl.BlockSpec((N, M), lambda i: (0, 0)),                    # batch indicators
        ],
        out_specs=pl.BlockSpec((Cc, M), lambda i: (0, 0)),
        scratch_shapes=[pltpu.VMEM((BANK, M), jnp.float32)],
        # Everything is sequentially dependent (node i needs node i-1), so one
        # arbitrary step; a tiled-M version would add a "parallel" axis (v7x 2 TCs).
        compiler_params=pltpu.CompilerParams(dimension_semantics=("arbitrary",)),
    )(weights_at, xf, pw_cm, g_all, wfuse, jnp.asarray(pool_mask), jnp.asarray(bsel))

    return jnp.transpose(out_cm.reshape(Cc, N, H, W), (1, 0, 2, 3))


if __name__ == "__main__":
    key = jax.random.PRNGKey(0)
    ks = jax.random.split(key, 7)

    N, H, W = 2, 8, 8
    c_prev = jax.random.normal(ks[0], (N, C_CONCAT, H, W), jnp.float32)

    # architecture weights (as produced upstream, e.g. softmax over alphas)
    weights_op = jax.nn.softmax(jax.random.normal(ks[1], (N_OP_EDGES, N_OP_PRIMS)), axis=-1)
    weights_at = jax.nn.softmax(jax.random.normal(ks[2], (N_AT_EDGES, N_AT_PRIMS)), axis=-1)
    weights_eg = jax.nn.sigmoid(jax.random.normal(ks[3], (N_OP_EDGES,)))

    # deterministic synthetic parameters
    params = {
        'process_w': 0.10 * jax.random.normal(ks[4], (C_CONCAT, C), jnp.float32),
        'fusion_w': 0.05 * jax.random.normal(ks[5], (C_CONCAT, C_CONCAT), jnp.float32),
        'mixop_conv_w': 0.10 * jax.random.normal(ks[6], (N_OP_EDGES, CQ, CQ), jnp.float32),
    }

    fwd = jax.jit(nas_cell_forward)
    out = jax.block_until_ready(fwd(c_prev, params, weights_op, weights_at, weights_eg))
    assert out.shape == c_prev.shape and out.dtype == c_prev.dtype
    assert bool(jnp.all(jnp.isfinite(out)))
    print("KERNEL_OK")
</pallas_src>

<mosaic_0001>
module attributes {stable_mosaic.version = 11 : i64} {
  func.func @kernel(%arg0: i32, %arg1: memref<6x3xf32, #tpu.memory_space<smem>>, %arg2: memref<128x128xf32, #tpu.memory_space<vmem>>, %arg3: memref<32x128xf32, #tpu.memory_space<vmem>>, %arg4: memref<3x32x256xf32, #tpu.memory_space<vmem>>, %arg5: memref<128x256xf32, #tpu.memory_space<vmem>>, %arg6: memref<9x128xf32, #tpu.memory_space<vmem>>, %arg7: memref<2x128xf32, #tpu.memory_space<vmem>>, %arg8: memref<128x128xf32, #tpu.memory_space<vmem>>, %arg9: memref<256x128xf32, #tpu.memory_space<vmem>>) attributes {dimension_semantics = [#tpu.dimension_semantics<arbitrary>], iteration_bounds = array<i64: 1>, scalar_prefetch = 0 : i64, scratch_operands = 1 : i64, tpu.core_type = #tpu.core_type<tc>, window_params = [{transform_indices = @transform_0, window_bounds = array<i64: 6, 3>}, {pipeline_mode = #tpu.pipeline_mode<synchronous>, transform_indices = @transform_1, window_bounds = array<i64: 128, 128>}, {pipeline_mode = #tpu.pipeline_mode<synchronous>, transform_indices = @transform_2, window_bounds = array<i64: 32, 128>}, {pipeline_mode = #tpu.pipeline_mode<synchronous>, transform_indices = @transform_3, window_bounds = array<i64: 3, 32, 256>}, {pipeline_mode = #tpu.pipeline_mode<synchronous>, transform_indices = @transform_4, window_bounds = array<i64: 128, 256>}, {pipeline_mode = #tpu.pipeline_mode<synchronous>, transform_indices = @transform_5, window_bounds = array<i64: 9, 128>}, {pipeline_mode = #tpu.pipeline_mode<synchronous>, transform_indices = @transform_6, window_bounds = array<i64: 2, 128>}, {pipeline_mode = #tpu.pipeline_mode<synchronous>, transform_indices = @transform_7, window_bounds = array<i64: 128, 128>}]} {
    %cst = arith.constant 0.000000e+00 : f32
    %0 = vector.broadcast %cst : f32 to vector<256x128xf32>
    %c0 = arith.constant 0 : index
    %c0_0 = arith.constant 0 : index
    %1 = vector.load %arg9[%c0, %c0_0] : memref<256x128xf32, #tpu.memory_space<vmem>>, vector<256x128xf32>
    tpu.vector_store %arg9[%c0, %c0_0], %0 {strides = array<i32>} : memref<256x128xf32, #tpu.memory_space<vmem>>, vector<256x128xf32>,
    %c0_1 = arith.constant 0 : index
    %c0_2 = arith.constant 0 : index
    %2 = vector.load %arg3[%c0_1, %c0_2] : memref<32x128xf32, #tpu.memory_space<vmem>>, vector<32x128xf32>
    %c0_3 = arith.constant 0 : index
    %c0_4 = arith.constant 0 : index
    %3 = vector.load %arg2[%c0_3, %c0_4] : memref<128x128xf32, #tpu.memory_space<vmem>>, vector<128x128xf32>
    %cst_5 = arith.constant dense<0.000000e+00> : vector<32x128xf32>
    %4 = tpu.matmul %2, %3, %cst_5 {dimension_numbers = #tpu.dot_dimension_numbers<[1], [0], [0], [1], [0, 0, 1, 1], [], []>} : vector<32x128xf32>, vector<128x128xf32>, vector<32x128xf32> -> vector<32x128xf32>
    %c0_6 = arith.constant 0 : index
    %c0_7 = arith.constant 0 : index
    %5 = vector.load %arg9[%c0_6, %c0_7] : memref<256x128xf32, #tpu.memory_space<vmem>>, vector<32x128xf32>
    tpu.vector_store %arg9[%c0_6, %c0_7], %4 {strides = array<i32>} : memref<256x128xf32, #tpu.memory_space<vmem>>, vector<32x128xf32>,
    %c9_i32 = arith.constant 9 : i32
    %6 = tpu.dynamic_rotate %4 by %c9_i32 dim 1 : vector<32x128xf32>, i32 -> vector<32x128xf32>
    %c0_8 = arith.constant 0 : index
    %c0_9 = arith.constant 0 : index
    %7 = vector.load %arg6[%c0_8, %c0_9] : memref<9x128xf32, #tpu.memory_space<vmem>>, vector<1x128xf32>
    %8 = vector.broadcast %7 : vector<1x128xf32> to vector<32x128xf32>
    %9 = arith.mulf %8, %6 : vector<32x128xf32>
    %c8_i32 = arith.constant 8 : i32
    %10 = tpu.dynamic_rotate %4 by %c8_i32 dim 1 : vector<32x128xf32>, i32 -> vector<32x128xf32>
    %c1 = arith.constant 1 : index
    %c0_10 = arith.constant 0 : index
    %11 = vector.load %arg6[%c1, %c0_10] : memref<9x128xf32, #tpu.memory_space<vmem>>, vector<1x128xf32>
    %12 = vector.broadcast %11 : vector<1x128xf32> to vector<32x128xf32>
    %13 = arith.mulf %12, %10 : vector<32x128xf32>
    %14 = arith.addf %9, %13 : vector<32x128xf32>
    %c7_i32 = arith.constant 7 : i32
    %15 = tpu.dynamic_rotate %4 by %c7_i32 dim 1 : vector<32x128xf32>, i32 -> vector<32x128xf32>
    %c2 = arith.constant 2 : index
    %c0_11 = arith.constant 0 : index
    %16 = vector.load %arg6[%c2, %c0_11] : memref<9x128xf32, #tpu.memory_space<vmem>>, vector<1x128xf32>
    %17 = vector.broadcast %16 : vector<1x128xf32> to vector<32x128xf32>
    %18 = arith.mulf %17, %15 : vector<32x128xf32>
    %19 = arith.addf %14, %18 : vector<32x128xf32>
    %c1_i32 = arith.constant 1 : i32
    %20 = tpu.dynamic_rotate %4 by %c1_i32 dim 1 : vector<32x128xf32>, i32 -> vector<32x128xf32>
    %c3 = arith.constant 3 : index
    %c0_12 = arith.constant 0 : index
    %21 = vector.load %arg6[%c3, %c0_12] : memref<9x128xf32, #tpu.memory_space<vmem>>, vector<1x128xf32>
    %22 = vector.broadcast %21 : vector<1x128xf32> to vector<32x128xf32>
    %23 = arith.mulf %22, %20 : vector<32x128xf32>
    %24 = arith.addf %19, %23 : vector<32x128xf32>
    %c4 = arith.constant 4 : index
    %c0_13 = arith.constant 0 : index
    %25 = vector.load %arg6[%c4, %c0_13] : memref<9x128xf32, #tpu.memory_space<vmem>>, vector<1x128xf32>
    %26 = vector.broadcast %25 : vector<1x128xf32> to vector<32x128xf32>
    %27 = arith.mulf %26, %4 : vector<32x128xf32>
    %28 = arith.addf %24, %27 : vector<32x128xf32>
    %c127_i32 = arith.constant 127 : i32
    %29 = tpu.dynamic_rotate %4 by %c127_i32 dim 1 : vector<32x128xf32>, i32 -> vector<32x128xf32>
    %c5 = arith.constant 5 : index
    %c0_14 = arith.constant 0 : index
    %30 = vector.load %arg6[%c5, %c0_14] : memref<9x128xf32, #tpu.memory_space<vmem>>, vector<1x128xf32>
    %31 = vector.broadcast %30 : vector<1x128xf32> to vector<32x128xf32>
    %32 = arith.mulf %31, %29 : vector<32x128xf32>
    %33 = arith.addf %28, %32 : vector<32x128xf32>
    %c121_i32 = arith.constant 121 : i32
    %34 = tpu.dynamic_rotate %4 by %c121_i32 dim 1 : vector<32x128xf32>, i32 -> vector<32x128xf32>
    %c6 = arith.constant 6 : index
    %c0_15 = arith.constant 0 : index
    %35 = vector.load %arg6[%c6, %c0_15] : memref<9x128xf32, #tpu.memory_space<vmem>>, vector<1x128xf32>
    %36 = vector.broadcast %35 : vector<1x128xf32> to vector<32x128xf32>
    %37 = arith.mulf %36, %34 : vector<32x128xf32>
    %38 = arith.addf %33, %37 : vector<32x128xf32>
    %c120_i32 = arith.constant 120 : i32
    %39 = tpu.dynamic_rotate %4 by %c120_i32 dim 1 : vector<32x128xf32>, i32 -> vector<32x128xf32>
    %c7 = arith.constant 7 : index
    %c0_16 = arith.constant 0 : index
    %40 = vector.load %arg6[%c7, %c0_16] : memref<9x128xf32, #tpu.memory_space<vmem>>, vector<1x128xf32>
    %41 = vector.broadcast %40 : vector<1x128xf32> to vector<32x128xf32>
    %42 = arith.mulf %41, %39 : vector<32x128xf32>
    %43 = arith.addf %38, %42 : vector<32x128xf32>
    %c119_i32 = arith.constant 119 : i32
    %44 = tpu.dynamic_rotate %4 by %c119_i32 dim 1 : vector<32x128xf32>, i32 -> vector<32x128xf32>
    %c8 = arith.constant 8 : index
    %c0_17 = arith.constant 0 : index
    %45 = vector.load %arg6[%c8, %c0_17] : memref<9x128xf32, #tpu.memory_space<vmem>>, vector<1x128xf32>
    %46 = vector.broadcast %45 : vector<1x128xf32> to vector<32x128xf32>
    %47 = arith.mulf %46, %44 : vector<32x128xf32>
    %48 = arith.addf %43, %47 : vector<32x128xf32>
    %c32 = arith.constant 32 : index
    %c0_18 = arith.constant 0 : index
    %49 = vector.load %arg9[%c32, %c0_18] : memref<256x128xf32, #tpu.memory_space<vmem>>, vector<32x128xf32>
    tpu.vector_store %arg9[%c32, %c0_18], %48 {strides = array<i32>} : memref<256x128xf32, #tpu.memory_space<vmem>>, vector<32x128xf32>,
    %c0_19 = arith.constant 0 : index
    %c0_20 = arith.constant 0 : index
    %c0_21 = arith.constant 0 : index
    %50 = vector.load %arg4[%c0_19, %c0_20, %c0_21] : memref<3x32x256xf32, #tpu.memory_space<vmem>>, vector<1x32x256xf32>
    %51 = vector.shape_cast %50 : vector<1x32x256xf32> to vector<32x256xf32>
    %c0_22 = arith.constant 0 : index
    %c0_23 = arith.constant 0 : index
    %52 = vector.load %arg9[%c0_22, %c0_23] : memref<256x128xf32, #tpu.memory_space<vmem>>, vector<256x128xf32>
    %cst_24 = arith.constant dense<0.000000e+00> : vector<32x128xf32>
    %53 = tpu.matmul %51, %52, %cst_24 {dimension_numbers = #tpu.dot_dimension_numbers<[1], [0], [0], [1], [0, 0, 1, 1], [], []>} : vector<32x256xf32>, vector<256x128xf32>, vector<32x128xf32> -> vector<32x128xf32>
    %c64 = arith.constant 64 : index
    %c0_25 = arith.constant 0 : index
    %54 = vector.load %arg9[%c64, %c0_25] : memref<256x128xf32, #tpu.memory_space<vmem>>, vector<32x128xf32>
    tpu.vector_store %arg9[%c64, %c0_25], %53 {strides = array<i32>} : memref<256x128xf32, #tpu.memory_space<vmem>>, vector<32x128xf32>,
    %c9_i32_26 = arith.constant 9 : i32
    %55 = tpu.dynamic_rotate %53 by %c9_i32_26 dim 1 : vector<32x128xf32>, i32 -> vector<32x128xf32>
    %c0_27 = arith.constant 0 : index
    %c0_28 = arith.constant 0 : index
    %56 = vector.load %arg6[%c0_27, %c0_28] : memref<9x128xf32, #tpu.memory_space<vmem>>, vector<1x128xf32>
    %57 = vector.broadcast %56 : vector<1x128xf32> to vector<32x128xf32>
    %58 = arith.mulf %57, %55 : vector<32x128xf32>
    %c8_i32_29 = arith.constant 8 : i32
    %59 = tpu.dynamic_rotate %53 by %c8_i32_29 dim 1 : vector<32x128xf32>, i32 -> vector<32x128xf32>
    %c1_30 = arith.constant 1 : index
    %c0_31 = arith.constant 0 : index
    %60 = vector.load %arg6[%c1_30, %c0_31] : memref<9x128xf32, #tpu.memory_space<vmem>>, vector<1x128xf32>
    %61 = vector.broadcast %60 : vector<1x128xf32> to vector<32x128xf32>
    %62 = arith.mulf %61, %59 : vector<32x128xf32>
    %63 = arith.addf %58, %62 : vector<32x128xf32>
    %c7_i32_32 = arith.constant 7 : i32
    %64 = tpu.dynamic_rotate %53 by %c7_i32_32 dim 1 : vector<32x128xf32>, i32 -> vector<32x128xf32>
    %c2_33 = arith.constant 2 : index
    %c0_34 = arith.constant 0 : index
    %65 = vector.load %arg6[%c2_33, %c0_34] : memref<9x128xf32, #tpu.memory_space<vmem>>, vector<1x128xf32>
    %66 = vector.broadcast %65 : vector<1x128xf32> to vector<32x128xf32>
    %67 = arith.mulf %66, %64 : vector<32x128xf32>
    %68 = arith.addf %63, %67 : vector<32x128xf32>
    %c1_i32_35 = arith.constant 1 : i32
    %69 = tpu.dynamic_rotate %53 by %c1_i32_35 dim 1 : vector<32x128xf32>, i32 -> vector<32x128xf32>
    %c3_36 = arith.constant 3 : index
    %c0_37 = arith.constant 0 : index
    %70 = vector.load %arg6[%c3_36, %c0_37] : memref<9x128xf32, #tpu.memory_space<vmem>>, vector<1x128xf32>
    %71 = vector.broadcast %70 : vector<1x128xf32> to vector<32x128xf32>
    %72 = arith.mulf %71, %69 : vector<32x128xf32>
    %73 = arith.addf %68, %72 : vector<32x128xf32>
    %c4_38 = arith.constant 4 : index
    %c0_39 = arith.constant 0 : index
    %74 = vector.load %arg6[%c4_38, %c0_39] : memref<9x128xf32, #tpu.memory_space<vmem>>, vector<1x128xf32>
    %75 = vector.broadcast %74 : vector<1x128xf32> to vector<32x128xf32>
    %76 = arith.mulf %75, %53 : vector<32x128xf32>
    %77 = arith.addf %73, %76 : vector<32x128xf32>
    %c127_i32_40 = arith.constant 127 : i32
    %78 = tpu.dynamic_rotate %53 by %c127_i32_40 dim 1 : vector<32x128xf32>, i32 -> vector<32x128xf32>
    %c5_41 = arith.constant 5 : index
    %c0_42 = arith.constant 0 : index
    %79 = vector.load %arg6[%c5_41, %c0_42] : memref<9x128xf32, #tpu.memory_space<vmem>>, vector<1x128xf32>
    %80 = vector.broadcast %79 : vector<1x128xf32> to vector<32x128xf32>
    %81 = arith.mulf %80, %78 : vector<32x128xf32>
    %82 = arith.addf %77, %81 : vector<32x128xf32>
    %c121_i32_43 = arith.constant 121 : i32
    %83 = tpu.dynamic_rotate %53 by %c121_i32_43 dim 1 : vector<32x128xf32>, i32 -> vector<32x128xf32>
    %c6_44 = arith.constant 6 : index
    %c0_45 = arith.constant 0 : index
    %84 = vector.load %arg6[%c6_44, %c0_45] : memref<9x128xf32, #tpu.memory_space<vmem>>, vector<1x128xf32>
    %85 = vector.broadcast %84 : vector<1x128xf32> to vector<32x128xf32>
    %86 = arith.mulf %85, %83 : vector<32x128xf32>
    %87 = arith.addf %82, %86 : vector<32x128xf32>
    %c120_i32_46 = arith.constant 120 : i32
    %88 = tpu.dynamic_rotate %53 by %c120_i32_46 dim 1 : vector<32x128xf32>, i32 -> vector<32x128xf32>
    %c7_47 = arith.constant 7 : index
    %c0_48 = arith.constant 0 : index
    %89 = vector.load %arg6[%c7_47, %c0_48] : memref<9x128xf32, #tpu.memory_space<vmem>>, vector<1x128xf32>
    %90 = vector.broadcast %89 : vector<1x128xf32> to vector<32x128xf32>
    %91 = arith.mulf %90, %88 : vector<32x128xf32>
    %92 = arith.addf %87, %91 : vector<32x128xf32>
    %c119_i32_49 = arith.constant 119 : i32
    %93 = tpu.dynamic_rotate %53 by %c119_i32_49 dim 1 : vector<32x128xf32>, i32 -> vector<32x128xf32>
    %c8_50 = arith.constant 8 : index
    %c0_51 = arith.constant 0 : index
    %94 = vector.load %arg6[%c8_50, %c0_51] : memref<9x128xf32, #tpu.memory_space<vmem>>, vector<1x128xf32>
    %95 = vector.broadcast %94 : vector<1x128xf32> to vector<32x128xf32>
    %96 = arith.mulf %95, %93 : vector<32x128xf32>
    %97 = arith.addf %92, %96 : vector<32x128xf32>
    %c96 = arith.constant 96 : index
    %c0_52 = arith.constant 0 : index
    %98 = vector.load %arg9[%c96, %c0_52] : memref<256x128xf32, #tpu.memory_space<vmem>>, vector<32x128xf32>
    tpu.vector_store %arg9[%c96, %c0_52], %97 {strides = array<i32>} : memref<256x128xf32, #tpu.memory_space<vmem>>, vector<32x128xf32>,
    %c1_53 = arith.constant 1 : index
    %c0_54 = arith.constant 0 : index
    %c0_55 = arith.constant 0 : index
    %99 = vector.load %arg4[%c1_53, %c0_54, %c0_55] : memref<3x32x256xf32, #tpu.memory_space<vmem>>, vector<1x32x256xf32>
    %100 = vector.shape_cast %99 : vector<1x32x256xf32> to vector<32x256xf32>
    %c0_56 = arith.constant 0 : index
    %c0_57 = arith.constant 0 : index
    %101 = vector.load %arg9[%c0_56, %c0_57] : memref<256x128xf32, #tpu.memory_space<vmem>>, vector<256x128xf32>
    %cst_58 = arith.constant dense<0.000000e+00> : vector<32x128xf32>
    %102 = tpu.matmul %100, %101, %cst_58 {dimension_numbers = #tpu.dot_dimension_numbers<[1], [0], [0], [1], [0, 0, 1, 1], [], []>} : vector<32x256xf32>, vector<256x128xf32>, vector<32x128xf32> -> vector<32x128xf32>
    %c128 = arith.constant 128 : index
    %c0_59 = arith.constant 0 : index
    %103 = vector.load %arg9[%c128, %c0_59] : memref<256x128xf32, #tpu.memory_space<vmem>>, vector<32x128xf32>
    tpu.vector_store %arg9[%c128, %c0_59], %102 {strides = array<i32>} : memref<256x128xf32, #tpu.memory_space<vmem>>, vector<32x128xf32>,
    %c9_i32_60 = arith.constant 9 : i32
    %104 = tpu.dynamic_rotate %102 by %c9_i32_60 dim 1 : vector<32x128xf32>, i32 -> vector<32x128xf32>
    %c0_61 = arith.constant 0 : index
    %c0_62 = arith.constant 0 : index
    %105 = vector.load %arg6[%c0_61, %c0_62] : memref<9x128xf32, #tpu.memory_space<vmem>>, vector<1x128xf32>
    %106 = vector.broadcast %105 : vector<1x128xf32> to vector<32x128xf32>
    %107 = arith.mulf %106, %104 : vector<32x128xf32>
    %c8_i32_63 = arith.constant 8 : i32
    %108 = tpu.dynamic_rotate %102 by %c8_i32_63 dim 1 : vector<32x128xf32>, i32 -> vector<32x128xf32>
    %c1_64 = arith.constant 1 : index
    %c0_65 = arith.constant 0 : index
    %109 = vector.load %arg6[%c1_64, %c0_65] : memref<9x128xf32, #tpu.memory_space<vmem>>, vector<1x128xf32>
    %110 = vector.broadcast %109 : vector<1x128xf32> to vector<32x128xf32>
    %111 = arith.mulf %110, %108 : vector<32x128xf32>
    %112 = arith.addf %107, %111 : vector<32x128xf32>
    %c7_i32_66 = arith.constant 7 : i32
    %113 = tpu.dynamic_rotate %102 by %c7_i32_66 dim 1 : vector<32x128xf32>, i32 -> vector<32x128xf32>
    %c2_67 = arith.constant 2 : index
    %c0_68 = arith.constant 0 : index
    %114 = vector.load %arg6[%c2_67, %c0_68] : memref<9x128xf32, #tpu.memory_space<vmem>>, vector<1x128xf32>
    %115 = vector.broadcast %114 : vector<1x128xf32> to vector<32x128xf32>
    %116 = arith.mulf %115, %113 : vector<32x128xf32>
    %117 = arith.addf %112, %116 : vector<32x128xf32>
    %c1_i32_69 = arith.constant 1 : i32
    %118 = tpu.dynamic_rotate %102 by %c1_i32_69 dim 1 : vector<32x128xf32>, i32 -> vector<32x128xf32>
    %c3_70 = arith.constant 3 : index
    %c0_71 = arith.constant 0 : index
    %119 = vector.load %arg6[%c3_70, %c0_71] : memref<9x128xf32, #tpu.memory_space<vmem>>, vector<1x128xf32>
    %120 = vector.broadcast %119 : vector<1x128xf32> to vector<32x128xf32>
    %121 = arith.mulf %120, %118 : vector<32x128xf32>
    %122 = arith.addf %117, %121 : vector<32x128xf32>
    %c4_72 = arith.constant 4 : index
    %c0_73 = arith.constant 0 : index
    %123 = vector.load %arg6[%c4_72, %c0_73] : memref<9x128xf32, #tpu.memory_space<vmem>>, vector<1x128xf32>
    %124 = vector.broadcast %123 : vector<1x128xf32> to vector<32x128xf32>
    %125 = arith.mulf %124, %102 : vector<32x128xf32>
    %126 = arith.addf %122, %125 : vector<32x128xf32>
    %c127_i32_74 = arith.constant 127 : i32
    %127 = tpu.dynamic_rotate %102 by %c127_i32_74 dim 1 : vector<32x128xf32>, i32 -> vector<32x128xf32>
    %c5_75 = arith.constant 5 : index
    %c0_76 = arith.constant 0 : index
    %128 = vector.load %arg6[%c5_75, %c0_76] : memref<9x128xf32, #tpu.memory_space<vmem>>, vector<1x128xf32>
    %129 = vector.broadcast %128 : vector<1x128xf32> to vector<32x128xf32>
    %130 = arith.mulf %129, %127 : vector<32x128xf32>
    %131 = arith.addf %126, %130 : vector<32x128xf32>
    %c121_i32_77 = arith.constant 121 : i32
    %132 = tpu.dynamic_rotate %102 by %c121_i32_77 dim 1 : vector<32x128xf32>, i32 -> vector<32x128xf32>
    %c6_78 = arith.constant 6 : index
    %c0_79 = arith.constant 0 : index
    %133 = vector.load %arg6[%c6_78, %c0_79] : memref<9x128xf32, #tpu.memory_space<vmem>>, vector<1x128xf32>
    %134 = vector.broadcast %133 : vector<1x128xf32> to vector<32x128xf32>
    %135 = arith.mulf %134, %132 : vector<32x128xf32>
    %136 = arith.addf %131, %135 : vector<32x128xf32>
    %c120_i32_80 = arith.constant 120 : i32
    %137 = tpu.dynamic_rotate %102 by %c120_i32_80 dim 1 : vector<32x128xf32>, i32 -> vector<32x128xf32>
    %c7_81 = arith.constant 7 : index
    %c0_82 = arith.constant 0 : index
    %138 = vector.load %arg6[%c7_81, %c0_82] : memref<9x128xf32, #tpu.memory_space<vmem>>, vector<1x128xf32>
    %139 = vector.broadcast %138 : vector<1x128xf32> to vector<32x128xf32>
    %140 = arith.mulf %139, %137 : vector<32x128xf32>
    %141 = arith.addf %136, %140 : vector<32x128xf32>
    %c119_i32_83 = arith.constant 119 : i32
    %142 = tpu.dynamic_rotate %102 by %c119_i32_83 dim 1 : vector<32x128xf32>, i32 -> vector<32x128xf32>
    %c8_84 = arith.constant 8 : index
    %c0_85 = arith.constant 0 : index
    %143 = vector.load %arg6[%c8_84, %c0_85] : memref<9x128xf32, #tpu.memory_space<vmem>>, vector<1x128xf32>
    %144 = vector.broadcast %143 : vector<1x128xf32> to vector<32x128xf32>
    %145 = arith.mulf %144, %142 : vector<32x128xf32>
    %146 = arith.addf %141, %145 : vector<32x128xf32>
    %c160 = arith.constant 160 : index
    %c0_86 = arith.constant 0 : index
    %147 = vector.load %arg9[%c160, %c0_86] : memref<256x128xf32, #tpu.memory_space<vmem>>, vector<32x128xf32>
    tpu.vector_store %arg9[%c160, %c0_86], %146 {strides = array<i32>} : memref<256x128xf32, #tpu.memory_space<vmem>>, vector<32x128xf32>,
    %c2_87 = arith.constant 2 : index
    %c0_88 = arith.constant 0 : index
    %c0_89 = arith.constant 0 : index
    %148 = vector.load %arg4[%c2_87, %c0_88, %c0_89] : memref<3x32x256xf32, #tpu.memory_space<vmem>>, vector<1x32x256xf32>
    %149 = vector.shape_cast %148 : vector<1x32x256xf32> to vector<32x256xf32>
    %c0_90 = arith.constant 0 : index
    %c0_91 = arith.constant 0 : index
    %150 = vector.load %arg9[%c0_90, %c0_91] : memref<256x128xf32, #tpu.memory_space<vmem>>, vector<256x128xf32>
    %cst_92 = arith.constant dense<0.000000e+00> : vector<32x128xf32>
    %151 = tpu.matmul %149, %150, %cst_92 {dimension_numbers = #tpu.dot_dimension_numbers<[1], [0], [0], [1], [0, 0, 1, 1], [], []>} : vector<32x256xf32>, vector<256x128xf32>, vector<32x128xf32> -> vector<32x128xf32>
    %c192 = arith.constant 192 : index
    %c0_93 = arith.constant 0 : index
    %152 = vector.load %arg9[%c192, %c0_93] : memref<256x128xf32, #tpu.memory_space<vmem>>, vector<32x128xf32>
    tpu.vector_store %arg9[%c192, %c0_93], %151 {strides = array<i32>} : memref<256x128xf32, #tpu.memory_space<vmem>>, vector<32x128xf32>,
    %c9_i32_94 = arith.constant 9 : i32
    %153 = tpu.dynamic_rotate %151 by %c9_i32_94 dim 1 : vector<32x128xf32>, i32 -> vector<32x128xf32>
    %c0_95 = arith.constant 0 : index
    %c0_96 = arith.constant 0 : index
    %154 = vector.load %arg6[%c0_95, %c0_96] : memref<9x128xf32, #tpu.memory_space<vmem>>, vector<1x128xf32>
    %155 = vector.broadcast %154 : vector<1x128xf32> to vector<32x128xf32>
    %156 = arith.mulf %155, %153 : vector<32x128xf32>
    %c8_i32_97 = arith.constant 8 : i32
    %157 = tpu.dynamic_rotate %151 by %c8_i32_97 dim 1 : vector<32x128xf32>, i32 -> vector<32x128xf32>
    %c1_98 = arith.constant 1 : index
    %c0_99 = arith.constant 0 : index
    %158 = vector.load %arg6[%c1_98, %c0_99] : memref<9x128xf32, #tpu.memory_space<vmem>>, vector<1x128xf32>
    %159 = vector.broadcast %158 : vector<1x128xf32> to vector<32x128xf32>
    %160 = arith.mulf %159, %157 : vector<32x128xf32>
    %161 = arith.addf %156, %160 : vector<32x128xf32>
    %c7_i32_100 = arith.constant 7 : i32
    %162 = tpu.dynamic_rotate %151 by %c7_i32_100 dim 1 : vector<32x128xf32>, i32 -> vector<32x128xf32>
    %c2_101 = arith.constant 2 : index
    %c0_102 = arith.constant 0 : index
    %163 = vector.load %arg6[%c2_101, %c0_102] : memref<9x128xf32, #tpu.memory_space<vmem>>, vector<1x128xf32>
    %164 = vector.broadcast %163 : vector<1x128xf32> to vector<32x128xf32>
    %165 = arith.mulf %164, %162 : vector<32x128xf32>
    %166 = arith.addf %161, %165 : vector<32x128xf32>
    %c1_i32_103 = arith.constant 1 : i32
    %167 = tpu.dynamic_rotate %151 by %c1_i32_103 dim 1 : vector<32x128xf32>, i32 -> vector<32x128xf32>
    %c3_104 = arith.constant 3 : index
    %c0_105 = arith.constant 0 : index
    %168 = vector.load %arg6[%c3_104, %c0_105] : memref<9x128xf32, #tpu.memory_space<vmem>>, vector<1x128xf32>
    %169 = vector.broadcast %168 : vector<1x128xf32> to vector<32x128xf32>
    %170 = arith.mulf %169, %167 : vector<32x128xf32>
    %171 = arith.addf %166, %170 : vector<32x128xf32>
    %c4_106 = arith.constant 4 : index
    %c0_107 = arith.constant 0 : index
    %172 = vector.load %arg6[%c4_106, %c0_107] : memref<9x128xf32, #tpu.memory_space<vmem>>, vector<1x128xf32>
    %173 = vector.broadcast %172 : vector<1x128xf32> to vector<32x128xf32>
    %174 = arith.mulf %173, %151 : vector<32x128xf32>
    %175 = arith.addf %171, %174 : vector<32x128xf32>
    %c127_i32_108 = arith.constant 127 : i32
    %176 = tpu.dynamic_rotate %151 by %c127_i32_108 dim 1 : vector<32x128xf32>, i32 -> vector<32x128xf32>
    %c5_109 = arith.constant 5 : index
    %c0_110 = arith.constant 0 : index
    %177 = vector.load %arg6[%c5_109, %c0_110] : memref<9x128xf32, #tpu.memory_space<vmem>>, vector<1x128xf32>
    %178 = vector.broadcast %177 : vector<1x128xf32> to vector<32x128xf32>
    %179 = arith.mulf %178, %176 : vector<32x128xf32>
    %180 = arith.addf %175, %179 : vector<32x128xf32>
    %c121_i32_111 = arith.constant 121 : i32
    %181 = tpu.dynamic_rotate %151 by %c121_i32_111 dim 1 : vector<32x128xf32>, i32 -> vector<32x128xf32>
    %c6_112 = arith.constant 6 : index
    %c0_113 = arith.constant 0 : index
    %182 = vector.load %arg6[%c6_112, %c0_113] : memref<9x128xf32, #tpu.memory_space<vmem>>, vector<1x128xf32>
    %183 = vector.broadcast %182 : vector<1x128xf32> to vector<32x128xf32>
    %184 = arith.mulf %183, %181 : vector<32x128xf32>
    %185 = arith.addf %180, %184 : vector<32x128xf32>
    %c120_i32_114 = arith.constant 120 : i32
    %186 = tpu.dynamic_rotate %151 by %c120_i32_114 dim 1 : vector<32x128xf32>, i32 -> vector<32x128xf32>
    %c7_115 = arith.constant 7 : index
    %c0_116 = arith.constant 0 : index
    %187 = vector.load %arg6[%c7_115, %c0_116] : memref<9x128xf32, #tpu.memory_space<vmem>>, vector<1x128xf32>
    %188 = vector.broadcast %187 : vector<1x128xf32> to vector<32x128xf32>
    %189 = arith.mulf %188, %186 : vector<32x128xf32>
    %190 = arith.addf %185, %189 : vector<32x128xf32>
    %c119_i32_117 = arith.constant 119 : i32
    %191 = tpu.dynamic_rotate %151 by %c119_i32_117 dim 1 : vector<32x128xf32>, i32 -> vector<32x128xf32>
    %c8_118 = arith.constant 8 : index
    %c0_119 = arith.constant 0 : index
    %192 = vector.load %arg6[%c8_118, %c0_119] : memref<9x128xf32, #tpu.memory_space<vmem>>, vector<1x128xf32>
    %193 = vector.broadcast %192 : vector<1x128xf32> to vector<32x128xf32>
    %194 = arith.mulf %193, %191 : vector<32x128xf32>
    %195 = arith.addf %190, %194 : vector<32x128xf32>
    %c224 = arith.constant 224 : index
    %c0_120 = arith.constant 0 : index
    %196 = vector.load %arg9[%c224, %c0_120] : memref<256x128xf32, #tpu.memory_space<vmem>>, vector<32x128xf32>
    tpu.vector_store %arg9[%c224, %c0_120], %195 {strides = array<i32>} : memref<256x128xf32, #tpu.memory_space<vmem>>, vector<32x128xf32>,
    %c0_121 = arith.constant 0 : index
    %c0_122 = arith.constant 0 : index
    %197 = vector.load %arg5[%c0_121, %c0_122] : memref<128x256xf32, #tpu.memory_space<vmem>>, vector<128x256xf32>
    %c0_123 = arith.constant 0 : index
    %c0_124 = arith.constant 0 : index
    %198 = vector.load %arg9[%c0_123, %c0_124] : memref<256x128xf32, #tpu.memory_space<vmem>>, vector<256x128xf32>
    %cst_125 = arith.constant dense<0.000000e+00> : vector<128x128xf32>
    %199 = tpu.matmul %197, %198, %cst_125 {dimension_numbers = #tpu.dot_dimension_numbers<[1], [0], [0], [1], [0, 0, 1, 1], [], []>} : vector<128x256xf32>, vector<256x128xf32>, vector<128x128xf32> -> vector<128x128xf32>
    %cst_126 = arith.constant dense<0.000000e+00> : vector<128xf32>
    %200 = vector.multi_reduction <add>, %199, %cst_126 [0] : vector<128x128xf32> to vector<128xf32>
    %201 = vector.shape_cast %200 : vector<128xf32> to vector<1x128xf32>
    %cst_127 = arith.constant 1.280000e+02 : f32
    %202 = vector.broadcast %cst_127 : f32 to vector<1x128xf32>
    %203 = arith.divf %201, %202 : vector<1x128xf32>
    %204 = arith.negf %203 : vector<1x128xf32>
    %205 = math.exp %204 : vector<1x128xf32>
    %cst_128 = arith.constant 1.000000e+00 : f32
    %206 = vector.broadcast %cst_128 : f32 to vector<1x128xf32>
    %207 = arith.addf %206, %205 : vector<1x128xf32>
    %208 = arith.divf %206, %207 : vector<1x128xf32>
    %cst_129 = arith.constant 0.000000e+00 : f32
    %209 = vector.broadcast %cst_129 : f32 to vector<128x128xf32>
    %c0_130 = arith.constant 0 : index
    %c0_131 = arith.constant 0 : index
    %210 = vector.load %arg7[%c0_130, %c0_131] : memref<2x128xf32, #tpu.memory_space<vmem>>, vector<1x128xf32>
    %211 = vector.broadcast %210 : vector<1x128xf32> to vector<128x128xf32>
    %212 = arith.mulf %199, %211 : vector<128x128xf32>
    %cst_132 = arith.constant dense<0.000000e+00> : vector<128xf32>
    %213 = vector.multi_reduction <add>, %212, %cst_132 [1] : vector<128x128xf32> to vector<128xf32>
    %214 = vector.shape_cast %213 : vector<128xf32> to vector<128x1xf32>
    %cst_133 = arith.constant 1.562500e-02 : f32
    %215 = vector.broadcast %cst_133 : f32 to vector<128x1xf32>
    %216 = arith.mulf %214, %215 : vector<128x1xf32>
    %217 = arith.negf %216 : vector<128x1xf32>
    %218 = math.exp %217 : vector<128x1xf32>
    %cst_134 = arith.constant 1.000000e+00 : f32
    %219 = vector.broadcast %cst_134 : f32 to vector<128x1xf32>
    %220 = arith.addf %219, %218 : vector<128x1xf32>
    %221 = arith.divf %219, %220 : vector<128x1xf32>
    %222 = vector.broadcast %221 : vector<128x1xf32> to vector<128x128xf32>
    %223 = vector.broadcast %210 : vector<1x128xf32> to vector<128x128xf32>
    %224 = arith.mulf %222, %223 : vector<128x128xf32>
    %225 = arith.addf %209, %224 : vector<128x128xf32>
    %c1_135 = arith.constant 1 : index
    %c0_136 = arith.constant 0 : index
    %226 = vector.load %arg7[%c1_135, %c0_136] : memref<2x128xf32, #tpu.memory_space<vmem>>, vector<1x128xf32>
    %227 = vector.broadcast %226 : vector<1x128xf32> to vector<128x128xf32>
    %228 = arith.mulf %199, %227 : vector<128x128xf32>
    %cst_137 = arith.constant dense<0.000000e+00> : vector<128xf32>
    %229 = vector.multi_reduction <add>, %228, %cst_137 [1] : vector<128x128xf32> to vector<128xf32>
    %230 = vector.shape_cast %229 : vector<128xf32> to vector<128x1xf32>
    %cst_138 = arith.constant 1.562500e-02 : f32
    %231 = vector.broadcast %cst_138 : f32 to vector<128x1xf32>
    %232 = arith.mulf %230, %231 : vector<128x1xf32>
    %233 = arith.negf %232 : vector<128x1xf32>
    %234 = math.exp %233 : vector<128x1xf32>
    %cst_139 = arith.constant 1.000000e+00 : f32
    %235 = vector.broadcast %cst_139 : f32 to vector<128x1xf32>
    %236 = arith.addf %235, %234 : vector<128x1xf32>
    %237 = arith.divf %235, %236 : vector<128x1xf32>
    %238 = vector.broadcast %237 : vector<128x1xf32> to vector<128x128xf32>
    %239 = vector.broadcast %226 : vector<1x128xf32> to vector<128x128xf32>
    %240 = arith.mulf %238, %239 : vector<128x128xf32>
    %241 = arith.addf %225, %240 : vector<128x128xf32>
    %c0_140 = arith.constant 0 : index
    %c0_141 = arith.constant 0 : index
    %242 = memref.load %arg1[%c0_140, %c0_141] : memref<6x3xf32, #tpu.memory_space<smem>>
    %c0_142 = arith.constant 0 : index
    %c1_143 = arith.constant 1 : index
    %243 = memref.load %arg1[%c0_142, %c1_143] : memref<6x3xf32, #tpu.memory_space<smem>>
    %c0_144 = arith.constant 0 : index
    %c2_145 = arith.constant 2 : index
    %244 = memref.load %arg1[%c0_144, %c2_145] : memref<6x3xf32, #tpu.memory_space<smem>>
    %245 = vector.broadcast %243 : f32 to vector<128x128xf32>
    %246 = arith.mulf %245, %241 : vector<128x128xf32>
    %247 = vector.broadcast %242 : f32 to vector<128x128xf32>
    %248 = arith.addf %247, %246 : vector<128x128xf32>
    %249 = vector.broadcast %244 : f32 to vector<1x128xf32>
    %250 = arith.mulf %249, %208 : vector<1x128xf32>
    %251 = vector.broadcast %250 : vector<1x128xf32> to vector<128x128xf32>
    %252 = arith.addf %248, %251 : vector<128x128xf32>
    %253 = arith.mulf %199, %252 : vector<128x128xf32>
    %cst_146 = arith.constant dense<0.000000e+00> : vector<128xf32>
    %254 = vector.multi_reduction <add>, %253, %cst_146 [0] : vector<128x128xf32> to vector<128xf32>
    %255 = vector.shape_cast %254 : vector<128xf32> to vector<1x128xf32>
    %cst_147 = arith.constant 1.280000e+02 : f32
    %256 = vector.broadcast %cst_147 : f32 to vector<1x128xf32>
    %257 = arith.divf %255, %256 : vector<1x128xf32>
    %258 = arith.negf %257 : vector<1x128xf32>
    %259 = math.exp %258 : vector<1x128xf32>
    %cst_148 = arith.constant 1.000000e+00 : f32
    %260 = vector.broadcast %cst_148 : f32 to vector<1x128xf32>
    %261 = arith.addf %260, %259 : vector<1x128xf32>
    %262 = arith.divf %260, %261 : vector<1x128xf32>
    %cst_149 = arith.constant 0.000000e+00 : f32
    %263 = vector.broadcast %cst_149 : f32 to vector<128x128xf32>
    %c0_150 = arith.constant 0 : index
    %c0_151 = arith.constant 0 : index
    %264 = vector.load %arg7[%c0_150, %c0_151] : memref<2x128xf32, #tpu.memory_space<vmem>>, vector<1x128xf32>
    %265 = vector.broadcast %264 : vector<1x128xf32> to vector<128x128xf32>
    %266 = arith.mulf %253, %265 : vector<128x128xf32>
    %cst_152 = arith.constant dense<0.000000e+00> : vector<128xf32>
    %267 = vector.multi_reduction <add>, %266, %cst_152 [1] : vector<128x128xf32> to vector<128xf32>
    %268 = vector.shape_cast %267 : vector<128xf32> to vector<128x1xf32>
    %cst_153 = arith.constant 1.562500e-02 : f32
    %269 = vector.broadcast %cst_153 : f32 to vector<128x1xf32>
    %270 = arith.mulf %268, %269 : vector<128x1xf32>
    %271 = arith.negf %270 : vector<128x1xf32>
    %272 = math.exp %271 : vector<128x1xf32>
    %cst_154 = arith.constant 1.000000e+00 : f32
    %273 = vector.broadcast %cst_154 : f32 to vector<128x1xf32>
    %274 = arith.addf %273, %272 : vector<128x1xf32>
    %275 = arith.divf %273, %274 : vector<128x1xf32>
    %276 = vector.broadcast %275 : vector<128x1xf32> to vector<128x128xf32>
    %277 = vector.broadcast %264 : vector<1x128xf32> to vector<128x128xf32>
    %278 = arith.mulf %276, %277 : vector<128x128xf32>
    %279 = arith.addf %263, %278 : vector<128x128xf32>
    %c1_155 = arith.constant 1 : index
    %c0_156 = arith.constant 0 : index
    %280 = vector.load %arg7[%c1_155, %c0_156] : memref<2x128xf32, #tpu.memory_space<vmem>>, vector<1x128xf32>
    %281 = vector.broadcast %280 : vector<1x128xf32> to vector<128x128xf32>
    %282 = arith.mulf %253, %281 : vector<128x128xf32>
    %cst_157 = arith.constant dense<0.000000e+00> : vector<128xf32>
    %283 = vector.multi_reduction <add>, %282, %cst_157 [1] : vector<128x128xf32> to vector<128xf32>
    %284 = vector.shape_cast %283 : vector<128xf32> to vector<128x1xf32>
    %cst_158 = arith.constant 1.562500e-02 : f32
    %285 = vector.broadcast %cst_158 : f32 to vector<128x1xf32>
    %286 = arith.mulf %284, %285 : vector<128x1xf32>
    %287 = arith.negf %286 : vector<128x1xf32>
    %288 = math.exp %287 : vector<128x1xf32>
    %cst_159 = arith.constant 1.000000e+00 : f32
    %289 = vector.broadcast %cst_159 : f32 to vector<128x1xf32>
    %290 = arith.addf %289, %288 : vector<128x1xf32>
    %291 = arith.divf %289, %290 : vector<128x1xf32>
    %292 = vector.broadcast %291 : vector<128x1xf32> to vector<128x128xf32>
    %293 = vector.broadcast %280 : vector<1x128xf32> to vector<128x128xf32>
    %294 = arith.mulf %292, %293 : vector<128x128xf32>
    %295 = arith.addf %279, %294 : vector<128x128xf32>
    %c1_160 = arith.constant 1 : index
    %c0_161 = arith.constant 0 : index
    %296 = memref.load %arg1[%c1_160, %c0_161] : memref<6x3xf32, #tpu.memory_space<smem>>
    %c1_162 = arith.constant 1 : index
    %c1_163 = arith.constant 1 : index
    %297 = memref.load %arg1[%c1_162, %c1_163] : memref<6x3xf32, #tpu.memory_space<smem>>
    %c1_164 = arith.constant 1 : index
    %c2_165 = arith.constant 2 : index
    %298 = memref.load %arg1[%c1_164, %c2_165] : memref<6x3xf32, #tpu.memory_space<smem>>
    %299 = vector.broadcast %297 : f32 to vector<128x128xf32>
    %300 = arith.mulf %299, %241 : vector<128x128xf32>
    %301 = vector.broadcast %296 : f32 to vector<128x128xf32>
    %302 = arith.addf %301, %300 : vector<128x128xf32>
    %303 = vector.broadcast %298 : f32 to vector<1x128xf32>
    %304 = arith.mulf %303, %208 : vector<1x128xf32>
    %305 = vector.broadcast %304 : vector<1x128xf32> to vector<128x128xf32>
    %306 = arith.addf %302, %305 : vector<128x128xf32>
    %307 = arith.mulf %199, %306 : vector<128x128xf32>
    %c2_166 = arith.constant 2 : index
    %c0_167 = arith.constant 0 : index
    %308 = memref.load %arg1[%c2_166, %c0_167] : memref<6x3xf32, #tpu.memory_space<smem>>
    %c2_168 = arith.constant 2 : index
    %c1_169 = arith.constant 1 : index
    %309 = memref.load %arg1[%c2_168, %c1_169] : memref<6x3xf32, #tpu.memory_space<smem>>
    %c2_170 = arith.constant 2 : index
    %c2_171 = arith.constant 2 : index
    %310 = memref.load %arg1[%c2_170, %c2_171] : memref<6x3xf32, #tpu.memory_space<smem>>
    %311 = vector.broadcast %309 : f32 to vector<128x128xf32>
    %312 = arith.mulf %311, %295 : vector<128x128xf32>
    %313 = vector.broadcast %308 : f32 to vector<128x128xf32>
    %314 = arith.addf %313, %312 : vector<128x128xf32>
    %315 = vector.broadcast %310 : f32 to vector<1x128xf32>
    %316 = arith.mulf %315, %262 : vector<1x128xf32>
    %317 = vector.broadcast %316 : vector<1x128xf32> to vector<128x128xf32>
    %318 = arith.addf %314, %317 : vector<128x128xf32>
    %319 = arith.mulf %253, %318 : vector<128x128xf32>
    %320 = arith.addf %307, %319 : vector<128x128xf32>
    %cst_172 = arith.constant dense<0.000000e+00> : vector<128xf32>
    %321 = vector.multi_reduction <add>, %320, %cst_172 [0] : vector<128x128xf32> to vector<128xf32>
    %322 = vector.shape_cast %321 : vector<128xf32> to vector<1x128xf32>
    %cst_173 = arith.constant 1.280000e+02 : f32
    %323 = vector.broadcast %cst_173 : f32 to vector<1x128xf32>
    %324 = arith.divf %322, %323 : vector<1x128xf32>
    %325 = arith.negf %324 : vector<1x128xf32>
    %326 = math.exp %325 : vector<1x128xf32>
    %cst_174 = arith.constant 1.000000e+00 : f32
    %327 = vector.broadcast %cst_174 : f32 to vector<1x128xf32>
    %328 = arith.addf %327, %326 : vector<1x128xf32>
    %329 = arith.divf %327, %328 : vector<1x128xf32>
    %cst_175 = arith.constant 0.000000e+00 : f32
    %330 = vector.broadcast %cst_175 : f32 to vector<128x128xf32>
    %c0_176 = arith.constant 0 : index
    %c0_177 = arith.constant 0 : index
    %331 = vector.load %arg7[%c0_176, %c0_177] : memref<2x128xf32, #tpu.memory_space<vmem>>, vector<1x128xf32>
    %332 = vector.broadcast %331 : vector<1x128xf32> to vector<128x128xf32>
    %333 = arith.mulf %320, %332 : vector<128x128xf32>
    %cst_178 = arith.constant dense<0.000000e+00> : vector<128xf32>
    %334 = vector.multi_reduction <add>, %333, %cst_178 [1] : vector<128x128xf32> to vector<128xf32>
    %335 = vector.shape_cast %334 : vector<128xf32> to vector<128x1xf32>
    %cst_179 = arith.constant 1.562500e-02 : f32
    %336 = vector.broadcast %cst_179 : f32 to vector<128x1xf32>
    %337 = arith.mulf %335, %336 : vector<128x1xf32>
    %338 = arith.negf %337 : vector<128x1xf32>
    %339 = math.exp %338 : vector<128x1xf32>
    %cst_180 = arith.constant 1.000000e+00 : f32
    %340 = vector.broadcast %cst_180 : f32 to vector<128x1xf32>
    %341 = arith.addf %340, %339 : vector<128x1xf32>
    %342 = arith.divf %340, %341 : vector<128x1xf32>
    %343 = vector.broadcast %342 : vector<128x1xf32> to vector<128x128xf32>
    %344 = vector.broadcast %331 : vector<1x128xf32> to vector<128x128xf32>
    %345 = arith.mulf %343, %344 : vector<128x128xf32>
    %346 = arith.addf %330, %345 : vector<128x128xf32>
    %c1_181 = arith.constant 1 : index
    %c0_182 = arith.constant 0 : index
    %347 = vector.load %arg7[%c1_181, %c0_182] : memref<2x128xf32, #tpu.memory_space<vmem>>, vector<1x128xf32>
    %348 = vector.broadcast %347 : vector<1x128xf32> to vector<128x128xf32>
    %349 = arith.mulf %320, %348 : vector<128x128xf32>
    %cst_183 = arith.constant dense<0.000000e+00> : vector<128xf32>
    %350 = vector.multi_reduction <add>, %349, %cst_183 [1] : vector<128x128xf32> to vector<128xf32>
    %351 = vector.shape_cast %350 : vector<128xf32> to vector<128x1xf32>
    %cst_184 = arith.constant 1.562500e-02 : f32
    %352 = vector.broadcast %cst_184 : f32 to vector<128x1xf32>
    %353 = arith.mulf %351, %352 : vector<128x1xf32>
    %354 = arith.negf %353 : vector<128x1xf32>
    %355 = math.exp %354 : vector<128x1xf32>
    %cst_185 = arith.constant 1.000000e+00 : f32
    %356 = vector.broadcast %cst_185 : f32 to vector<128x1xf32>
    %357 = arith.addf %356, %355 : vector<128x1xf32>
    %358 = arith.divf %356, %357 : vector<128x1xf32>
    %359 = vector.broadcast %358 : vector<128x1xf32> to vector<128x128xf32>
    %360 = vector.broadcast %347 : vector<1x128xf32> to vector<128x128xf32>
    %361 = arith.mulf %359, %360 : vector<128x128xf32>
    %362 = arith.addf %346, %361 : vector<128x128xf32>
    %c3_186 = arith.constant 3 : index
    %c0_187 = arith.constant 0 : index
    %363 = memref.load %arg1[%c3_186, %c0_187] : memref<6x3xf32, #tpu.memory_space<smem>>
    %c3_188 = arith.constant 3 : index
    %c1_189 = arith.constant 1 : index
    %364 = memref.load %arg1[%c3_188, %c1_189] : memref<6x3xf32, #tpu.memory_space<smem>>
    %c3_190 = arith.constant 3 : index
    %c2_191 = arith.constant 2 : index
    %365 = memref.load %arg1[%c3_190, %c2_191] : memref<6x3xf32, #tpu.memory_space<smem>>
    %366 = vector.broadcast %364 : f32 to vector<128x128xf32>
    %367 = arith.mulf %366, %241 : vector<128x128xf32>
    %368 = vector.broadcast %363 : f32 to vector<128x128xf32>
    %369 = arith.addf %368, %367 : vector<128x128xf32>
    %370 = vector.broadcast %365 : f32 to vector<1x128xf32>
    %371 = arith.mulf %370, %208 : vector<1x128xf32>
    %372 = vector.broadcast %371 : vector<1x128xf32> to vector<128x128xf32>
    %373 = arith.addf %369, %372 : vector<128x128xf32>
    %374 = arith.mulf %199, %373 : vector<128x128xf32>
    %c4_192 = arith.constant 4 : index
    %c0_193 = arith.constant 0 : index
    %375 = memref.load %arg1[%c4_192, %c0_193] : memref<6x3xf32, #tpu.memory_space<smem>>
    %c4_194 = arith.constant 4 : index
    %c1_195 = arith.constant 1 : index
    %376 = memref.load %arg1[%c4_194, %c1_195] : memref<6x3xf32, #tpu.memory_space<smem>>
    %c4_196 = arith.constant 4 : index
    %c2_197 = arith.constant 2 : index
    %377 = memref.load %arg1[%c4_196, %c2_197] : memref<6x3xf32, #tpu.memory_space<smem>>
    %378 = vector.broadcast %376 : f32 to vector<128x128xf32>
    %379 = arith.mulf %378, %295 : vector<128x128xf32>
    %380 = vector.broadcast %375 : f32 to vector<128x128xf32>
    %381 = arith.addf %380, %379 : vector<128x128xf32>
    %382 = vector.broadcast %377 : f32 to vector<1x128xf32>
    %383 = arith.mulf %382, %262 : vector<1x128xf32>
    %384 = vector.broadcast %383 : vector<1x128xf32> to vector<128x128xf32>
    %385 = arith.addf %381, %384 : vector<128x128xf32>
    %386 = arith.mulf %253, %385 : vector<128x128xf32>
    %387 = arith.addf %374, %386 : vector<128x128xf32>
    %c5_198 = arith.constant 5 : index
    %c0_199 = arith.constant 0 : index
    %388 = memref.load %arg1[%c5_198, %c0_199] : memref<6x3xf32, #tpu.memory_space<smem>>
    %c5_200 = arith.constant 5 : index
    %c1_201 = arith.constant 1 : index
    %389 = memref.load %arg1[%c5_200, %c1_201] : memref<6x3xf32, #tpu.memory_space<smem>>
    %c5_202 = arith.constant 5 : index
    %c2_203 = arith.constant 2 : index
    %390 = memref.load %arg1[%c5_202, %c2_203] : memref<6x3xf32, #tpu.memory_space<smem>>
    %391 = vector.broadcast %389 : f32 to vector<128x128xf32>
    %392 = arith.mulf %391, %362 : vector<128x128xf32>
    %393 = vector.broadcast %388 : f32 to vector<128x128xf32>
    %394 = arith.addf %393, %392 : vector<128x128xf32>
    %395 = vector.broadcast %390 : f32 to vector<1x128xf32>
    %396 = arith.mulf %395, %329 : vector<1x128xf32>
    %397 = vector.broadcast %396 : vector<1x128xf32> to vector<128x128xf32>
    %398 = arith.addf %394, %397 : vector<128x128xf32>
    %399 = arith.mulf %320, %398 : vector<128x128xf32>
    %400 = arith.addf %387, %399 : vector<128x128xf32>
    %c0_204 = arith.constant 0 : index
    %c0_205 = arith.constant 0 : index
    %401 = vector.load %arg2[%c0_204, %c0_205] : memref<128x128xf32, #tpu.memory_space<vmem>>, vector<128x128xf32>
    %402 = arith.addf %401, %400 : vector<128x128xf32>
    %c0_206 = arith.constant 0 : index
    %c0_207 = arith.constant 0 : index
    %403 = vector.load %arg8[%c0_206, %c0_207] : memref<128x128xf32, #tpu.memory_space<vmem>>, vector<128x128xf32>
    tpu.vector_store %arg8[%c0_206, %c0_207], %402 {strides = array<i32>} : memref<128x128xf32, #tpu.memory_space<vmem>>, vector<128x128xf32>,
    return
  }
  func.func @transform_0(%arg0: i32) -> (i32, i32) {
    %c0_i32 = arith.constant 0 : i32
    %c0_i32_0 = arith.constant 0 : i32
    %c0_i32_1 = arith.constant 0 : i32
    return %c0_i32, %c0_i32_0 : i32, i32
  }
  func.func @transform_1(%arg0: i32) -> (i32, i32) {
    %c0_i32 = arith.constant 0 : i32
    %c0_i32_0 = arith.constant 0 : i32
    %c0_i32_1 = arith.constant 0 : i32
    return %c0_i32, %c0_i32_0 : i32, i32
  }
  func.func @transform_2(%arg0: i32) -> (i32, i32) {
    %c0_i32 = arith.constant 0 : i32
    %c0_i32_0 = arith.constant 0 : i32
    %c0_i32_1 = arith.constant 0 : i32
    return %c0_i32, %c0_i32_0 : i32, i32
  }
  func.func @transform_3(%arg0: i32) -> (i32, i32, i32) {
    %c0_i32 = arith.constant 0 : i32
    %c0_i32_0 = arith.constant 0 : i32
    %c0_i32_1 = arith.constant 0 : i32
    %c0_i32_2 = arith.constant 0 : i32
    return %c0_i32, %c0_i32_0, %c0_i32_1 : i32, i32, i32
  }
  func.func @transform_4(%arg0: i32) -> (i32, i32) {
    %c0_i32 = arith.constant 0 : i32
    %c0_i32_0 = arith.constant 0 : i32
    %c0_i32_1 = arith.constant 0 : i32
    return %c0_i32, %c0_i32_0 : i32, i32
  }
  func.func @transform_5(%arg0: i32) -> (i32, i32) {
    %c0_i32 = arith.constant 0 : i32
    %c0_i32_0 = arith.constant 0 : i32
    %c0_i32_1 = arith.constant 0 : i32
    return %c0_i32, %c0_i32_0 : i32, i32
  }
  func.func @transform_6(%arg0: i32) -> (i32, i32) {
    %c0_i32 = arith.constant 0 : i32
    %c0_i32_0 = arith.constant 0 : i32
    %c0_i32_1 = arith.constant 0 : i32
    return %c0_i32, %c0_i32_0 : i32, i32
  }
  func.func @transform_7(%arg0: i32) -> (i32, i32) {
    %c0_i32 = arith.constant 0 : i32
    %c0_i32_0 = arith.constant 0 : i32
    %c0_i32_1 = arith.constant 0 : i32
    return %c0_i32, %c0_i32_0 : i32, i32
  }
}

</mosaic_0001>

<llo_original>
// kernel: nas_cell_forward.1
$region0: #{nas_cell_forward.1}
  #allocation0 [shape = 'u32[]', space=smem, size = 0x4, offset = 0x4, fixed_abs, tag = 'smem constant byte address 0x4 - core index']
  #allocation1 [shape = 'u32[144,128]{1,0:T(1,128)}', space=vmem, size = 0x12000, scoped, tag = 'internal scratch']
  #allocation2 [shape = 'f32[256,128]{1,0:T(8,128)}', space=vmem, size = 0x20000, scoped, tag = 'scratch operand']
  %s0 = inlined_call_operand.vmem [shape: f32[6,3], index: 0, kind: input, shape index: {}]
  %s1 = inlined_call_operand.vmem [shape: f32[128,128], index: 1, kind: input, shape index: {}]
  %s2 = inlined_call_operand.vmem [shape: f32[32,128], index: 2, kind: input, shape index: {}]
  %s3 = inlined_call_operand.vmem [shape: f32[3,32,256], index: 3, kind: input, shape index: {}]
  %s4 = inlined_call_operand.vmem [shape: f32[128,256], index: 4, kind: input, shape index: {}]
  %s5 = inlined_call_operand.vmem [shape: f32[9,128], index: 5, kind: input, shape index: {}]
  %s6 = inlined_call_operand.vmem [shape: f32[2,128], index: 6, kind: input, shape index: {}]
  %s7 = inlined_call_operand.vmem [shape: f32[128,128], index: 7, kind: output, shape index: {}]
  %s8 = sld [smem:[#allocation0]]
  $region42: #{nas_cell_forward.1} parent=0
    _
  %s10 = ssub.s32 1, %s8
  %s11 = scalar_select 0, %s10, %s8
  $region1: #{nas_cell_forward.1} parent=0
    #allocation3 [shape = 'u8[4096]{0}', space=smem, size = 0x1000, scoped, tag = 'input window, operand 0, single buffered']
    #allocation4 [shape = 's32[1]{0}', space=sflag, size = 0x4, scoped, tag = 'scoped memory for nas_cell_forward.1']
    %12 = vsyncpa [#allocation4], 0
    // Predicated region
    $region2: #{nas_cell_forward.1} parent=1 // pred_check
      _
    $region3: #{nas_cell_forward.1} parent=1 // pred_check_branch
      %14 = sbr.rel (0) target = $region5
    $region4: #{nas_cell_forward.1} parent=1 // pred_region
      %s16 = ssub.s32 128, 128
      %17 = vsyncadd [#allocation4], %s16
      %s19 = sshll.u32 %s0, 4
      %s20 = int_to_ptr.vmem [resolvable:$true] %s19
      %22 = dma.vmem_to_smem %s20, 128, [#allocation3], [#allocation4]
    $region5: #{nas_cell_forward.1} parent=1 // pred_fallthru
      _
    // Predicated region
    $region6: #{nas_cell_forward.1} parent=1 // pred_check
      _
    $region7: #{nas_cell_forward.1} parent=1 // pred_check_branch
      %24 = sbr.rel (0) target = $region9
    $region8: #{nas_cell_forward.1} parent=1 // pred_region
      _
    $region9: #{nas_cell_forward.1} parent=1 // pred_fallthru
      _
    // Predicated region
    $region10: #{nas_cell_forward.1} parent=1 // pred_check
      _
    $region11: #{nas_cell_forward.1} parent=1 // pred_check_branch
      %26 = sbr.rel (0) target = $region13
    $region12: #{nas_cell_forward.1} parent=1 // pred_region
      _
    $region13: #{nas_cell_forward.1} parent=1 // pred_fallthru
      _
    // Predicated region
    $region14: #{nas_cell_forward.1} parent=1 // pred_check
      _
    $region15: #{nas_cell_forward.1} parent=1 // pred_check_branch
      %28 = sbr.rel (0) target = $region17
    $region16: #{nas_cell_forward.1} parent=1 // pred_region
      _
    $region17: #{nas_cell_forward.1} parent=1 // pred_fallthru
      _
    // Predicated region
    $region18: #{nas_cell_forward.1} parent=1 // pred_check
      _
    $region19: #{nas_cell_forward.1} parent=1 // pred_check_branch
      %30 = sbr.rel (0) target = $region21
    $region20: #{nas_cell_forward.1} parent=1 // pred_region
      _
    $region21: #{nas_cell_forward.1} parent=1 // pred_fallthru
      _
    // Predicated region
    $region22: #{nas_cell_forward.1} parent=1 // pred_check
      _
    $region23: #{nas_cell_forward.1} parent=1 // pred_check_branch
      %32 = sbr.rel (0) target = $region25
    $region24: #{nas_cell_forward.1} parent=1 // pred_region
      _
    $region25: #{nas_cell_forward.1} parent=1 // pred_fallthru
      _
    // Predicated region
    $region26: #{nas_cell_forward.1} parent=1 // pred_check
      _
    $region27: #{nas_cell_forward.1} parent=1 // pred_check_branch
      %34 = sbr.rel (0) target = $region29
    $region28: #{nas_cell_forward.1} parent=1 // pred_region
      _
    $region29: #{nas_cell_forward.1} parent=1 // pred_fallthru
      _
    // Predicated region
    $region30: #{nas_cell_forward.1} parent=1 // pred_check
      _
    $region31: #{nas_cell_forward.1} parent=1 // pred_check_branch
      %36 = sbr.rel (0) target = $region33
    $region32: #{nas_cell_forward.1} parent=1 // pred_region
      %37 = dma.done [#allocation4], 128
    $region33: #{nas_cell_forward.1} parent=1 // pred_fallthru
      _
    %38 = sfence
    %39 = vst [vmem:[#allocation2] sm:$0xff] 0.0
    %40 = vst [vmem:[#allocation2 + $0x8] sm:$0xff] 0.0
    %41 = vst [vmem:[#allocation2 + $0x10] sm:$0xff] 0.0
    %42 = vst [vmem:[#allocation2 + $0x18] sm:$0xff] 0.0
    %43 = vst [vmem:[#allocation2 + $0x20] sm:$0xff] 0.0
    %44 = vst [vmem:[#allocation2 + $0x28] sm:$0xff] 0.0
    %45 = vst [vmem:[#allocation2 + $0x30] sm:$0xff] 0.0
    %46 = vst [vmem:[#allocation2 + $0x38] sm:$0xff] 0.0
    %47 = vst [vmem:[#allocation2 + $0x40] sm:$0xff] 0.0
    %48 = vst [vmem:[#allocation2 + $0x48] sm:$0xff] 0.0
    %49 = vst [vmem:[#allocation2 + $0x50] sm:$0xff] 0.0
    %50 = vst [vmem:[#allocation2 + $0x58] sm:$0xff] 0.0
    %51 = vst [vmem:[#allocation2 + $0x60] sm:$0xff] 0.0
    %52 = vst [vmem:[#allocation2 + $0x68] sm:$0xff] 0.0
    %53 = vst [vmem:[#allocation2 + $0x70] sm:$0xff] 0.0
    %54 = vst [vmem:[#allocation2 + $0x78] sm:$0xff] 0.0
    %55 = vst [vmem:[#allocation2 + $0x80] sm:$0xff] 0.0
    %56 = vst [vmem:[#allocation2 + $0x88] sm:$0xff] 0.0
    %57 = vst [vmem:[#allocation2 + $0x90] sm:$0xff] 0.0
    %58 = vst [vmem:[#allocation2 + $0x98] sm:$0xff] 0.0
    %59 = vst [vmem:[#allocation2 + $0xa0] sm:$0xff] 0.0
    %60 = vst [vmem:[#allocation2 + $0xa8] sm:$0xff] 0.0
    %61 = vst [vmem:[#allocation2 + $0xb0] sm:$0xff] 0.0
    %62 = vst [vmem:[#allocation2 + $0xb8] sm:$0xff] 0.0
    %63 = vst [vmem:[#allocation2 + $0xc0] sm:$0xff] 0.0
    %64 = vst [vmem:[#allocation2 + $0xc8] sm:$0xff] 0.0
    %65 = vst [vmem:[#allocation2 + $0xd0] sm:$0xff] 0.0
    %66 = vst [vmem:[#allocation2 + $0xd8] sm:$0xff] 0.0
    %67 = vst [vmem:[#allocation2 + $0xe0] sm:$0xff] 0.0
    %68 = vst [vmem:[#allocation2 + $0xe8] sm:$0xff] 0.0
    %69 = vst [vmem:[#allocation2 + $0xf0] sm:$0xff] 0.0
    %70 = vst [vmem:[#allocation2 + $0xf8] sm:$0xff] 0.0
    %v71 = vld [vmem:[%s2] sm:$0xff]
    %v72 = vld [vmem:[%s2 + $0x8] sm:$0xff]
    %v73 = vld [vmem:[%s2 + $0x10] sm:$0xff]
    %v74 = vld [vmem:[%s2 + $0x18] sm:$0xff]
    %v75 = vld [vmem:[%s1] sm:$0xff]
    %v76 = vld [vmem:[%s1 + $0x8] sm:$0xff]
    %v77 = vld [vmem:[%s1 + $0x10] sm:$0xff]
    %v78 = vld [vmem:[%s1 + $0x18] sm:$0xff]
    %v79 = vld [vmem:[%s1 + $0x20] sm:$0xff]
    %v80 = vld [vmem:[%s1 + $0x28] sm:$0xff]
    %v81 = vld [vmem:[%s1 + $0x30] sm:$0xff]
    %v82 = vld [vmem:[%s1 + $0x38] sm:$0xff]
    %v83 = vld [vmem:[%s1 + $0x40] sm:$0xff]
    %v84 = vld [vmem:[%s1 + $0x48] sm:$0xff]
    %v85 = vld [vmem:[%s1 + $0x50] sm:$0xff]
    %v86 = vld [vmem:[%s1 + $0x58] sm:$0xff]
    %v87 = vld [vmem:[%s1 + $0x60] sm:$0xff]
    %v88 = vld [vmem:[%s1 + $0x68] sm:$0xff]
    %v89 = vld [vmem:[%s1 + $0x70] sm:$0xff]
    %v90 = vld [vmem:[%s1 + $0x78] sm:$0xff]
    %91 = vmatprep.subr.mxu0 0.0
    %92 = vmatpush1.msra.mxu0 %v75
    %93 = vmatprep.subr.mxu0 0.0
    %94 = vmatpush1.msra.mxu0 %v76
    %95 = vmatprep.subr.mxu0 0.0
    %96 = vmatpush1.msra.mxu0 %v77
    %97 = vmatprep.subr.mxu0 0.0
    %98 = vmatpush1.msra.mxu0 %v78
    %99 = vmatprep.subr.mxu0 0.0
    %100 = vmatpush1.msra.mxu0 %v79
    %101 = vmatprep.subr.mxu0 0.0
    %102 = vmatpush1.msra.mxu0 %v80
    %103 = vmatprep.subr.mxu0 0.0
    %104 = vmatpush1.msra.mxu0 %v81
    %105 = vmatprep.subr.mxu0 0.0
    %106 = vmatpush1.msra.mxu0 %v82
    %107 = vmatprep.subr.mxu0 0.0
    %108 = vmatpush1.msra.mxu0 %v83
    %109 = vmatprep.subr.mxu0 0.0
    %110 = vmatpush1.msra.mxu0 %v84
    %111 = vmatprep.subr.mxu0 0.0
    %112 = vmatpush1.msra.mxu0 %v85
    %113 = vmatprep.subr.mxu0 0.0
    %114 = vmatpush1.msra.mxu0 %v86
    %115 = vmatprep.subr.mxu0 0.0
    %116 = vmatpush1.msra.mxu0 %v87
    %117 = vmatprep.subr.mxu0 0.0
    %118 = vmatpush1.msra.mxu0 %v88
    %119 = vmatprep.subr.mxu0 0.0
    %120 = vmatpush1.msra.mxu0 %v89
    %121 = vmatprep.subr.mxu0 0.0
    %122 = vmatpush1.msra.mxu0 %v90
    %123 = vmatprep.subr.mxu0 0.0
    %124 = vmatpush1.msra.mxu0 0.0
    %125 = vmatprep.subr.mxu0 0.0
    %126 = vmatpush1.msra.mxu0 0.0
    %127 = vmatprep.subr.mxu0 0.0
    %128 = vmatpush1.msra.mxu0 0.0
    %129 = vmatprep.subr.mxu0 0.0
    %130 = vmatpush1.msra.mxu0 0.0
    %131 = vmatprep.subr.mxu0 0.0
    %132 = vmatpush1.msra.mxu0 0.0
    %133 = vmatprep.subr.mxu0 0.0
    %134 = vmatpush1.msra.mxu0 0.0
    %135 = vmatprep.subr.mxu0 0.0
    %136 = vmatpush1.msra.mxu0 0.0
    %137 = vmatprep.subr.mxu0 0.0
    %138 = vmatpush1.msra.mxu0 0.0
    %139 = vmatprep.subr.mxu0 0.0
    %140 = vmatpush1.msra.mxu0 0.0
    %141 = vmatprep.subr.mxu0 0.0
    %142 = vmatpush1.msra.mxu0 0.0
    %143 = vmatprep.subr.mxu0 0.0
    %144 = vmatpush1.msra.mxu0 0.0
    %145 = vmatprep.subr.mxu0 0.0
    %146 = vmatpush1.msra.mxu0 0.0
    %147 = vmatprep.subr.mxu0 0.0
    %148 = vmatpush1.msra.mxu0 0.0
    %149 = vmatprep.subr.mxu0 0.0
    %150 = vmatpush1.msra.mxu0 0.0
    %151 = vmatprep.subr.mxu0 0.0
    %152 = vmatpush1.msra.mxu0 0.0
    %153 = vmatprep.subr.mxu0 0.0
    %154 = vmatpush1.msra.mxu0 0.0
    %155 = vmatprep.mubr.f32.mxu0 0.0
    %156 = vmatmul.mubr.f32.gmra.mrb[0].mxu0 %v71
    %v157 = vpop.f32.mrb[0].mxu0
    %v158 = vadd.f32 0.0, %v157
    %v159 = vpop.f32.mrb[0].mxu0
    %160 = vmatprep.mubr.f32.mxu0 0.0
    %161 = vmatmul.mubr.f32.gmra.mrb[0].mxu0 %v72
    %v162 = vpop.f32.mrb[0].mxu0
    %v163 = vadd.f32 0.0, %v162
    %v164 = vpop.f32.mrb[0].mxu0
    %165 = vmatprep.mubr.f32.mxu0 0.0
    %166 = vmatmul.mubr.f32.gmra.mrb[0].mxu0 %v73
    %v167 = vpop.f32.mrb[0].mxu0
    %v168 = vadd.f32 0.0, %v167
    %v169 = vpop.f32.mrb[0].mxu0
    %170 = vmatprep.mubr.f32.mxu0 0.0
    %171 = vmatmul.mubr.f32.gmra.mrb[0].mxu0 %v74
    %v172 = vpop.f32.mrb[0].mxu0
    %v173 = vadd.f32 0.0, %v172
    %v174 = vpop.f32.mrb[0].mxu0
    %175 = vdwg.mxu0
    %176 = vst [vmem:[#allocation2] sm:$0xff] %v158
    %177 = vst [vmem:[#allocation2 + $0x8] sm:$0xff] %v163
    %178 = vst [vmem:[#allocation2 + $0x10] sm:$0xff] %v168
    %179 = vst [vmem:[#allocation2 + $0x18] sm:$0xff] %v173
    %180 = vrot.lane.b32.xlu0 %v158, 9
    %v181 = vpop.permute.xlu0 %180
    %182 = vrot.lane.b32.xlu0 %v163, 9
    %v183 = vpop.permute.xlu0 %182
    %184 = vrot.lane.b32.xlu0 %v168, 9
    %v185 = vpop.permute.xlu0 %184
    %186 = vrot.lane.b32.xlu0 %v173, 9
    %v187 = vpop.permute.xlu0 %186
    %v188 = vld [vmem:[%s5] sm:$0x1]
    %v189 = vlaneseq
    %v190 = vshrl.u32 %v189, 7
    %v191 = vsub.s32 0, %v190
    %v192 = vrot.slane %v188, %v191
    %v193 = vmul.f32 %v192, %v181
    %v194 = vmul.f32 %v192, %v183
    %v195 = vmul.f32 %v192, %v185
    %v196 = vmul.f32 %v192, %v187
    %197 = vrot.lane.b32.xlu0 %v158, 8
    %v198 = vpop.permute.xlu0 %197
    %199 = vrot.lane.b32.xlu0 %v163, 8
    %v200 = vpop.permute.xlu0 %199
    %201 = vrot.lane.b32.xlu0 %v168, 8
    %v202 = vpop.permute.xlu0 %201
    %203 = vrot.lane.b32.xlu0 %v173, 8
    %v204 = vpop.permute.xlu0 %203
    %v205 = vld [vmem:[%s5 + $0x1] sm:$0x1]
    %v206 = vlaneseq
    %v207 = vshrl.u32 %v206, 7
    %v208 = vsub.s32 0, %v207
    %v209 = vrot.slane %v205, %v208
    %v210 = vmul.f32 %v209, %v198
    %v211 = vmul.f32 %v209, %v200
    %v212 = vmul.f32 %v209, %v202
    %v213 = vmul.f32 %v209, %v204
    %v214 = vadd.f32 %v193, %v210
    %v215 = vadd.f32 %v194, %v211
    %v216 = vadd.f32 %v195, %v212
    %v217 = vadd.f32 %v196, %v213
    %218 = vrot.lane.b32.xlu0 %v158, 7
    %v219 = vpop.permute.xlu0 %218
    %220 = vrot.lane.b32.xlu0 %v163, 7
    %v221 = vpop.permute.xlu0 %220
    %222 = vrot.lane.b32.xlu0 %v168, 7
    %v223 = vpop.permute.xlu0 %222
    %224 = vrot.lane.b32.xlu0 %v173, 7
    %v225 = vpop.permute.xlu0 %224
    %v226 = vld [vmem:[%s5 + $0x2] sm:$0x1]
    %v227 = vlaneseq
    %v228 = vshrl.u32 %v227, 7
    %v229 = vsub.s32 0, %v228
    %v230 = vrot.slane %v226, %v229
    %v231 = vmul.f32 %v230, %v219
    %v232 = vmul.f32 %v230, %v221
    %v233 = vmul.f32 %v230, %v223
    %v234 = vmul.f32 %v230, %v225
    %v235 = vadd.f32 %v214, %v231
    %v236 = vadd.f32 %v215, %v232
    %v237 = vadd.f32 %v216, %v233
    %v238 = vadd.f32 %v217, %v234
    %239 = vrot.lane.b32.xlu0 %v158, 1
    %v240 = vpop.permute.xlu0 %239
    %241 = vrot.lane.b32.xlu0 %v163, 1
    %v242 = vpop.permute.xlu0 %241
    %243 = vrot.lane.b32.xlu0 %v168, 1
    %v244 = vpop.permute.xlu0 %243
    %245 = vrot.lane.b32.xlu0 %v173, 1
    %v246 = vpop.permute.xlu0 %245
    %v247 = vld [vmem:[%s5 + $0x3] sm:$0x1]
    %v248 = vlaneseq
    %v249 = vshrl.u32 %v248, 7
    %v250 = vsub.s32 0, %v249
    %v251 = vrot.slane %v247, %v250
    %v252 = vmul.f32 %v251, %v240
    %v253 = vmul.f32 %v251, %v242
    %v254 = vmul.f32 %v251, %v244
    %v255 = vmul.f32 %v251, %v246
    %v256 = vadd.f32 %v235, %v252
    %v257 = vadd.f32 %v236, %v253
    %v258 = vadd.f32 %v237, %v254
    %v259 = vadd.f32 %v238, %v255
    %v260 = vld [vmem:[%s5 + $0x4] sm:$0x1]
    %v261 = vlaneseq
    %v262 = vshrl.u32 %v261, 7
    %v263 = vsub.s32 0, %v262
    %v264 = vrot.slane %v260, %v263
    %v265 = vmul.f32 %v264, %v158
    %v266 = vmul.f32 %v264, %v163
    %v267 = vmul.f32 %v264, %v168
    %v268 = vmul.f32 %v264, %v173
    %v269 = vadd.f32 %v256, %v265
    %v270 = vadd.f32 %v257, %v266
    %v271 = vadd.f32 %v258, %v267
    %v272 = vadd.f32 %v259, %v268
    %273 = vrot.lane.b32.xlu0 %v158, 127
    %v274 = vpop.permute.xlu0 %273
    %275 = vrot.lane.b32.xlu0 %v163, 127
    %v276 = vpop.permute.xlu0 %275
    %277 = vrot.lane.b32.xlu0 %v168, 127
    %v278 = vpop.permute.xlu0 %277
    %279 = vrot.lane.b32.xlu0 %v173, 127
    %v280 = vpop.permute.xlu0 %279
    %v281 = vld [vmem:[%s5 + $0x5] sm:$0x1]
    %v282 = vlaneseq
    %v283 = vshrl.u32 %v282, 7
    %v284 = vsub.s32 0, %v283
    %v285 = vrot.slane %v281, %v284
    %v286 = vmul.f32 %v285, %v274
    %v287 = vmul.f32 %v285, %v276
    %v288 = vmul.f32 %v285, %v278
    %v289 = vmul.f32 %v285, %v280
    %v290 = vadd.f32 %v269, %v286
    %v291 = vadd.f32 %v270, %v287
    %v292 = vadd.f32 %v271, %v288
    %v293 = vadd.f32 %v272, %v289
    %294 = vrot.lane.b32.xlu0 %v158, 121
    %v295 = vpop.permute.xlu0 %294
    %296 = vrot.lane.b32.xlu0 %v163, 121
    %v297 = vpop.permute.xlu0 %296
    %298 = vrot.lane.b32.xlu0 %v168, 121
    %v299 = vpop.permute.xlu0 %298
    %300 = vrot.lane.b32.xlu0 %v173, 121
    %v301 = vpop.permute.xlu0 %300
    %v302 = vld [vmem:[%s5 + $0x6] sm:$0x1]
    %v303 = vlaneseq
    %v304 = vshrl.u32 %v303, 7
    %v305 = vsub.s32 0, %v304
    %v306 = vrot.slane %v302, %v305
    %v307 = vmul.f32 %v306, %v295
    %v308 = vmul.f32 %v306, %v297
    %v309 = vmul.f32 %v306, %v299
    %v310 = vmul.f32 %v306, %v301
    %v311 = vadd.f32 %v290, %v307
    %v312 = vadd.f32 %v291, %v308
    %v313 = vadd.f32 %v292, %v309
    %v314 = vadd.f32 %v293, %v310
    %315 = vrot.lane.b32.xlu0 %v158, 120
    %v316 = vpop.permute.xlu0 %315
    %317 = vrot.lane.b32.xlu0 %v163, 120
    %v318 = vpop.permute.xlu0 %317
    %319 = vrot.lane.b32.xlu0 %v168, 120
    %v320 = vpop.permute.xlu0 %319
    %321 = vrot.lane.b32.xlu0 %v173, 120
    %v322 = vpop.permute.xlu0 %321
    %v323 = vld [vmem:[%s5 + $0x7] sm:$0x1]
    %v324 = vlaneseq
    %v325 = vshrl.u32 %v324, 7
    %v326 = vsub.s32 0, %v325
    %v327 = vrot.slane %v323, %v326
    %v328 = vmul.f32 %v327, %v316
    %v329 = vmul.f32 %v327, %v318
    %v330 = vmul.f32 %v327, %v320
    %v331 = vmul.f32 %v327, %v322
    %v332 = vadd.f32 %v311, %v328
    %v333 = vadd.f32 %v312, %v329
    %v334 = vadd.f32 %v313, %v330
    %v335 = vadd.f32 %v314, %v331
    %336 = vrot.lane.b32.xlu0 %v158, 119
    %v337 = vpop.permute.xlu0 %336
    %338 = vrot.lane.b32.xlu0 %v163, 119
    %v339 = vpop.permute.xlu0 %338
    %340 = vrot.lane.b32.xlu0 %v168, 119
    %v341 = vpop.permute.xlu0 %340
    %342 = vrot.lane.b32.xlu0 %v173, 119
    %v343 = vpop.permute.xlu0 %342
    %v344 = vld [vmem:[%s5 + $0x8] sm:$0x1]
    %v345 = vlaneseq
    %v346 = vshrl.u32 %v345, 7
    %v347 = vsub.s32 0, %v346
    %v348 = vrot.slane %v344, %v347
    %v349 = vmul.f32 %v348, %v337
    %v350 = vmul.f32 %v348, %v339
    %v351 = vmul.f32 %v348, %v341
    %v352 = vmul.f32 %v348, %v343
    %v353 = vadd.f32 %v332, %v349
    %v354 = vadd.f32 %v333, %v350
    %v355 = vadd.f32 %v334, %v351
    %v356 = vadd.f32 %v335, %v352
    %357 = vst [vmem:[#allocation2 + $0x20] sm:$0xff] %v353
    %358 = vst [vmem:[#allocation2 + $0x28] sm:$0xff] %v354
    %359 = vst [vmem:[#allocation2 + $0x30] sm:$0xff] %v355
    %360 = vst [vmem:[#allocation2 + $0x38] sm:$0xff] %v356
    %v361 = vld [vmem:[%s3] sm:$0xff]
    %v362 = vld [vmem:[%s3 + $0x8] sm:$0xff]
    %v363 = vld [vmem:[%s3 + $0x10] sm:$0xff]
    %v364 = vld [vmem:[%s3 + $0x18] sm:$0xff]
    %v365 = vld [vmem:[%s3 + $0x20] sm:$0xff]
    %v366 = vld [vmem:[%s3 + $0x28] sm:$0xff]
    %v367 = vld [vmem:[%s3 + $0x30] sm:$0xff]
    %v368 = vld [vmem:[%s3 + $0x38] sm:$0xff]
    %v369 = vld [vmem:[#allocation2] sm:$0xff]
    %v370 = vld [vmem:[#allocation2 + $0x8] sm:$0xff]
    %v371 = vld [vmem:[#allocation2 + $0x10] sm:$0xff]
    %v372 = vld [vmem:[#allocation2 + $0x18] sm:$0xff]
    %v373 = vld [vmem:[#allocation2 + $0x20] sm:$0xff]
    %v374 = vld [vmem:[#allocation2 + $0x28] sm:$0xff]
    %v375 = vld [vmem:[#allocation2 + $0x30] sm:$0xff]
    %v376 = vld [vmem:[#allocation2 + $0x38] sm:$0xff]
    %v377 = vld [vmem:[#allocation2 + $0x40] sm:$0xff]
    %v378 = vld [vmem:[#allocation2 + $0x48] sm:$0xff]
    %v379 = vld [vmem:[#allocation2 + $0x50] sm:$0xff]
    %v380 = vld [vmem:[#allocation2 + $0x58] sm:$0xff]
    %v381 = vld [vmem:[#allocation2 + $0x60] sm:$0xff]
    %v382 = vld [vmem:[#allocation2 + $0x68] sm:$0xff]
    %v383 = vld [vmem:[#allocation2 + $0x70] sm:$0xff]
    %v384 = vld [vmem:[#allocation2 + $0x78] sm:$0xff]
    %v385 = vld [vmem:[#allocation2 + $0x80] sm:$0xff]
    %v386 = vld [vmem:[#allocation2 + $0x88] sm:$0xff]
    %v387 = vld [vmem:[#allocation2 + $0x90] sm:$0xff]
    %v388 = vld [vmem:[#allocation2 + $0x98] sm:$0xff]
    %v389 = vld [vmem:[#allocation2 + $0xa0] sm:$0xff]
    %v390 = vld [vmem:[#allocation2 + $0xa8] sm:$0xff]
    %v391 = vld [vmem:[#allocation2 + $0xb0] sm:$0xff]
    %v392 = vld [vmem:[#allocation2 + $0xb8] sm:$0xff]
    %v393 = vld [vmem:[#allocation2 + $0xc0] sm:$0xff]
    %v394 = vld [vmem:[#allocation2 + $0xc8] sm:$0xff]
    %v395 = vld [vmem:[#allocation2 + $0xd0] sm:$0xff]
    %v396 = vld [vmem:[#allocation2 + $0xd8] sm:$0xff]
    %v397 = vld [vmem:[#allocation2 + $0xe0] sm:$0xff]
    %v398 = vld [vmem:[#allocation2 + $0xe8] sm:$0xff]
    %v399 = vld [vmem:[#allocation2 + $0xf0] sm:$0xff]
    %v400 = vld [vmem:[#allocation2 + $0xf8] sm:$0xff]
    %401 = vmatprep.subr.mxu0 0.0
    %402 = vmatpush1.msra.mxu0 %v369
    %403 = vmatprep.subr.mxu0 0.0
    %404 = vmatpush1.msra.mxu0 %v370
    %405 = vmatprep.subr.mxu0 0.0
    %406 = vmatpush1.msra.mxu0 %v371
    %407 = vmatprep.subr.mxu0 0.0
    %408 = vmatpush1.msra.mxu0 %v372
    %409 = vmatprep.subr.mxu0 0.0
    %410 = vmatpush1.msra.mxu0 %v373
    %411 = vmatprep.subr.mxu0 0.0
    %412 = vmatpush1.msra.mxu0 %v374
    %413 = vmatprep.subr.mxu0 0.0
    %414 = vmatpush1.msra.mxu0 %v375
    %415 = vmatprep.subr.mxu0 0.0
    %416 = vmatpush1.msra.mxu0 %v376
    %417 = vmatprep.subr.mxu0 0.0
    %418 = vmatpush1.msra.mxu0 %v377
    %419 = vmatprep.subr.mxu0 0.0
    %420 = vmatpush1.msra.mxu0 %v378
    %421 = vmatprep.subr.mxu0 0.0
    %422 = vmatpush1.msra.mxu0 %v379
    %423 = vmatprep.subr.mxu0 0.0
    %424 = vmatpush1.msra.mxu0 %v380
    %425 = vmatprep.subr.mxu0 0.0
    %426 = vmatpush1.msra.mxu0 %v381
    %427 = vmatprep.subr.mxu0 0.0
    %428 = vmatpush1.msra.mxu0 %v382
    %429 = vmatprep.subr.mxu0 0.0
    %430 = vmatpush1.msra.mxu0 %v383
    %431 = vmatprep.subr.mxu0 0.0
    %432 = vmatpush1.msra.mxu0 %v384
    %433 = vmatprep.subr.mxu0 0.0
    %434 = vmatpush1.msra.mxu0 %v385
    %435 = vmatprep.subr.mxu0 0.0
    %436 = vmatpush1.msra.mxu0 %v386
    %437 = vmatprep.subr.mxu0 0.0
    %438 = vmatpush1.msra.mxu0 %v387
    %439 = vmatprep.subr.mxu0 0.0
    %440 = vmatpush1.msra.mxu0 %v388
    %441 = vmatprep.subr.mxu0 0.0
    %442 = vmatpush1.msra.mxu0 %v389
    %443 = vmatprep.subr.mxu0 0.0
    %444 = vmatpush1.msra.mxu0 %v390
    %445 = vmatprep.subr.mxu0 0.0
    %446 = vmatpush1.msra.mxu0 %v391
    %447 = vmatprep.subr.mxu0 0.0
    %448 = vmatpush1.msra.mxu0 %v392
    %449 = vmatprep.subr.mxu0 0.0
    %450 = vmatpush1.msra.mxu0 %v393
    %451 = vmatprep.subr.mxu0 0.0
    %452 = vmatpush1.msra.mxu0 %v394
    %453 = vmatprep.subr.mxu0 0.0
    %454 = vmatpush1.msra.mxu0 %v395
    %455 = vmatprep.subr.mxu0 0.0
    %456 = vmatpush1.msra.mxu0 %v396
    %457 = vmatprep.subr.mxu0 0.0
    %458 = vmatpush1.msra.mxu0 %v397
    %459 = vmatprep.subr.mxu0 0.0
    %460 = vmatpush1.msra.mxu0 %v398
    %461 = vmatprep.subr.mxu0 0.0
    %462 = vmatpush1.msra.mxu0 %v399
    %463 = vmatprep.subr.mxu0 0.0
    %464 = vmatpush1.msra.mxu0 %v400
    %465 = vmatprep.mubr.f32.mxu0 %v362
    %466 = vmatmul.mubr.f32.gmra.mrb[0].mxu0 %v361
    %v467 = vpop.f32.mrb[0].mxu0
    %v468 = vadd.f32 0.0, %v467
    %v469 = vpop.f32.mrb[0].mxu0
    %470 = vmatprep.mubr.f32.mxu0 %v364
    %471 = vmatmul.mubr.f32.gmra.mrb[0].mxu0 %v363
    %v472 = vpop.f32.mrb[0].mxu0
    %v473 = vadd.f32 0.0, %v472
    %v474 = vpop.f32.mrb[0].mxu0
    %475 = vmatprep.mubr.f32.mxu0 %v366
    %476 = vmatmul.mubr.f32.gmra.mrb[0].mxu0 %v365
    %v477 = vpop.f32.mrb[0].mxu0
    %v478 = vadd.f32 0.0, %v477
    %v479 = vpop.f32.mrb[0].mxu0
    %480 = vmatprep.mubr.f32.mxu0 %v368
    %481 = vmatmul.mubr.f32.gmra.mrb[0].mxu0 %v367
    %v482 = vpop.f32.mrb[0].mxu0
    %v483 = vadd.f32 0.0, %v482
    %v484 = vpop.f32.mrb[0].mxu0
    %485 = vdwg.mxu0
    %486 = vst [vmem:[#allocation2 + $0x40] sm:$0xff] %v468
    %487 = vst [vmem:[#allocation2 + $0x48] sm:$0xff] %v473
    %488 = vst [vmem:[#allocation2 + $0x50] sm:$0xff] %v478
    %489 = vst [vmem:[#allocation2 + $0x58] sm:$0xff] %v483
    %490 = vrot.lane.b32.xlu0 %v468, 9
    %v491 = vpop.permute.xlu0 %490
    %492 = vrot.lane.b32.xlu0 %v473, 9
    %v493 = vpop.permute.xlu0 %492
    %494 = vrot.lane.b32.xlu0 %v478, 9
    %v495 = vpop.permute.xlu0 %494
    %496 = vrot.lane.b32.xlu0 %v483, 9
    %v497 = vpop.permute.xlu0 %496
    %v498 = vld [vmem:[%s5] sm:$0x1]
    %v499 = vlaneseq
    %v500 = vshrl.u32 %v499, 7
    %v501 = vsub.s32 0, %v500
    %v502 = vrot.slane %v498, %v501
    %v503 = vmul.f32 %v502, %v491
    %v504 = vmul.f32 %v502, %v493
    %v505 = vmul.f32 %v502, %v495
    %v506 = vmul.f32 %v502, %v497
    %507 = vrot.lane.b32.xlu0 %v468, 8
    %v508 = vpop.permute.xlu0 %507
    %509 = vrot.lane.b32.xlu0 %v473, 8
    %v510 = vpop.permute.xlu0 %509
    %511 = vrot.lane.b32.xlu0 %v478, 8
    %v512 = vpop.permute.xlu0 %511
    %513 = vrot.lane.b32.xlu0 %v483, 8
    %v514 = vpop.permute.xlu0 %513
    %v515 = vld [vmem:[%s5 + $0x1] sm:$0x1]
    %v516 = vlaneseq
    %v517 = vshrl.u32 %v516, 7
    %v518 = vsub.s32 0, %v517
    %v519 = vrot.slane %v515, %v518
    %v520 = vmul.f32 %v519, %v508
    %v521 = vmul.f32 %v519, %v510
    %v522 = vmul.f32 %v519, %v512
    %v523 = vmul.f32 %v519, %v514
    %v524 = vadd.f32 %v503, %v520
    %v525 = vadd.f32 %v504, %v521
    %v526 = vadd.f32 %v505, %v522
    %v527 = vadd.f32 %v506, %v523
    %528 = vrot.lane.b32.xlu0 %v468, 7
    %v529 = vpop.permute.xlu0 %528
    %530 = vrot.lane.b32.xlu0 %v473, 7
    %v531 = vpop.permute.xlu0 %530
    %532 = vrot.lane.b32.xlu0 %v478, 7
    %v533 = vpop.permute.xlu0 %532
    %534 = vrot.lane.b32.xlu0 %v483, 7
    %v535 = vpop.permute.xlu0 %534
    %v536 = vld [vmem:[%s5 + $0x2] sm:$0x1]
    %v537 = vlaneseq
    %v538 = vshrl.u32 %v537, 7
    %v539 = vsub.s32 0, %v538
    %v540 = vrot.slane %v536, %v539
    %v541 = vmul.f32 %v540, %v529
    %v542 = vmul.f32 %v540, %v531
    %v543 = vmul.f32 %v540, %v533
    %v544 = vmul.f32 %v540, %v535
    %v545 = vadd.f32 %v524, %v541
    %v546 = vadd.f32 %v525, %v542
    %v547 = vadd.f32 %v526, %v543
    %v548 = vadd.f32 %v527, %v544
    %549 = vrot.lane.b32.xlu0 %v468, 1
    %v550 = vpop.permute.xlu0 %549
    %551 = vrot.lane.b32.xlu0 %v473, 1
    %v552 = vpop.permute.xlu0 %551
    %553 = vrot.lane.b32.xlu0 %v478, 1
    %v554 = vpop.permute.xlu0 %553
    %555 = vrot.lane.b32.xlu0 %v483, 1
    %v556 = vpop.permute.xlu0 %555
    %v557 = vld [vmem:[%s5 + $0x3] sm:$0x1]
    %v558 = vlaneseq
    %v559 = vshrl.u32 %v558, 7
    %v560 = vsub.s32 0, %v559
    %v561 = vrot.slane %v557, %v560
    %v562 = vmul.f32 %v561, %v550
    %v563 = vmul.f32 %v561, %v552
    %v564 = vmul.f32 %v561, %v554
    %v565 = vmul.f32 %v561, %v556
    %v566 = vadd.f32 %v545, %v562
    %v567 = vadd.f32 %v546, %v563
    %v568 = vadd.f32 %v547, %v564
    %v569 = vadd.f32 %v548, %v565
    %v570 = vld [vmem:[%s5 + $0x4] sm:$0x1]
    %v571 = vlaneseq
    %v572 = vshrl.u32 %v571, 7
    %v573 = vsub.s32 0, %v572
    %v574 = vrot.slane %v570, %v573
    %v575 = vmul.f32 %v574, %v468
    %v576 = vmul.f32 %v574, %v473
    %v577 = vmul.f32 %v574, %v478
    %v578 = vmul.f32 %v574, %v483
    %v579 = vadd.f32 %v566, %v575
    %v580 = vadd.f32 %v567, %v576
    %v581 = vadd.f32 %v568, %v577
    %v582 = vadd.f32 %v569, %v578
    %583 = vrot.lane.b32.xlu0 %v468, 127
    %v584 = vpop.permute.xlu0 %583
    %585 = vrot.lane.b32.xlu0 %v473, 127
    %v586 = vpop.permute.xlu0 %585
    %587 = vrot.lane.b32.xlu0 %v478, 127
    %v588 = vpop.permute.xlu0 %587
    %589 = vrot.lane.b32.xlu0 %v483, 127
    %v590 = vpop.permute.xlu0 %589
    %v591 = vld [vmem:[%s5 + $0x5] sm:$0x1]
    %v592 = vlaneseq
    %v593 = vshrl.u32 %v592, 7
    %v594 = vsub.s32 0, %v593
    %v595 = vrot.slane %v591, %v594
    %v596 = vmul.f32 %v595, %v584
    %v597 = vmul.f32 %v595, %v586
    %v598 = vmul.f32 %v595, %v588
    %v599 = vmul.f32 %v595, %v590
    %v600 = vadd.f32 %v579, %v596
    %v601 = vadd.f32 %v580, %v597
    %v602 = vadd.f32 %v581, %v598
    %v603 = vadd.f32 %v582, %v599
    %604 = vrot.lane.b32.xlu0 %v468, 121
    %v605 = vpop.permute.xlu0 %604
    %606 = vrot.lane.b32.xlu0 %v473, 121
    %v607 = vpop.permute.xlu0 %606
    %608 = vrot.lane.b32.xlu0 %v478, 121
    %v609 = vpop.permute.xlu0 %608
    %610 = vrot.lane.b32.xlu0 %v483, 121
    %v611 = vpop.permute.xlu0 %610
    %v612 = vld [vmem:[%s5 + $0x6] sm:$0x1]
    %v613 = vlaneseq
    %v614 = vshrl.u32 %v613, 7
    %v615 = vsub.s32 0, %v614
    %v616 = vrot.slane %v612, %v615
    %v617 = vmul.f32 %v616, %v605
    %v618 = vmul.f32 %v616, %v607
    %v619 = vmul.f32 %v616, %v609
    %v620 = vmul.f32 %v616, %v611
    %v621 = vadd.f32 %v600, %v617
    %v622 = vadd.f32 %v601, %v618
    %v623 = vadd.f32 %v602, %v619
    %v624 = vadd.f32 %v603, %v620
    %625 = vrot.lane.b32.xlu0 %v468, 120
    %v626 = vpop.permute.xlu0 %625
    %627 = vrot.lane.b32.xlu0 %v473, 120
    %v628 = vpop.permute.xlu0 %627
    %629 = vrot.lane.b32.xlu0 %v478, 120
    %v630 = vpop.permute.xlu0 %629
    %631 = vrot.lane.b32.xlu0 %v483, 120
    %v632 = vpop.permute.xlu0 %631
    %v633 = vld [vmem:[%s5 + $0x7] sm:$0x1]
    %v634 = vlaneseq
    %v635 = vshrl.u32 %v634, 7
    %v636 = vsub.s32 0, %v635
    %v637 = vrot.slane %v633, %v636
    %v638 = vmul.f32 %v637, %v626
    %v639 = vmul.f32 %v637, %v628
    %v640 = vmul.f32 %v637, %v630
    %v641 = vmul.f32 %v637, %v632
    %v642 = vadd.f32 %v621, %v638
    %v643 = vadd.f32 %v622, %v639
    %v644 = vadd.f32 %v623, %v640
    %v645 = vadd.f32 %v624, %v641
    %646 = vrot.lane.b32.xlu0 %v468, 119
    %v647 = vpop.permute.xlu0 %646
    %648 = vrot.lane.b32.xlu0 %v473, 119
    %v649 = vpop.permute.xlu0 %648
    %650 = vrot.lane.b32.xlu0 %v478, 119
    %v651 = vpop.permute.xlu0 %650
    %652 = vrot.lane.b32.xlu0 %v483, 119
    %v653 = vpop.permute.xlu0 %652
    %v654 = vld [vmem:[%s5 + $0x8] sm:$0x1]
    %v655 = vlaneseq
    %v656 = vshrl.u32 %v655, 7
    %v657 = vsub.s32 0, %v656
    %v658 = vrot.slane %v654, %v657
    %v659 = vmul.f32 %v658, %v647
    %v660 = vmul.f32 %v658, %v649
    %v661 = vmul.f32 %v658, %v651
    %v662 = vmul.f32 %v658, %v653
    %v663 = vadd.f32 %v642, %v659
    %v664 = vadd.f32 %v643, %v660
    %v665 = vadd.f32 %v644, %v661
    %v666 = vadd.f32 %v645, %v662
    %667 = vst [vmem:[#allocation2 + $0x60] sm:$0xff] %v663
    %668 = vst [vmem:[#allocation2 + $0x68] sm:$0xff] %v664
    %669 = vst [vmem:[#allocation2 + $0x70] sm:$0xff] %v665
    %670 = vst [vmem:[#allocation2 + $0x78] sm:$0xff] %v666
    %s671 = scalar_lea.vmem %s3, 64
    %v672 = vld [vmem:[%s671] sm:$0xff]
    %v673 = vld [vmem:[%s671 + $0x8] sm:$0xff]
    %v674 = vld [vmem:[%s671 + $0x10] sm:$0xff]
    %v675 = vld [vmem:[%s671 + $0x18] sm:$0xff]
    %v676 = vld [vmem:[%s671 + $0x20] sm:$0xff]
    %v677 = vld [vmem:[%s671 + $0x28] sm:$0xff]
    %v678 = vld [vmem:[%s671 + $0x30] sm:$0xff]
    %v679 = vld [vmem:[%s671 + $0x38] sm:$0xff]
    %v680 = vld [vmem:[#allocation2] sm:$0xff]
    %v681 = vld [vmem:[#allocation2 + $0x8] sm:$0xff]
    %v682 = vld [vmem:[#allocation2 + $0x10] sm:$0xff]
    %v683 = vld [vmem:[#allocation2 + $0x18] sm:$0xff]
    %v684 = vld [vmem:[#allocation2 + $0x20] sm:$0xff]
    %v685 = vld [vmem:[#allocation2 + $0x28] sm:$0xff]
    %v686 = vld [vmem:[#allocation2 + $0x30] sm:$0xff]
    %v687 = vld [vmem:[#allocation2 + $0x38] sm:$0xff]
    %v688 = vld [vmem:[#allocation2 + $0x40] sm:$0xff]
    %v689 = vld [vmem:[#allocation2 + $0x48] sm:$0xff]
    %v690 = vld [vmem:[#allocation2 + $0x50] sm:$0xff]
    %v691 = vld [vmem:[#allocation2 + $0x58] sm:$0xff]
    %v692 = vld [vmem:[#allocation2 + $0x60] sm:$0xff]
    %v693 = vld [vmem:[#allocation2 + $0x68] sm:$0xff]
    %v694 = vld [vmem:[#allocation2 + $0x70] sm:$0xff]
    %v695 = vld [vmem:[#allocation2 + $0x78] sm:$0xff]
    %v696 = vld [vmem:[#allocation2 + $0x80] sm:$0xff]
    %v697 = vld [vmem:[#allocation2 + $0x88] sm:$0xff]
    %v698 = vld [vmem:[#allocation2 + $0x90] sm:$0xff]
    %v699 = vld [vmem:[#allocation2 + $0x98] sm:$0xff]
    %v700 = vld [vmem:[#allocation2 + $0xa0] sm:$0xff]
    %v701 = vld [vmem:[#allocation2 + $0xa8] sm:$0xff]
    %v702 = vld [vmem:[#allocation2 + $0xb0] sm:$0xff]
    %v703 = vld [vmem:[#allocation2 + $0xb8] sm:$0xff]
    %v704 = vld [vmem:[#allocation2 + $0xc0] sm:$0xff]
    %v705 = vld [vmem:[#allocation2 + $0xc8] sm:$0xff]
    %v706 = vld [vmem:[#allocation2 + $0xd0] sm:$0xff]
    %v707 = vld [vmem:[#allocation2 + $0xd8] sm:$0xff]
    %v708 = vld [vmem:[#allocation2 + $0xe0] sm:$0xff]
    %v709 = vld [vmem:[#allocation2 + $0xe8] sm:$0xff]
    %v710 = vld [vmem:[#allocation2 + $0xf0] sm:$0xff]
    %v711 = vld [vmem:[#allocation2 + $0xf8] sm:$0xff]
    %712 = vmatprep.subr.mxu0 0.0
    %713 = vmatpush1.msra.mxu0 %v680
    %714 = vmatprep.subr.mxu0 0.0
    %715 = vmatpush1.msra.mxu0 %v681
    %716 = vmatprep.subr.mxu0 0.0
    %717 = vmatpush1.msra.mxu0 %v682
    %718 = vmatprep.subr.mxu0 0.0
    %719 = vmatpush1.msra.mxu0 %v683
    %720 = vmatprep.subr.mxu0 0.0
    %721 = vmatpush1.msra.mxu0 %v684
    %722 = vmatprep.subr.mxu0 0.0
    %723 = vmatpush1.msra.mxu0 %v685
    %724 = vmatprep.subr.mxu0 0.0
    %725 = vmatpush1.msra.mxu0 %v686
    %726 = vmatprep.subr.mxu0 0.0
    %727 = vmatpush1.msra.mxu0 %v687
    %728 = vmatprep.subr.mxu0 0.0
    %729 = vmatpush1.msra.mxu0 %v688
    %730 = vmatprep.subr.mxu0 0.0
    %731 = vmatpush1.msra.mxu0 %v689
    %732 = vmatprep.subr.mxu0 0.0
    %733 = vmatpush1.msra.mxu0 %v690
    %734 = vmatprep.subr.mxu0 0.0
    %735 = vmatpush1.msra.mxu0 %v691
    %736 = vmatprep.subr.mxu0 0.0
    %737 = vmatpush1.msra.mxu0 %v692
    %738 = vmatprep.subr.mxu0 0.0
    %739 = vmatpush1.msra.mxu0 %v693
    %740 = vmatprep.subr.mxu0 0.0
    %741 = vmatpush1.msra.mxu0 %v694
    %742 = vmatprep.subr.mxu0 0.0
    %743 = vmatpush1.msra.mxu0 %v695
    %744 = vmatprep.subr.mxu0 0.0
    %745 = vmatpush1.msra.mxu0 %v696
    %746 = vmatprep.subr.mxu0 0.0
    %747 = vmatpush1.msra.mxu0 %v697
    %748 = vmatprep.subr.mxu0 0.0
    %749 = vmatpush1.msra.mxu0 %v698
    %750 = vmatprep.subr.mxu0 0.0
    %751 = vmatpush1.msra.mxu0 %v699
    %752 = vmatprep.subr.mxu0 0.0
    %753 = vmatpush1.msra.mxu0 %v700
    %754 = vmatprep.subr.mxu0 0.0
    %755 = vmatpush1.msra.mxu0 %v701
    %756 = vmatprep.subr.mxu0 0.0
    %757 = vmatpush1.msra.mxu0 %v702
    %758 = vmatprep.subr.mxu0 0.0
    %759 = vmatpush1.msra.mxu0 %v703
    %760 = vmatprep.subr.mxu0 0.0
    %761 = vmatpush1.msra.mxu0 %v704
    %762 = vmatprep.subr.mxu0 0.0
    %763 = vmatpush1.msra.mxu0 %v705
    %764 = vmatprep.subr.mxu0 0.0
    %765 = vmatpush1.msra.mxu0 %v706
    %766 = vmatprep.subr.mxu0 0.0
    %767 = vmatpush1.msra.mxu0 %v707
    %768 = vmatprep.subr.mxu0 0.0
    %769 = vmatpush1.msra.mxu0 %v708
    %770 = vmatprep.subr.mxu0 0.0
    %771 = vmatpush1.msra.mxu0 %v709
    %772 = vmatprep.subr.mxu0 0.0
    %773 = vmatpush1.msra.mxu0 %v710
    %774 = vmatprep.subr.mxu0 0.0
    %775 = vmatpush1.msra.mxu0 %v711
    %776 = vmatprep.mubr.f32.mxu0 %v673
    %777 = vmatmul.mubr.f32.gmra.mrb[0].mxu0 %v672
    %v778 = vpop.f32.mrb[0].mxu0
    %v779 = vadd.f32 0.0, %v778
    %v780 = vpop.f32.mrb[0].mxu0
    %781 = vmatprep.mubr.f32.mxu0 %v675
    %782 = vmatmul.mubr.f32.gmra.mrb[0].mxu0 %v674
    %v783 = vpop.f32.mrb[0].mxu0
    %v784 = vadd.f32 0.0, %v783
    %v785 = vpop.f32.mrb[0].mxu0
    %786 = vmatprep.mubr.f32.mxu0 %v677
    %787 = vmatmul.mubr.f32.gmra.mrb[0].mxu0 %v676
    %v788 = vpop.f32.mrb[0].mxu0
    %v789 = vadd.f32 0.0, %v788
    %v790 = vpop.f32.mrb[0].mxu0
    %791 = vmatprep.mubr.f32.mxu0 %v679
    %792 = vmatmul.mubr.f32.gmra.mrb[0].mxu0 %v678
    %v793 = vpop.f32.mrb[0].mxu0
    %v794 = vadd.f32 0.0, %v793
    %v795 = vpop.f32.mrb[0].mxu0
    %796 = vdwg.mxu0
    %797 = vst [vmem:[#allocation2 + $0x80] sm:$0xff] %v779
    %798 = vst [vmem:[#allocation2 + $0x88] sm:$0xff] %v784
    %799 = vst [vmem:[#allocation2 + $0x90] sm:$0xff] %v789
    %800 = vst [vmem:[#allocation2 + $0x98] sm:$0xff] %v794
    %801 = vrot.lane.b32.xlu0 %v779, 9
    %v802 = vpop.permute.xlu0 %801
    %803 = vrot.lane.b32.xlu0 %v784, 9
    %v804 = vpop.permute.xlu0 %803
    %805 = vrot.lane.b32.xlu0 %v789, 9
    %v806 = vpop.permute.xlu0 %805
    %807 = vrot.lane.b32.xlu0 %v794, 9
    %v808 = vpop.permute.xlu0 %807
    %v809 = vld [vmem:[%s5] sm:$0x1]
    %v810 = vlaneseq
    %v811 = vshrl.u32 %v810, 7
    %v812 = vsub.s32 0, %v811
    %v813 = vrot.slane %v809, %v812
    %v814 = vmul.f32 %v813, %v802
    %v815 = vmul.f32 %v813, %v804
    %v816 = vmul.f32 %v813, %v806
    %v817 = vmul.f32 %v813, %v808
    %818 = vrot.lane.b32.xlu0 %v779, 8
    %v819 = vpop.permute.xlu0 %818
    %820 = vrot.lane.b32.xlu0 %v784, 8
    %v821 = vpop.permute.xlu0 %820
    %822 = vrot.lane.b32.xlu0 %v789, 8
    %v823 = vpop.permute.xlu0 %822
    %824 = vrot.lane.b32.xlu0 %v794, 8
    %v825 = vpop.permute.xlu0 %824
    %v826 = vld [vmem:[%s5 + $0x1] sm:$0x1]
    %v827 = vlaneseq
    %v828 = vshrl.u32 %v827, 7
    %v829 = vsub.s32 0, %v828
    %v830 = vrot.slane %v826, %v829
    %v831 = vmul.f32 %v830, %v819
    %v832 = vmul.f32 %v830, %v821
    %v833 = vmul.f32 %v830, %v823
    %v834 = vmul.f32 %v830, %v825
    %v835 = vadd.f32 %v814, %v831
    %v836 = vadd.f32 %v815, %v832
    %v837 = vadd.f32 %v816, %v833
    %v838 = vadd.f32 %v817, %v834
    %839 = vrot.lane.b32.xlu0 %v779, 7
    %v840 = vpop.permute.xlu0 %839
    %841 = vrot.lane.b32.xlu0 %v784, 7
    %v842 = vpop.permute.xlu0 %841
    %843 = vrot.lane.b32.xlu0 %v789, 7
    %v844 = vpop.permute.xlu0 %843
    %845 = vrot.lane.b32.xlu0 %v794, 7
    %v846 = vpop.permute.xlu0 %845
    %v847 = vld [vmem:[%s5 + $0x2] sm:$0x1]
    %v848 = vlaneseq
    %v849 = vshrl.u32 %v848, 7
    %v850 = vsub.s32 0, %v849
    %v851 = vrot.slane %v847, %v850
    %v852 = vmul.f32 %v851, %v840
    %v853 = vmul.f32 %v851, %v842
    %v854 = vmul.f32 %v851, %v844
    %v855 = vmul.f32 %v851, %v846
    %v856 = vadd.f32 %v835, %v852
    %v857 = vadd.f32 %v836, %v853
    %v858 = vadd.f32 %v837, %v854
    %v859 = vadd.f32 %v838, %v855
    %860 = vrot.lane.b32.xlu0 %v779, 1
    %v861 = vpop.permute.xlu0 %860
    %862 = vrot.lane.b32.xlu0 %v784, 1
    %v863 = vpop.permute.xlu0 %862
    %864 = vrot.lane.b32.xlu0 %v789, 1
    %v865 = vpop.permute.xlu0 %864
    %866 = vrot.lane.b32.xlu0 %v794, 1
    %v867 = vpop.permute.xlu0 %866
    %v868 = vld [vmem:[%s5 + $0x3] sm:$0x1]
    %v869 = vlaneseq
    %v870 = vshrl.u32 %v869, 7
    %v871 = vsub.s32 0, %v870
    %v872 = vrot.slane %v868, %v871
    %v873 = vmul.f32 %v872, %v861
    %v874 = vmul.f32 %v872, %v863
    %v875 = vmul.f32 %v872, %v865
    %v876 = vmul.f32 %v872, %v867
    %v877 = vadd.f32 %v856, %v873
    %v878 = vadd.f32 %v857, %v874
    %v879 = vadd.f32 %v858, %v875
    %v880 = vadd.f32 %v859, %v876
    %v881 = vld [vmem:[%s5 + $0x4] sm:$0x1]
    %v882 = vlaneseq
    %v883 = vshrl.u32 %v882, 7
    %v884 = vsub.s32 0, %v883
    %v885 = vrot.slane %v881, %v884
    %v886 = vmul.f32 %v885, %v779
    %v887 = vmul.f32 %v885, %v784
    %v888 = vmul.f32 %v885, %v789
    %v889 = vmul.f32 %v885, %v794
    %v890 = vadd.f32 %v877, %v886
    %v891 = vadd.f32 %v878, %v887
    %v892 = vadd.f32 %v879, %v888
    %v893 = vadd.f32 %v880, %v889
    %894 = vrot.lane.b32.xlu0 %v779, 127
    %v895 = vpop.permute.xlu0 %894
    %896 = vrot.lane.b32.xlu0 %v784, 127
    %v897 = vpop.permute.xlu0 %896
    %898 = vrot.lane.b32.xlu0 %v789, 127
    %v899 = vpop.permute.xlu0 %898
    %900 = vrot.lane.b32.xlu0 %v794, 127
    %v901 = vpop.permute.xlu0 %900
    %v902 = vld [vmem:[%s5 + $0x5] sm:$0x1]
    %v903 = vlaneseq
    %v904 = vshrl.u32 %v903, 7
    %v905 = vsub.s32 0, %v904
    %v906 = vrot.slane %v902, %v905
    %v907 = vmul.f32 %v906, %v895
    %v908 = vmul.f32 %v906, %v897
    %v909 = vmul.f32 %v906, %v899
    %v910 = vmul.f32 %v906, %v901
    %v911 = vadd.f32 %v890, %v907
    %v912 = vadd.f32 %v891, %v908
    %v913 = vadd.f32 %v892, %v909
    %v914 = vadd.f32 %v893, %v910
    %915 = vrot.lane.b32.xlu0 %v779, 121
    %v916 = vpop.permute.xlu0 %915
    %917 = vrot.lane.b32.xlu0 %v784, 121
    %v918 = vpop.permute.xlu0 %917
    %919 = vrot.lane.b32.xlu0 %v789, 121
    %v920 = vpop.permute.xlu0 %919
    %921 = vrot.lane.b32.xlu0 %v794, 121
    %v922 = vpop.permute.xlu0 %921
    %v923 = vld [vmem:[%s5 + $0x6] sm:$0x1]
    %v924 = vlaneseq
    %v925 = vshrl.u32 %v924, 7
    %v926 = vsub.s32 0, %v925
    %v927 = vrot.slane %v923, %v926
    %v928 = vmul.f32 %v927, %v916
    %v929 = vmul.f32 %v927, %v918
    %v930 = vmul.f32 %v927, %v920
    %v931 = vmul.f32 %v927, %v922
    %v932 = vadd.f32 %v911, %v928
    %v933 = vadd.f32 %v912, %v929
    %v934 = vadd.f32 %v913, %v930
    %v935 = vadd.f32 %v914, %v931
    %936 = vrot.lane.b32.xlu0 %v779, 120
    %v937 = vpop.permute.xlu0 %936
    %938 = vrot.lane.b32.xlu0 %v784, 120
    %v939 = vpop.permute.xlu0 %938
    %940 = vrot.lane.b32.xlu0 %v789, 120
    %v941 = vpop.permute.xlu0 %940
    %942 = vrot.lane.b32.xlu0 %v794, 120
    %v943 = vpop.permute.xlu0 %942
    %v944 = vld [vmem:[%s5 + $0x7] sm:$0x1]
    %v945 = vlaneseq
    %v946 = vshrl.u32 %v945, 7
    %v947 = vsub.s32 0, %v946
    %v948 = vrot.slane %v944, %v947
    %v949 = vmul.f32 %v948, %v937
    %v950 = vmul.f32 %v948, %v939
    %v951 = vmul.f32 %v948, %v941
    %v952 = vmul.f32 %v948, %v943
    %v953 = vadd.f32 %v932, %v949
    %v954 = vadd.f32 %v933, %v950
    %v955 = vadd.f32 %v934, %v951
    %v956 = vadd.f32 %v935, %v952
    %957 = vrot.lane.b32.xlu0 %v779, 119
    %v958 = vpop.permute.xlu0 %957
    %959 = vrot.lane.b32.xlu0 %v784, 119
    %v960 = vpop.permute.xlu0 %959
    %961 = vrot.lane.b32.xlu0 %v789, 119
    %v962 = vpop.permute.xlu0 %961
    %963 = vrot.lane.b32.xlu0 %v794, 119
    %v964 = vpop.permute.xlu0 %963
    %v965 = vld [vmem:[%s5 + $0x8] sm:$0x1]
    %v966 = vlaneseq
    %v967 = vshrl.u32 %v966, 7
    %v968 = vsub.s32 0, %v967
    %v969 = vrot.slane %v965, %v968
    %v970 = vmul.f32 %v969, %v958
    %v971 = vmul.f32 %v969, %v960
    %v972 = vmul.f32 %v969, %v962
    %v973 = vmul.f32 %v969, %v964
    %v974 = vadd.f32 %v953, %v970
    %v975 = vadd.f32 %v954, %v971
    %v976 = vadd.f32 %v955, %v972
    %v977 = vadd.f32 %v956, %v973
    %978 = vst [vmem:[#allocation2 + $0xa0] sm:$0xff] %v974
    %979 = vst [vmem:[#allocation2 + $0xa8] sm:$0xff] %v975
    %980 = vst [vmem:[#allocation2 + $0xb0] sm:$0xff] %v976
    %981 = vst [vmem:[#allocation2 + $0xb8] sm:$0xff] %v977
    %s982 = scalar_lea.vmem %s3, 128
    %v983 = vld [vmem:[%s982] sm:$0xff]
    %v984 = vld [vmem:[%s982 + $0x8] sm:$0xff]
    %v985 = vld [vmem:[%s982 + $0x10] sm:$0xff]
    %v986 = vld [vmem:[%s982 + $0x18] sm:$0xff]
    %v987 = vld [vmem:[%s982 + $0x20] sm:$0xff]
    %v988 = vld [vmem:[%s982 + $0x28] sm:$0xff]
    %v989 = vld [vmem:[%s982 + $0x30] sm:$0xff]
    %v990 = vld [vmem:[%s982 + $0x38] sm:$0xff]
    %v991 = vld [vmem:[#allocation2] sm:$0xff]
    %v992 = vld [vmem:[#allocation2 + $0x8] sm:$0xff]
    %v993 = vld [vmem:[#allocation2 + $0x10] sm:$0xff]
    %v994 = vld [vmem:[#allocation2 + $0x18] sm:$0xff]
    %v995 = vld [vmem:[#allocation2 + $0x20] sm:$0xff]
    %v996 = vld [vmem:[#allocation2 + $0x28] sm:$0xff]
    %v997 = vld [vmem:[#allocation2 + $0x30] sm:$0xff]
    %v998 = vld [vmem:[#allocation2 + $0x38] sm:$0xff]
    %v999 = vld [vmem:[#allocation2 + $0x40] sm:$0xff]
    %v1000 = vld [vmem:[#allocation2 + $0x48] sm:$0xff]
    %v1001 = vld [vmem:[#allocation2 + $0x50] sm:$0xff]
    %v1002 = vld [vmem:[#allocation2 + $0x58] sm:$0xff]
    %v1003 = vld [vmem:[#allocation2 + $0x60] sm:$0xff]
    %v1004 = vld [vmem:[#allocation2 + $0x68] sm:$0xff]
    %v1005 = vld [vmem:[#allocation2 + $0x70] sm:$0xff]
    %v1006 = vld [vmem:[#allocation2 + $0x78] sm:$0xff]
    %v1007 = vld [vmem:[#allocation2 + $0x80] sm:$0xff]
    %v1008 = vld [vmem:[#allocation2 + $0x88] sm:$0xff]
    %v1009 = vld [vmem:[#allocation2 + $0x90] sm:$0xff]
    %v1010 = vld [vmem:[#allocation2 + $0x98] sm:$0xff]
    %v1011 = vld [vmem:[#allocation2 + $0xa0] sm:$0xff]
    %v1012 = vld [vmem:[#allocation2 + $0xa8] sm:$0xff]
    %v1013 = vld [vmem:[#allocation2 + $0xb0] sm:$0xff]
    %v1014 = vld [vmem:[#allocation2 + $0xb8] sm:$0xff]
    %v1015 = vld [vmem:[#allocation2 + $0xc0] sm:$0xff]
    %v1016 = vld [vmem:[#allocation2 + $0xc8] sm:$0xff]
    %v1017 = vld [vmem:[#allocation2 + $0xd0] sm:$0xff]
    %v1018 = vld [vmem:[#allocation2 + $0xd8] sm:$0xff]
    %v1019 = vld [vmem:[#allocation2 + $0xe0] sm:$0xff]
    %v1020 = vld [vmem:[#allocation2 + $0xe8] sm:$0xff]
    %v1021 = vld [vmem:[#allocation2 + $0xf0] sm:$0xff]
    %v1022 = vld [vmem:[#allocation2 + $0xf8] sm:$0xff]
    %1023 = vmatprep.subr.mxu0 0.0
    %1024 = vmatpush1.msra.mxu0 %v991
    %1025 = vmatprep.subr.mxu0 0.0
    %1026 = vmatpush1.msra.mxu0 %v992
    %1027 = vmatprep.subr.mxu0 0.0
    %1028 = vmatpush1.msra.mxu0 %v993
    %1029 = vmatprep.subr.mxu0 0.0
    %1030 = vmatpush1.msra.mxu0 %v994
    %1031 = vmatprep.subr.mxu0 0.0
    %1032 = vmatpush1.msra.mxu0 %v995
    %1033 = vmatprep.subr.mxu0 0.0
    %1034 = vmatpush1.msra.mxu0 %v996
    %1035 = vmatprep.subr.mxu0 0.0
    %1036 = vmatpush1.msra.mxu0 %v997
    %1037 = vmatprep.subr.mxu0 0.0
    %1038 = vmatpush1.msra.mxu0 %v998
    %1039 = vmatprep.subr.mxu0 0.0
    %1040 = vmatpush1.msra.mxu0 %v999
    %1041 = vmatprep.subr.mxu0 0.0
    %1042 = vmatpush1.msra.mxu0 %v1000
    %1043 = vmatprep.subr.mxu0 0.0
    %1044 = vmatpush1.msra.mxu0 %v1001
    %1045 = vmatprep.subr.mxu0 0.0
    %1046 = vmatpush1.msra.mxu0 %v1002
    %1047 = vmatprep.subr.mxu0 0.0
    %1048 = vmatpush1.msra.mxu0 %v1003
    %1049 = vmatprep.subr.mxu0 0.0
    %1050 = vmatpush1.msra.mxu0 %v1004
    %1051 = vmatprep.subr.mxu0 0.0
    %1052 = vmatpush1.msra.mxu0 %v1005
    %1053 = vmatprep.subr.mxu0 0.0
    %1054 = vmatpush1.msra.mxu0 %v1006
    %1055 = vmatprep.subr.mxu0 0.0
    %1056 = vmatpush1.msra.mxu0 %v1007
    %1057 = vmatprep.subr.mxu0 0.0
    %1058 = vmatpush1.msra.mxu0 %v1008
    %1059 = vmatprep.subr.mxu0 0.0
    %1060 = vmatpush1.msra.mxu0 %v1009
    %1061 = vmatprep.subr.mxu0 0.0
    %1062 = vmatpush1.msra.mxu0 %v1010
    %1063 = vmatprep.subr.mxu0 0.0
    %1064 = vmatpush1.msra.mxu0 %v1011
    %1065 = vmatprep.subr.mxu0 0.0
    %1066 = vmatpush1.msra.mxu0 %v1012
    %1067 = vmatprep.subr.mxu0 0.0
    %1068 = vmatpush1.msra.mxu0 %v1013
    %1069 = vmatprep.subr.mxu0 0.0
    %1070 = vmatpush1.msra.mxu0 %v1014
    %1071 = vmatprep.subr.mxu0 0.0
    %1072 = vmatpush1.msra.mxu0 %v1015
    %1073 = vmatprep.subr.mxu0 0.0
    %1074 = vmatpush1.msra.mxu0 %v1016
    %1075 = vmatprep.subr.mxu0 0.0
    %1076 = vmatpush1.msra.mxu0 %v1017
    %1077 = vmatprep.subr.mxu0 0.0
    %1078 = vmatpush1.msra.mxu0 %v1018
    %1079 = vmatprep.subr.mxu0 0.0
    %1080 = vmatpush1.msra.mxu0 %v1019
    %1081 = vmatprep.subr.mxu0 0.0
    %1082 = vmatpush1.msra.mxu0 %v1020
    %1083 = vmatprep.subr.mxu0 0.0
    %1084 = vmatpush1.msra.mxu0 %v1021
    %1085 = vmatprep.subr.mxu0 0.0
    %1086 = vmatpush1.msra.mxu0 %v1022
    %1087 = vmatprep.mubr.f32.mxu0 %v984
    %1088 = vmatmul.mubr.f32.gmra.mrb[0].mxu0 %v983
    %v1089 = vpop.f32.mrb[0].mxu0
    %v1090 = vadd.f32 0.0, %v1089
    %v1091 = vpop.f32.mrb[0].mxu0
    %1092 = vmatprep.mubr.f32.mxu0 %v986
    %1093 = vmatmul.mubr.f32.gmra.mrb[0].mxu0 %v985
    %v1094 = vpop.f32.mrb[0].mxu0
    %v1095 = vadd.f32 0.0, %v1094
    %v1096 = vpop.f32.mrb[0].mxu0
    %1097 = vmatprep.mubr.f32.mxu0 %v988
    %1098 = vmatmul.mubr.f32.gmra.mrb[0].mxu0 %v987
    %v1099 = vpop.f32.mrb[0].mxu0
    %v1100 = vadd.f32 0.0, %v1099
    %v1101 = vpop.f32.mrb[0].mxu0
    %1102 = vmatprep.mubr.f32.mxu0 %v990
    %1103 = vmatmul.mubr.f32.gmra.mrb[0].mxu0 %v989
    %v1104 = vpop.f32.mrb[0].mxu0
    %v1105 = vadd.f32 0.0, %v1104
    %v1106 = vpop.f32.mrb[0].mxu0
    %1107 = vdwg.mxu0
    %1108 = vst [vmem:[#allocation2 + $0xc0] sm:$0xff] %v1090
    %1109 = vst [vmem:[#allocation2 + $0xc8] sm:$0xff] %v1095
    %1110 = vst [vmem:[#allocation2 + $0xd0] sm:$0xff] %v1100
    %1111 = vst [vmem:[#allocation2 + $0xd8] sm:$0xff] %v1105
    %1112 = vrot.lane.b32.xlu0 %v1090, 9
    %v1113 = vpop.permute.xlu0 %1112
    %1114 = vrot.lane.b32.xlu0 %v1095, 9
    %v1115 = vpop.permute.xlu0 %1114
    %1116 = vrot.lane.b32.xlu0 %v1100, 9
    %v1117 = vpop.permute.xlu0 %1116
    %1118 = vrot.lane.b32.xlu0 %v1105, 9
    %v1119 = vpop.permute.xlu0 %1118
    %v1120 = vld [vmem:[%s5] sm:$0x1]
    %v1121 = vlaneseq
    %v1122 = vshrl.u32 %v1121, 7
    %v1123 = vsub.s32 0, %v1122
    %v1124 = vrot.slane %v1120, %v1123
    %v1125 = vmul.f32 %v1124, %v1113
    %v1126 = vmul.f32 %v1124, %v1115
    %v1127 = vmul.f32 %v1124, %v1117
    %v1128 = vmul.f32 %v1124, %v1119
    %1129 = vrot.lane.b32.xlu0 %v1090, 8
    %v1130 = vpop.permute.xlu0 %1129
    %1131 = vrot.lane.b32.xlu0 %v1095, 8
    %v1132 = vpop.permute.xlu0 %1131
    %1133 = vrot.lane.b32.xlu0 %v1100, 8
    %v1134 = vpop.permute.xlu0 %1133
    %1135 = vrot.lane.b32.xlu0 %v1105, 8
    %v1136 = vpop.permute.xlu0 %1135
    %v1137 = vld [vmem:[%s5 + $0x1] sm:$0x1]
    %v1138 = vlaneseq
    %v1139 = vshrl.u32 %v1138, 7
    %v1140 = vsub.s32 0, %v1139
    %v1141 = vrot.slane %v1137, %v1140
    %v1142 = vmul.f32 %v1141, %v1130
    %v1143 = vmul.f32 %v1141, %v1132
    %v1144 = vmul.f32 %v1141, %v1134
    %v1145 = vmul.f32 %v1141, %v1136
    %v1146 = vadd.f32 %v1125, %v1142
    %v1147 = vadd.f32 %v1126, %v1143
    %v1148 = vadd.f32 %v1127, %v1144
    %v1149 = vadd.f32 %v1128, %v1145
    %1150 = vrot.lane.b32.xlu0 %v1090, 7
    %v1151 = vpop.permute.xlu0 %1150
    %1152 = vrot.lane.b32.xlu0 %v1095, 7
    %v1153 = vpop.permute.xlu0 %1152
    %1154 = vrot.lane.b32.xlu0 %v1100, 7
    %v1155 = vpop.permute.xlu0 %1154
    %1156 = vrot.lane.b32.xlu0 %v1105, 7
    %v1157 = vpop.permute.xlu0 %1156
    %v1158 = vld [vmem:[%s5 + $0x2] sm:$0x1]
    %v1159 = vlaneseq
    %v1160 = vshrl.u32 %v1159, 7
    %v1161 = vsub.s32 0, %v1160
    %v1162 = vrot.slane %v1158, %v1161
    %v1163 = vmul.f32 %v1162, %v1151
    %v1164 = vmul.f32 %v1162, %v1153
    %v1165 = vmul.f32 %v1162, %v1155
    %v1166 = vmul.f32 %v1162, %v1157
    %v1167 = vadd.f32 %v1146, %v1163
    %v1168 = vadd.f32 %v1147, %v1164
    %v1169 = vadd.f32 %v1148, %v1165
    %v1170 = vadd.f32 %v1149, %v1166
    %1171 = vrot.lane.b32.xlu0 %v1090, 1
    %v1172 = vpop.permute.xlu0 %1171
    %1173 = vrot.lane.b32.xlu0 %v1095, 1
    %v1174 = vpop.permute.xlu0 %1173
    %1175 = vrot.lane.b32.xlu0 %v1100, 1
    %v1176 = vpop.permute.xlu0 %1175
    %1177 = vrot.lane.b32.xlu0 %v1105, 1
    %v1178 = vpop.permute.xlu0 %1177
    %v1179 = vld [vmem:[%s5 + $0x3] sm:$0x1]
    %v1180 = vlaneseq
    %v1181 = vshrl.u32 %v1180, 7
    %v1182 = vsub.s32 0, %v1181
    %v1183 = vrot.slane %v1179, %v1182
    %v1184 = vmul.f32 %v1183, %v1172
    %v1185 = vmul.f32 %v1183, %v1174
    %v1186 = vmul.f32 %v1183, %v1176
    %v1187 = vmul.f32 %v1183, %v1178
    %v1188 = vadd.f32 %v1167, %v1184
    %v1189 = vadd.f32 %v1168, %v1185
    %v1190 = vadd.f32 %v1169, %v1186
    %v1191 = vadd.f32 %v1170, %v1187
    %v1192 = vld [vmem:[%s5 + $0x4] sm:$0x1]
    %v1193 = vlaneseq
    %v1194 = vshrl.u32 %v1193, 7
    %v1195 = vsub.s32 0, %v1194
    %v1196 = vrot.slane %v1192, %v1195
    %v1197 = vmul.f32 %v1196, %v1090
    %v1198 = vmul.f32 %v1196, %v1095
    %v1199 = vmul.f32 %v1196, %v1100
    %v1200 = vmul.f32 %v1196, %v1105
    %v1201 = vadd.f32 %v1188, %v1197
    %v1202 = vadd.f32 %v1189, %v1198
    %v1203 = vadd.f32 %v1190, %v1199
    %v1204 = vadd.f32 %v1191, %v1200
    %1205 = vrot.lane.b32.xlu0 %v1090, 127
    %v1206 = vpop.permute.xlu0 %1205
    %1207 = vrot.lane.b32.xlu0 %v1095, 127
    %v1208 = vpop.permute.xlu0 %1207
    %1209 = vrot.lane.b32.xlu0 %v1100, 127
    %v1210 = vpop.permute.xlu0 %1209
    %1211 = vrot.lane.b32.xlu0 %v1105, 127
    %v1212 = vpop.permute.xlu0 %1211
    %v1213 = vld [vmem:[%s5 + $0x5] sm:$0x1]
    %v1214 = vlaneseq
    %v1215 = vshrl.u32 %v1214, 7
    %v1216 = vsub.s32 0, %v1215
    %v1217 = vrot.slane %v1213, %v1216
    %v1218 = vmul.f32 %v1217, %v1206
    %v1219 = vmul.f32 %v1217, %v1208
    %v1220 = vmul.f32 %v1217, %v1210
    %v1221 = vmul.f32 %v1217, %v1212
    %v1222 = vadd.f32 %v1201, %v1218
    %v1223 = vadd.f32 %v1202, %v1219
    %v1224 = vadd.f32 %v1203, %v1220
    %v1225 = vadd.f32 %v1204, %v1221
    %1226 = vrot.lane.b32.xlu0 %v1090, 121
    %v1227 = vpop.permute.xlu0 %1226
    %1228 = vrot.lane.b32.xlu0 %v1095, 121
    %v1229 = vpop.permute.xlu0 %1228
    %1230 = vrot.lane.b32.xlu0 %v1100, 121
    %v1231 = vpop.permute.xlu0 %1230
    %1232 = vrot.lane.b32.xlu0 %v1105, 121
    %v1233 = vpop.permute.xlu0 %1232
    %v1234 = vld [vmem:[%s5 + $0x6] sm:$0x1]
    %v1235 = vlaneseq
    %v1236 = vshrl.u32 %v1235, 7
    %v1237 = vsub.s32 0, %v1236
    %v1238 = vrot.slane %v1234, %v1237
    %v1239 = vmul.f32 %v1238, %v1227
    %v1240 = vmul.f32 %v1238, %v1229
    %v1241 = vmul.f32 %v1238, %v1231
    %v1242 = vmul.f32 %v1238, %v1233
    %v1243 = vadd.f32 %v1222, %v1239
    %v1244 = vadd.f32 %v1223, %v1240
    %v1245 = vadd.f32 %v1224, %v1241
    %v1246 = vadd.f32 %v1225, %v1242
    %1247 = vrot.lane.b32.xlu0 %v1090, 120
    %v1248 = vpop.permute.xlu0 %1247
    %1249 = vrot.lane.b32.xlu0 %v1095, 120
    %v1250 = vpop.permute.xlu0 %1249
    %1251 = vrot.lane.b32.xlu0 %v1100, 120
    %v1252 = vpop.permute.xlu0 %1251
    %1253 = vrot.lane.b32.xlu0 %v1105, 120
    %v1254 = vpop.permute.xlu0 %1253
    %v1255 = vld [vmem:[%s5 + $0x7] sm:$0x1]
    %v1256 = vlaneseq
    %v1257 = vshrl.u32 %v1256, 7
    %v1258 = vsub.s32 0, %v1257
    %v1259 = vrot.slane %v1255, %v1258
    %v1260 = vmul.f32 %v1259, %v1248
    %v1261 = vmul.f32 %v1259, %v1250
    %v1262 = vmul.f32 %v1259, %v1252
    %v1263 = vmul.f32 %v1259, %v1254
    %v1264 = vadd.f32 %v1243, %v1260
    %v1265 = vadd.f32 %v1244, %v1261
    %v1266 = vadd.f32 %v1245, %v1262
    %v1267 = vadd.f32 %v1246, %v1263
    %1268 = vrot.lane.b32.xlu0 %v1090, 119
    %v1269 = vpop.permute.xlu0 %1268
    %1270 = vrot.lane.b32.xlu0 %v1095, 119
    %v1271 = vpop.permute.xlu0 %1270
    %1272 = vrot.lane.b32.xlu0 %v1100, 119
    %v1273 = vpop.permute.xlu0 %1272
    %1274 = vrot.lane.b32.xlu0 %v1105, 119
    %v1275 = vpop.permute.xlu0 %1274
    %v1276 = vld [vmem:[%s5 + $0x8] sm:$0x1]
    %v1277 = vlaneseq
    %v1278 = vshrl.u32 %v1277, 7
    %v1279 = vsub.s32 0, %v1278
    %v1280 = vrot.slane %v1276, %v1279
    %v1281 = vmul.f32 %v1280, %v1269
    %v1282 = vmul.f32 %v1280, %v1271
    %v1283 = vmul.f32 %v1280, %v1273
    %v1284 = vmul.f32 %v1280, %v1275
    %v1285 = vadd.f32 %v1264, %v1281
    %v1286 = vadd.f32 %v1265, %v1282
    %v1287 = vadd.f32 %v1266, %v1283
    %v1288 = vadd.f32 %v1267, %v1284
    %1289 = vst [vmem:[#allocation2 + $0xe0] sm:$0xff] %v1285
    %1290 = vst [vmem:[#allocation2 + $0xe8] sm:$0xff] %v1286
    %1291 = vst [vmem:[#allocation2 + $0xf0] sm:$0xff] %v1287
    %1292 = vst [vmem:[#allocation2 + $0xf8] sm:$0xff] %v1288
    %v1293 = vld [vmem:[%s4] sm:$0xff]
    %v1294 = vld [vmem:[%s4 + $0x8] sm:$0xff]
    %v1295 = vld [vmem:[%s4 + $0x10] sm:$0xff]
    %v1296 = vld [vmem:[%s4 + $0x18] sm:$0xff]
    %v1297 = vld [vmem:[%s4 + $0x20] sm:$0xff]
    %v1298 = vld [vmem:[%s4 + $0x28] sm:$0xff]
    %v1299 = vld [vmem:[%s4 + $0x30] sm:$0xff]
    %v1300 = vld [vmem:[%s4 + $0x38] sm:$0xff]
    %v1301 = vld [vmem:[%s4 + $0x40] sm:$0xff]
    %v1302 = vld [vmem:[%s4 + $0x48] sm:$0xff]
    %v1303 = vld [vmem:[%s4 + $0x50] sm:$0xff]
    %v1304 = vld [vmem:[%s4 + $0x58] sm:$0xff]
    %v1305 = vld [vmem:[%s4 + $0x60] sm:$0xff]
    %v1306 = vld [vmem:[%s4 + $0x68] sm:$0xff]
    %v1307 = vld [vmem:[%s4 + $0x70] sm:$0xff]
    %v1308 = vld [vmem:[%s4 + $0x78] sm:$0xff]
    %v1309 = vld [vmem:[%s4 + $0x80] sm:$0xff]
    %v1310 = vld [vmem:[%s4 + $0x88] sm:$0xff]
    %v1311 = vld [vmem:[%s4 + $0x90] sm:$0xff]
    %v1312 = vld [vmem:[%s4 + $0x98] sm:$0xff]
    %v1313 = vld [vmem:[%s4 + $0xa0] sm:$0xff]
    %v1314 = vld [vmem:[%s4 + $0xa8] sm:$0xff]
    %v1315 = vld [vmem:[%s4 + $0xb0] sm:$0xff]
    %v1316 = vld [vmem:[%s4 + $0xb8] sm:$0xff]
    %v1317 = vld [vmem:[%s4 + $0xc0] sm:$0xff]
    %v1318 = vld [vmem:[%s4 + $0xc8] sm:$0xff]
    %v1319 = vld [vmem:[%s4 + $0xd0] sm:$0xff]
    %v1320 = vld [vmem:[%s4 + $0xd8] sm:$0xff]
    %v1321 = vld [vmem:[%s4 + $0xe0] sm:$0xff]
    %v1322 = vld [vmem:[%s4 + $0xe8] sm:$0xff]
    %v1323 = vld [vmem:[%s4 + $0xf0] sm:$0xff]
    %v1324 = vld [vmem:[%s4 + $0xf8] sm:$0xff]
    %v1325 = vld [vmem:[#allocation2] sm:$0xff]
    %v1326 = vld [vmem:[#allocation2 + $0x8] sm:$0xff]
    %v1327 = vld [vmem:[#allocation2 + $0x10] sm:$0xff]
    %v1328 = vld [vmem:[#allocation2 + $0x18] sm:$0xff]
    %v1329 = vld [vmem:[#allocation2 + $0x20] sm:$0xff]
    %v1330 = vld [vmem:[#allocation2 + $0x28] sm:$0xff]
    %v1331 = vld [vmem:[#allocation2 + $0x30] sm:$0xff]
    %v1332 = vld [vmem:[#allocation2 + $0x38] sm:$0xff]
    %v1333 = vld [vmem:[#allocation2 + $0x40] sm:$0xff]
    %v1334 = vld [vmem:[#allocation2 + $0x48] sm:$0xff]
    %v1335 = vld [vmem:[#allocation2 + $0x50] sm:$0xff]
    %v1336 = vld [vmem:[#allocation2 + $0x58] sm:$0xff]
    %v1337 = vld [vmem:[#allocation2 + $0x60] sm:$0xff]
    %v1338 = vld [vmem:[#allocation2 + $0x68] sm:$0xff]
    %v1339 = vld [vmem:[#allocation2 + $0x70] sm:$0xff]
    %v1340 = vld [vmem:[#allocation2 + $0x78] sm:$0xff]
    %v1341 = vld [vmem:[#allocation2 + $0x80] sm:$0xff]
    %v1342 = vld [vmem:[#allocation2 + $0x88] sm:$0xff]
    %v1343 = vld [vmem:[#allocation2 + $0x90] sm:$0xff]
    %v1344 = vld [vmem:[#allocation2 + $0x98] sm:$0xff]
    %v1345 = vld [vmem:[#allocation2 + $0xa0] sm:$0xff]
    %v1346 = vld [vmem:[#allocation2 + $0xa8] sm:$0xff]
    %v1347 = vld [vmem:[#allocation2 + $0xb0] sm:$0xff]
    %v1348 = vld [vmem:[#allocation2 + $0xb8] sm:$0xff]
    %v1349 = vld [vmem:[#allocation2 + $0xc0] sm:$0xff]
    %v1350 = vld [vmem:[#allocation2 + $0xc8] sm:$0xff]
    %v1351 = vld [vmem:[#allocation2 + $0xd0] sm:$0xff]
    %v1352 = vld [vmem:[#allocation2 + $0xd8] sm:$0xff]
    %v1353 = vld [vmem:[#allocation2 + $0xe0] sm:$0xff]
    %v1354 = vld [vmem:[#allocation2 + $0xe8] sm:$0xff]
    %v1355 = vld [vmem:[#allocation2 + $0xf0] sm:$0xff]
    %v1356 = vld [vmem:[#allocation2 + $0xf8] sm:$0xff]
    %1357 = vmatprep.subr.mxu0 0.0
    %1358 = vmatpush1.msra.mxu0 %v1325
    %1359 = vmatprep.subr.mxu0 0.0
    %1360 = vmatpush1.msra.mxu0 %v1326
    %1361 = vmatprep.subr.mxu0 0.0
    %1362 = vmatpush1.msra.mxu0 %v1327
    %1363 = vmatprep.subr.mxu0 0.0
    %1364 = vmatpush1.msra.mxu0 %v1328
    %1365 = vmatprep.subr.mxu0 0.0
    %1366 = vmatpush1.msra.mxu0 %v1329
    %1367 = vmatprep.subr.mxu0 0.0
    %1368 = vmatpush1.msra.mxu0 %v1330
    %1369 = vmatprep.subr.mxu0 0.0
    %1370 = vmatpush1.msra.mxu0 %v1331
    %1371 = vmatprep.subr.mxu0 0.0
    %1372 = vmatpush1.msra.mxu0 %v1332
    %1373 = vmatprep.subr.mxu0 0.0
    %1374 = vmatpush1.msra.mxu0 %v1333
    %1375 = vmatprep.subr.mxu0 0.0
    %1376 = vmatpush1.msra.mxu0 %v1334
    %1377 = vmatprep.subr.mxu0 0.0
    %1378 = vmatpush1.msra.mxu0 %v1335
    %1379 = vmatprep.subr.mxu0 0.0
    %1380 = vmatpush1.msra.mxu0 %v1336
    %1381 = vmatprep.subr.mxu0 0.0
    %1382 = vmatpush1.msra.mxu0 %v1337
    %1383 = vmatprep.subr.mxu0 0.0
    %1384 = vmatpush1.msra.mxu0 %v1338
    %1385 = vmatprep.subr.mxu0 0.0
    %1386 = vmatpush1.msra.mxu0 %v1339
    %1387 = vmatprep.subr.mxu0 0.0
    %1388 = vmatpush1.msra.mxu0 %v1340
    %1389 = vmatprep.subr.mxu0 0.0
    %1390 = vmatpush1.msra.mxu0 %v1341
    %1391 = vmatprep.subr.mxu0 0.0
    %1392 = vmatpush1.msra.mxu0 %v1342
    %1393 = vmatprep.subr.mxu0 0.0
    %1394 = vmatpush1.msra.mxu0 %v1343
    %1395 = vmatprep.subr.mxu0 0.0
    %1396 = vmatpush1.msra.mxu0 %v1344
    %1397 = vmatprep.subr.mxu0 0.0
    %1398 = vmatpush1.msra.mxu0 %v1345
    %1399 = vmatprep.subr.mxu0 0.0
    %1400 = vmatpush1.msra.mxu0 %v1346
    %1401 = vmatprep.subr.mxu0 0.0
    %1402 = vmatpush1.msra.mxu0 %v1347
    %1403 = vmatprep.subr.mxu0 0.0
    %1404 = vmatpush1.msra.mxu0 %v1348
    %1405 = vmatprep.subr.mxu0 0.0
    %1406 = vmatpush1.msra.mxu0 %v1349
    %1407 = vmatprep.subr.mxu0 0.0
    %1408 = vmatpush1.msra.mxu0 %v1350
    %1409 = vmatprep.subr.mxu0 0.0
    %1410 = vmatpush1.msra.mxu0 %v1351
    %1411 = vmatprep.subr.mxu0 0.0
    %1412 = vmatpush1.msra.mxu0 %v1352
    %1413 = vmatprep.subr.mxu0 0.0
    %1414 = vmatpush1.msra.mxu0 %v1353
    %1415 = vmatprep.subr.mxu0 0.0
    %1416 = vmatpush1.msra.mxu0 %v1354
    %1417 = vmatprep.subr.mxu0 0.0
    %1418 = vmatpush1.msra.mxu0 %v1355
    %1419 = vmatprep.subr.mxu0 0.0
    %1420 = vmatpush1.msra.mxu0 %v1356
    %1421 = vmatprep.mubr.f32.mxu0 %v1294
    %1422 = vmatmul.mubr.f32.gmra.mrb[0].mxu0 %v1293
    %v1423 = vpop.f32.mrb[0].mxu0
    %v1424 = vadd.f32 0.0, %v1423
    %v1425 = vpop.f32.mrb[0].mxu0
    %1426 = vmatprep.mubr.f32.mxu0 %v1296
    %1427 = vmatmul.mubr.f32.gmra.mrb[0].mxu0 %v1295
    %v1428 = vpop.f32.mrb[0].mxu0
    %v1429 = vadd.f32 0.0, %v1428
    %v1430 = vpop.f32.mrb[0].mxu0
    %1431 = vmatprep.mubr.f32.mxu0 %v1298
    %1432 = vmatmul.mubr.f32.gmra.mrb[0].mxu0 %v1297
    %v1433 = vpop.f32.mrb[0].mxu0
    %v1434 = vadd.f32 0.0, %v1433
    %v1435 = vpop.f32.mrb[0].mxu0
    %1436 = vmatprep.mubr.f32.mxu0 %v1300
    %1437 = vmatmul.mubr.f32.gmra.mrb[0].mxu0 %v1299
    %v1438 = vpop.f32.mrb[0].mxu0
    %v1439 = vadd.f32 0.0, %v1438
    %v1440 = vpop.f32.mrb[0].mxu0
    %1441 = vmatprep.mubr.f32.mxu0 %v1302
    %1442 = vmatmul.mubr.f32.gmra.mrb[0].mxu0 %v1301
    %v1443 = vpop.f32.mrb[0].mxu0
    %v1444 = vadd.f32 0.0, %v1443
    %v1445 = vpop.f32.mrb[0].mxu0
    %1446 = vmatprep.mubr.f32.mxu0 %v1304
    %1447 = vmatmul.mubr.f32.gmra.mrb[0].mxu0 %v1303
    %v1448 = vpop.f32.mrb[0].mxu0
    %v1449 = vadd.f32 0.0, %v1448
    %v1450 = vpop.f32.mrb[0].mxu0
    %1451 = vmatprep.mubr.f32.mxu0 %v1306
    %1452 = vmatmul.mubr.f32.gmra.mrb[0].mxu0 %v1305
    %v1453 = vpop.f32.mrb[0].mxu0
    %v1454 = vadd.f32 0.0, %v1453
    %v1455 = vpop.f32.mrb[0].mxu0
    %1456 = vmatprep.mubr.f32.mxu0 %v1308
    %1457 = vmatmul.mubr.f32.gmra.mrb[0].mxu0 %v1307
    %v1458 = vpop.f32.mrb[0].mxu0
    %v1459 = vadd.f32 0.0, %v1458
    %v1460 = vpop.f32.mrb[0].mxu0
    %1461 = vmatprep.mubr.f32.mxu0 %v1310
    %1462 = vmatmul.mubr.f32.gmra.mrb[0].mxu0 %v1309
    %v1463 = vpop.f32.mrb[0].mxu0
    %v1464 = vadd.f32 0.0, %v1463
    %v1465 = vpop.f32.mrb[0].mxu0
    %1466 = vmatprep.mubr.f32.mxu0 %v1312
    %1467 = vmatmul.mubr.f32.gmra.mrb[0].mxu0 %v1311
    %v1468 = vpop.f32.mrb[0].mxu0
    %v1469 = vadd.f32 0.0, %v1468
    %v1470 = vpop.f32.mrb[0].mxu0
    %1471 = vmatprep.mubr.f32.mxu0 %v1314
    %1472 = vmatmul.mubr.f32.gmra.mrb[0].mxu0 %v1313
    %v1473 = vpop.f32.mrb[0].mxu0
    %v1474 = vadd.f32 0.0, %v1473
    %v1475 = vpop.f32.mrb[0].mxu0
    %1476 = vmatprep.mubr.f32.mxu0 %v1316
    %1477 = vmatmul.mubr.f32.gmra.mrb[0].mxu0 %v1315
    %v1478 = vpop.f32.mrb[0].mxu0
    %v1479 = vadd.f32 0.0, %v1478
    %v1480 = vpop.f32.mrb[0].mxu0
    %1481 = vmatprep.mubr.f32.mxu0 %v1318
    %1482 = vmatmul.mubr.f32.gmra.mrb[0].mxu0 %v1317
    %v1483 = vpop.f32.mrb[0].mxu0
    %v1484 = vadd.f32 0.0, %v1483
    %v1485 = vpop.f32.mrb[0].mxu0
    %1486 = vmatprep.mubr.f32.mxu0 %v1320
    %1487 = vmatmul.mubr.f32.gmra.mrb[0].mxu0 %v1319
    %v1488 = vpop.f32.mrb[0].mxu0
    %v1489 = vadd.f32 0.0, %v1488
    %v1490 = vpop.f32.mrb[0].mxu0
    %1491 = vmatprep.mubr.f32.mxu0 %v1322
    %1492 = vmatmul.mubr.f32.gmra.mrb[0].mxu0 %v1321
    %v1493 = vpop.f32.mrb[0].mxu0
    %v1494 = vadd.f32 0.0, %v1493
    %v1495 = vpop.f32.mrb[0].mxu0
    %1496 = vmatprep.mubr.f32.mxu0 %v1324
    %1497 = vmatmul.mubr.f32.gmra.mrb[0].mxu0 %v1323
    %v1498 = vpop.f32.mrb[0].mxu0
    %v1499 = vadd.f32 0.0, %v1498
    %v1500 = vpop.f32.mrb[0].mxu0
    %1501 = vdwg.mxu0
    %v1502 = vadd.f32 %v1424, %v1429
    %v1503 = vadd.f32 %v1502, %v1434
    %v1504 = vadd.f32 %v1503, %v1439
    %v1505 = vadd.f32 %v1504, %v1444
    %v1506 = vadd.f32 %v1505, %v1449
    %v1507 = vadd.f32 %v1506, %v1454
    %v1508 = vadd.f32 %v1507, %v1459
    %v1509 = vadd.f32 %v1508, %v1464
    %v1510 = vadd.f32 %v1509, %v1469
    %v1511 = vadd.f32 %v1510, %v1474
    %v1512 = vadd.f32 %v1511, %v1479
    %v1513 = vadd.f32 %v1512, %v1484
    %v1514 = vadd.f32 %v1513, %v1489
    %v1515 = vadd.f32 %v1514, %v1494
    %v1516 = vadd.f32 %v1515, %v1499
    %v1517 = vrot.slane %v1516, 4
    %v1518 = vadd.f32 %v1516, %v1517
    %v1519 = vrot.slane %v1518, 2
    %v1520 = vadd.f32 %v1518, %v1519
    %v1521 = vrot.slane %v1520, 1
    %v1522 = vadd.f32 %v1520, %v1521
    %v1523 = vrcp.pop 128.0
    %v1524 = vmul.f32 %v1522, %v1523
    %v1525 = vxor.u32 %v1524, 2147483648
    %v1526 = vmul.f32 %v1525, 1.442695
    %v1527 = vpow.pop %v1526
    %v1528 = vadd.f32 %v1527, 1.0
    %v1529 = vrcp.pop %v1528
    %v1530 = vmul.f32 1.0, %v1529
    %v1531 = vld [vmem:[%s6] sm:$0x1]
    %v1532 = vlaneseq
    %v1533 = vshrl.u32 %v1532, 7
    %v1534 = vsub.s32 0, %v1533
    %v1535 = vrot.slane %v1531, %v1534
    %v1536 = vmul.f32 %v1424, %v1535
    %v1537 = vmul.f32 %v1429, %v1535
    %v1538 = vmul.f32 %v1434, %v1535
    %v1539 = vmul.f32 %v1439, %v1535
    %v1540 = vmul.f32 %v1444, %v1535
    %v1541 = vmul.f32 %v1449, %v1535
    %v1542 = vmul.f32 %v1454, %v1535
    %v1543 = vmul.f32 %v1459, %v1535
    %v1544 = vmul.f32 %v1464, %v1535
    %v1545 = vmul.f32 %v1469, %v1535
    %v1546 = vmul.f32 %v1474, %v1535
    %v1547 = vmul.f32 %v1479, %v1535
    %v1548 = vmul.f32 %v1484, %v1535
    %v1549 = vmul.f32 %v1489, %v1535
    %v1550 = vmul.f32 %v1494, %v1535
    %v1551 = vmul.f32 %v1499, %v1535
    %1552 = vadd.xlane.f32.xlu0 %v1536
    %v1553 = vpop.xlane.xlu0 %1552
    %1554 = vadd.xlane.f32.xlu0 %v1537
    %v1555 = vpop.xlane.xlu0 %1554
    %1556 = vadd.xlane.f32.xlu0 %v1538
    %v1557 = vpop.xlane.xlu0 %1556
    %1558 = vadd.xlane.f32.xlu0 %v1539
    %v1559 = vpop.xlane.xlu0 %1558
    %1560 = vadd.xlane.f32.xlu0 %v1540
    %v1561 = vpop.xlane.xlu0 %1560
    %1562 = vadd.xlane.f32.xlu0 %v1541
    %v1563 = vpop.xlane.xlu0 %1562
    %1564 = vadd.xlane.f32.xlu0 %v1542
    %v1565 = vpop.xlane.xlu0 %1564
    %1566 = vadd.xlane.f32.xlu0 %v1543
    %v1567 = vpop.xlane.xlu0 %1566
    %1568 = vadd.xlane.f32.xlu0 %v1544
    %v1569 = vpop.xlane.xlu0 %1568
    %1570 = vadd.xlane.f32.xlu0 %v1545
    %v1571 = vpop.xlane.xlu0 %1570
    %1572 = vadd.xlane.f32.xlu0 %v1546
    %v1573 = vpop.xlane.xlu0 %1572
    %1574 = vadd.xlane.f32.xlu0 %v1547
    %v1575 = vpop.xlane.xlu0 %1574
    %1576 = vadd.xlane.f32.xlu0 %v1548
    %v1577 = vpop.xlane.xlu0 %1576
    %1578 = vadd.xlane.f32.xlu0 %v1549
    %v1579 = vpop.xlane.xlu0 %1578
    %1580 = vadd.xlane.f32.xlu0 %v1550
    %v1581 = vpop.xlane.xlu0 %1580
    %1582 = vadd.xlane.f32.xlu0 %v1551
    %v1583 = vpop.xlane.xlu0 %1582
    %v1584 = vmul.f32 %v1553, 0.015625
    %v1585 = vmul.f32 %v1555, 0.015625
    %v1586 = vmul.f32 %v1557, 0.015625
    %v1587 = vmul.f32 %v1559, 0.015625
    %v1588 = vmul.f32 %v1561, 0.015625
    %v1589 = vmul.f32 %v1563, 0.015625
    %v1590 = vmul.f32 %v1565, 0.015625
    %v1591 = vmul.f32 %v1567, 0.015625
    %v1592 = vmul.f32 %v1569, 0.015625
    %v1593 = vmul.f32 %v1571, 0.015625
    %v1594 = vmul.f32 %v1573, 0.015625
    %v1595 = vmul.f32 %v1575, 0.015625
    %v1596 = vmul.f32 %v1577, 0.015625
    %v1597 = vmul.f32 %v1579, 0.015625
    %v1598 = vmul.f32 %v1581, 0.015625
    %v1599 = vmul.f32 %v1583, 0.015625
    %v1600 = vxor.u32 %v1584, 2147483648
    %v1601 = vxor.u32 %v1585, 2147483648
    %v1602 = vxor.u32 %v1586, 2147483648
    %v1603 = vxor.u32 %v1587, 2147483648
    %v1604 = vxor.u32 %v1588, 2147483648
    %v1605 = vxor.u32 %v1589, 2147483648
    %v1606 = vxor.u32 %v1590, 2147483648
    %v1607 = vxor.u32 %v1591, 2147483648
    %v1608 = vxor.u32 %v1592, 2147483648
    %v1609 = vxor.u32 %v1593, 2147483648
    %v1610 = vxor.u32 %v1594, 2147483648
    %v1611 = vxor.u32 %v1595, 2147483648
    %v1612 = vxor.u32 %v1596, 2147483648
    %v1613 = vxor.u32 %v1597, 2147483648
    %v1614 = vxor.u32 %v1598, 2147483648
    %v1615 = vxor.u32 %v1599, 2147483648
    %v1616 = vmul.f32 %v1600, 1.442695
    %v1617 = vpow.pop %v1616
    %v1618 = vmul.f32 %v1601, 1.442695
    %v1619 = vpow.pop %v1618
    %v1620 = vmul.f32 %v1602, 1.442695
    %v1621 = vpow.pop %v1620
    %v1622 = vmul.f32 %v1603, 1.442695
    %v1623 = vpow.pop %v1622
    %v1624 = vmul.f32 %v1604, 1.442695
    %v1625 = vpow.pop %v1624
    %v1626 = vmul.f32 %v1605, 1.442695
    %v1627 = vpow.pop %v1626
    %v1628 = vmul.f32 %v1606, 1.442695
    %v1629 = vpow.pop %v1628
    %v1630 = vmul.f32 %v1607, 1.442695
    %v1631 = vpow.pop %v1630
    %v1632 = vmul.f32 %v1608, 1.442695
    %v1633 = vpow.pop %v1632
    %v1634 = vmul.f32 %v1609, 1.442695
    %v1635 = vpow.pop %v1634
    %v1636 = vmul.f32 %v1610, 1.442695
    %v1637 = vpow.pop %v1636
    %v1638 = vmul.f32 %v1611, 1.442695
    %v1639 = vpow.pop %v1638
    %v1640 = vmul.f32 %v1612, 1.442695
    %v1641 = vpow.pop %v1640
    %v1642 = vmul.f32 %v1613, 1.442695
    %v1643 = vpow.pop %v1642
    %v1644 = vmul.f32 %v1614, 1.442695
    %v1645 = vpow.pop %v1644
    %v1646 = vmul.f32 %v1615, 1.442695
    %v1647 = vpow.pop %v1646
    %v1648 = vadd.f32 %v1617, 1.0
    %v1649 = vadd.f32 %v1619, 1.0
    %v1650 = vadd.f32 %v1621, 1.0
    %v1651 = vadd.f32 %v1623, 1.0
    %v1652 = vadd.f32 %v1625, 1.0
    %v1653 = vadd.f32 %v1627, 1.0
    %v1654 = vadd.f32 %v1629, 1.0
    %v1655 = vadd.f32 %v1631, 1.0
    %v1656 = vadd.f32 %v1633, 1.0
    %v1657 = vadd.f32 %v1635, 1.0
    %v1658 = vadd.f32 %v1637, 1.0
    %v1659 = vadd.f32 %v1639, 1.0
    %v1660 = vadd.f32 %v1641, 1.0
    %v1661 = vadd.f32 %v1643, 1.0
    %v1662 = vadd.f32 %v1645, 1.0
    %v1663 = vadd.f32 %v1647, 1.0
    %v1664 = vrcp.pop %v1648
    %v1665 = vmul.f32 1.0, %v1664
    %v1666 = vrcp.pop %v1649
    %v1667 = vmul.f32 1.0, %v1666
    %v1668 = vrcp.pop %v1650
    %v1669 = vmul.f32 1.0, %v1668
    %v1670 = vrcp.pop %v1651
    %v1671 = vmul.f32 1.0, %v1670
    %v1672 = vrcp.pop %v1652
    %v1673 = vmul.f32 1.0, %v1672
    %v1674 = vrcp.pop %v1653
    %v1675 = vmul.f32 1.0, %v1674
    %v1676 = vrcp.pop %v1654
    %v1677 = vmul.f32 1.0, %v1676
    %v1678 = vrcp.pop %v1655
    %v1679 = vmul.f32 1.0, %v1678
    %v1680 = vrcp.pop %v1656
    %v1681 = vmul.f32 1.0, %v1680
    %v1682 = vrcp.pop %v1657
    %v1683 = vmul.f32 1.0, %v1682
    %v1684 = vrcp.pop %v1658
    %v1685 = vmul.f32 1.0, %v1684
    %v1686 = vrcp.pop %v1659
    %v1687 = vmul.f32 1.0, %v1686
    %v1688 = vrcp.pop %v1660
    %v1689 = vmul.f32 1.0, %v1688
    %v1690 = vrcp.pop %v1661
    %v1691 = vmul.f32 1.0, %v1690
    %v1692 = vrcp.pop %v1662
    %v1693 = vmul.f32 1.0, %v1692
    %v1694 = vrcp.pop %v1663
    %v1695 = vmul.f32 1.0, %v1694
    %v1696 = vmul.f32 %v1665, %v1535
    %v1697 = vmul.f32 %v1667, %v1535
    %v1698 = vmul.f32 %v1669, %v1535
    %v1699 = vmul.f32 %v1671, %v1535
    %v1700 = vmul.f32 %v1673, %v1535
    %v1701 = vmul.f32 %v1675, %v1535
    %v1702 = vmul.f32 %v1677, %v1535
    %v1703 = vmul.f32 %v1679, %v1535
    %v1704 = vmul.f32 %v1681, %v1535
    %v1705 = vmul.f32 %v1683, %v1535
    %v1706 = vmul.f32 %v1685, %v1535
    %v1707 = vmul.f32 %v1687, %v1535
    %v1708 = vmul.f32 %v1689, %v1535
    %v1709 = vmul.f32 %v1691, %v1535
    %v1710 = vmul.f32 %v1693, %v1535
    %v1711 = vmul.f32 %v1695, %v1535
    %v1712 = vadd.f32 %v1696, 0.0
    %v1713 = vadd.f32 %v1697, 0.0
    %v1714 = vadd.f32 %v1698, 0.0
    %v1715 = vadd.f32 %v1699, 0.0
    %v1716 = vadd.f32 %v1700, 0.0
    %v1717 = vadd.f32 %v1701, 0.0
    %v1718 = vadd.f32 %v1702, 0.0
    %v1719 = vadd.f32 %v1703, 0.0
    %v1720 = vadd.f32 %v1704, 0.0
    %v1721 = vadd.f32 %v1705, 0.0
    %v1722 = vadd.f32 %v1706, 0.0
    %v1723 = vadd.f32 %v1707, 0.0
    %v1724 = vadd.f32 %v1708, 0.0
    %v1725 = vadd.f32 %v1709, 0.0
    %v1726 = vadd.f32 %v1710, 0.0
    %v1727 = vadd.f32 %v1711, 0.0
    %v1728 = vld [vmem:[%s6 + $0x1] sm:$0x1]
    %v1729 = vlaneseq
    %v1730 = vshrl.u32 %v1729, 7
    %v1731 = vsub.s32 0, %v1730
    %v1732 = vrot.slane %v1728, %v1731
    %v1733 = vmul.f32 %v1424, %v1732
    %v1734 = vmul.f32 %v1429, %v1732
    %v1735 = vmul.f32 %v1434, %v1732
    %v1736 = vmul.f32 %v1439, %v1732
    %v1737 = vmul.f32 %v1444, %v1732
    %v1738 = vmul.f32 %v1449, %v1732
    %v1739 = vmul.f32 %v1454, %v1732
    %v1740 = vmul.f32 %v1459, %v1732
    %v1741 = vmul.f32 %v1464, %v1732
    %v1742 = vmul.f32 %v1469, %v1732
    %v1743 = vmul.f32 %v1474, %v1732
    %v1744 = vmul.f32 %v1479, %v1732
    %v1745 = vmul.f32 %v1484, %v1732
    %v1746 = vmul.f32 %v1489, %v1732
    %v1747 = vmul.f32 %v1494, %v1732
    %v1748 = vmul.f32 %v1499, %v1732
    %1749 = vadd.xlane.f32.xlu0 %v1733
    %v1750 = vpop.xlane.xlu0 %1749
    %1751 = vadd.xlane.f32.xlu0 %v1734
    %v1752 = vpop.xlane.xlu0 %1751
    %1753 = vadd.xlane.f32.xlu0 %v1735
    %v1754 = vpop.xlane.xlu0 %1753
    %1755 = vadd.xlane.f32.xlu0 %v1736
    %v1756 = vpop.xlane.xlu0 %1755
    %1757 = vadd.xlane.f32.xlu0 %v1737
    %v1758 = vpop.xlane.xlu0 %1757
    %1759 = vadd.xlane.f32.xlu0 %v1738
    %v1760 = vpop.xlane.xlu0 %1759
    %1761 = vadd.xlane.f32.xlu0 %v1739
    %v1762 = vpop.xlane.xlu0 %1761
    %1763 = vadd.xlane.f32.xlu0 %v1740
    %v1764 = vpop.xlane.xlu0 %1763
    %1765 = vadd.xlane.f32.xlu0 %v1741
    %v1766 = vpop.xlane.xlu0 %1765
    %1767 = vadd.xlane.f32.xlu0 %v1742
    %v1768 = vpop.xlane.xlu0 %1767
    %1769 = vadd.xlane.f32.xlu0 %v1743
    %v1770 = vpop.xlane.xlu0 %1769
    %1771 = vadd.xlane.f32.xlu0 %v1744
    %v1772 = vpop.xlane.xlu0 %1771
    %1773 = vadd.xlane.f32.xlu0 %v1745
    %v1774 = vpop.xlane.xlu0 %1773
    %1775 = vadd.xlane.f32.xlu0 %v1746
    %v1776 = vpop.xlane.xlu0 %1775
    %1777 = vadd.xlane.f32.xlu0 %v1747
    %v1778 = vpop.xlane.xlu0 %1777
    %1779 = vadd.xlane.f32.xlu0 %v1748
    %v1780 = vpop.xlane.xlu0 %1779
    %v1781 = vmul.f32 %v1750, 0.015625
    %v1782 = vmul.f32 %v1752, 0.015625
    %v1783 = vmul.f32 %v1754, 0.015625
    %v1784 = vmul.f32 %v1756, 0.015625
    %v1785 = vmul.f32 %v1758, 0.015625
    %v1786 = vmul.f32 %v1760, 0.015625
    %v1787 = vmul.f32 %v1762, 0.015625
    %v1788 = vmul.f32 %v1764, 0.015625
    %v1789 = vmul.f32 %v1766, 0.015625
    %v1790 = vmul.f32 %v1768, 0.015625
    %v1791 = vmul.f32 %v1770, 0.015625
    %v1792 = vmul.f32 %v1772, 0.015625
    %v1793 = vmul.f32 %v1774, 0.015625
    %v1794 = vmul.f32 %v1776, 0.015625
    %v1795 = vmul.f32 %v1778, 0.015625
    %v1796 = vmul.f32 %v1780, 0.015625
    %v1797 = vxor.u32 %v1781, 2147483648
    %v1798 = vxor.u32 %v1782, 2147483648
    %v1799 = vxor.u32 %v1783, 2147483648
    %v1800 = vxor.u32 %v1784, 2147483648
    %v1801 = vxor.u32 %v1785, 2147483648
    %v1802 = vxor.u32 %v1786, 2147483648
    %v1803 = vxor.u32 %v1787, 2147483648
    %v1804 = vxor.u32 %v1788, 2147483648
    %v1805 = vxor.u32 %v1789, 2147483648
    %v1806 = vxor.u32 %v1790, 2147483648
    %v1807 = vxor.u32 %v1791, 2147483648
    %v1808 = vxor.u32 %v1792, 2147483648
    %v1809 = vxor.u32 %v1793, 2147483648
    %v1810 = vxor.u32 %v1794, 2147483648
    %v1811 = vxor.u32 %v1795, 2147483648
    %v1812 = vxor.u32 %v1796, 2147483648
    %v1813 = vmul.f32 %v1797, 1.442695
    %v1814 = vpow.pop %v1813
    %v1815 = vmul.f32 %v1798, 1.442695
    %v1816 = vpow.pop %v1815
    %v1817 = vmul.f32 %v1799, 1.442695
    %v1818 = vpow.pop %v1817
    %v1819 = vmul.f32 %v1800, 1.442695
    %v1820 = vpow.pop %v1819
    %v1821 = vmul.f32 %v1801, 1.442695
    %v1822 = vpow.pop %v1821
    %v1823 = vmul.f32 %v1802, 1.442695
    %v1824 = vpow.pop %v1823
    %v1825 = vmul.f32 %v1803, 1.442695
    %v1826 = vpow.pop %v1825
    %v1827 = vmul.f32 %v1804, 1.442695
    %v1828 = vpow.pop %v1827
    %v1829 = vmul.f32 %v1805, 1.442695
    %v1830 = vpow.pop %v1829
    %v1831 = vmul.f32 %v1806, 1.442695
    %v1832 = vpow.pop %v1831
    %v1833 = vmul.f32 %v1807, 1.442695
    %v1834 = vpow.pop %v1833
    %v1835 = vmul.f32 %v1808, 1.442695
    %v1836 = vpow.pop %v1835
    %v1837 = vmul.f32 %v1809, 1.442695
    %v1838 = vpow.pop %v1837
    %v1839 = vmul.f32 %v1810, 1.442695
    %v1840 = vpow.pop %v1839
    %v1841 = vmul.f32 %v1811, 1.442695
    %v1842 = vpow.pop %v1841
    %v1843 = vmul.f32 %v1812, 1.442695
    %v1844 = vpow.pop %v1843
    %v1845 = vadd.f32 %v1814, 1.0
    %v1846 = vadd.f32 %v1816, 1.0
    %v1847 = vadd.f32 %v1818, 1.0
    %v1848 = vadd.f32 %v1820, 1.0
    %v1849 = vadd.f32 %v1822, 1.0
    %v1850 = vadd.f32 %v1824, 1.0
    %v1851 = vadd.f32 %v1826, 1.0
    %v1852 = vadd.f32 %v1828, 1.0
    %v1853 = vadd.f32 %v1830, 1.0
    %v1854 = vadd.f32 %v1832, 1.0
    %v1855 = vadd.f32 %v1834, 1.0
    %v1856 = vadd.f32 %v1836, 1.0
    %v1857 = vadd.f32 %v1838, 1.0
    %v1858 = vadd.f32 %v1840, 1.0
    %v1859 = vadd.f32 %v1842, 1.0
    %v1860 = vadd.f32 %v1844, 1.0
    %v1861 = vrcp.pop %v1845
    %v1862 = vmul.f32 1.0, %v1861
    %v1863 = vrcp.pop %v1846
    %v1864 = vmul.f32 1.0, %v1863
    %v1865 = vrcp.pop %v1847
    %v1866 = vmul.f32 1.0, %v1865
    %v1867 = vrcp.pop %v1848
    %v1868 = vmul.f32 1.0, %v1867
    %v1869 = vrcp.pop %v1849
    %v1870 = vmul.f32 1.0, %v1869
    %v1871 = vrcp.pop %v1850
    %v1872 = vmul.f32 1.0, %v1871
    %v1873 = vrcp.pop %v1851
    %v1874 = vmul.f32 1.0, %v1873
    %v1875 = vrcp.pop %v1852
    %v1876 = vmul.f32 1.0, %v1875
    %v1877 = vrcp.pop %v1853
    %v1878 = vmul.f32 1.0, %v1877
    %v1879 = vrcp.pop %v1854
    %v1880 = vmul.f32 1.0, %v1879
    %v1881 = vrcp.pop %v1855
    %v1882 = vmul.f32 1.0, %v1881
    %v1883 = vrcp.pop %v1856
    %v1884 = vmul.f32 1.0, %v1883
    %v1885 = vrcp.pop %v1857
    %v1886 = vmul.f32 1.0, %v1885
    %v1887 = vrcp.pop %v1858
    %v1888 = vmul.f32 1.0, %v1887
    %v1889 = vrcp.pop %v1859
    %v1890 = vmul.f32 1.0, %v1889
    %v1891 = vrcp.pop %v1860
    %v1892 = vmul.f32 1.0, %v1891
    %v1893 = vmul.f32 %v1862, %v1732
    %v1894 = vmul.f32 %v1864, %v1732
    %v1895 = vmul.f32 %v1866, %v1732
    %v1896 = vmul.f32 %v1868, %v1732
    %v1897 = vmul.f32 %v1870, %v1732
    %v1898 = vmul.f32 %v1872, %v1732
    %v1899 = vmul.f32 %v1874, %v1732
    %v1900 = vmul.f32 %v1876, %v1732
    %v1901 = vmul.f32 %v1878, %v1732
    %v1902 = vmul.f32 %v1880, %v1732
    %v1903 = vmul.f32 %v1882, %v1732
    %v1904 = vmul.f32 %v1884, %v1732
    %v1905 = vmul.f32 %v1886, %v1732
    %v1906 = vmul.f32 %v1888, %v1732
    %v1907 = vmul.f32 %v1890, %v1732
    %v1908 = vmul.f32 %v1892, %v1732
    %v1909 = vadd.f32 %v1712, %v1893
    %v1910 = vadd.f32 %v1713, %v1894
    %v1911 = vadd.f32 %v1714, %v1895
    %v1912 = vadd.f32 %v1715, %v1896
    %v1913 = vadd.f32 %v1716, %v1897
    %v1914 = vadd.f32 %v1717, %v1898
    %v1915 = vadd.f32 %v1718, %v1899
    %v1916 = vadd.f32 %v1719, %v1900
    %v1917 = vadd.f32 %v1720, %v1901
    %v1918 = vadd.f32 %v1721, %v1902
    %v1919 = vadd.f32 %v1722, %v1903
    %v1920 = vadd.f32 %v1723, %v1904
    %v1921 = vadd.f32 %v1724, %v1905
    %v1922 = vadd.f32 %v1725, %v1906
    %v1923 = vadd.f32 %v1726, %v1907
    %v1924 = vadd.f32 %v1727, %v1908
    %s1925 = sld [smem:[#allocation3]]
    %s1926 = sld [smem:[#allocation3 + $0x1]]
    %s1927 = sld [smem:[#allocation3 + $0x2]]
    %v1928 = vstv %s1926
    %v1929 = vmul.f32 %v1928, %v1909
    %v1930 = vmul.f32 %v1928, %v1910
    %v1931 = vmul.f32 %v1928, %v1911
    %v1932 = vmul.f32 %v1928, %v1912
    %v1933 = vmul.f32 %v1928, %v1913
    %v1934 = vmul.f32 %v1928, %v1914
    %v1935 = vmul.f32 %v1928, %v1915
    %v1936 = vmul.f32 %v1928, %v1916
    %v1937 = vmul.f32 %v1928, %v1917
    %v1938 = vmul.f32 %v1928, %v1918
    %v1939 = vmul.f32 %v1928, %v1919
    %v1940 = vmul.f32 %v1928, %v1920
    %v1941 = vmul.f32 %v1928, %v1921
    %v1942 = vmul.f32 %v1928, %v1922
    %v1943 = vmul.f32 %v1928, %v1923
    %v1944 = vmul.f32 %v1928, %v1924
    %v1945 = vstv %s1925
    %v1946 = vadd.f32 %v1945, %v1929
    %v1947 = vadd.f32 %v1945, %v1930
    %v1948 = vadd.f32 %v1945, %v1931
    %v1949 = vadd.f32 %v1945, %v1932
    %v1950 = vadd.f32 %v1945, %v1933
    %v1951 = vadd.f32 %v1945, %v1934
    %v1952 = vadd.f32 %v1945, %v1935
    %v1953 = vadd.f32 %v1945, %v1936
    %v1954 = vadd.f32 %v1945, %v1937
    %v1955 = vadd.f32 %v1945, %v1938
    %v1956 = vadd.f32 %v1945, %v1939
    %v1957 = vadd.f32 %v1945, %v1940
    %v1958 = vadd.f32 %v1945, %v1941
    %v1959 = vadd.f32 %v1945, %v1942
    %v1960 = vadd.f32 %v1945, %v1943
    %v1961 = vadd.f32 %v1945, %v1944
    %v1962 = vstv %s1927
    %v1963 = vmul.f32 %v1962, %v1530
    %v1964 = vadd.f32 %v1946, %v1963
    %v1965 = vadd.f32 %v1947, %v1963
    %v1966 = vadd.f32 %v1948, %v1963
    %v1967 = vadd.f32 %v1949, %v1963
    %v1968 = vadd.f32 %v1950, %v1963
    %v1969 = vadd.f32 %v1951, %v1963
    %v1970 = vadd.f32 %v1952, %v1963
    %v1971 = vadd.f32 %v1953, %v1963
    %v1972 = vadd.f32 %v1954, %v1963
    %v1973 = vadd.f32 %v1955, %v1963
    %v1974 = vadd.f32 %v1956, %v1963
    %v1975 = vadd.f32 %v1957, %v1963
    %v1976 = vadd.f32 %v1958, %v1963
    %v1977 = vadd.f32 %v1959, %v1963
    %v1978 = vadd.f32 %v1960, %v1963
    %v1979 = vadd.f32 %v1961, %v1963
    %v1980 = vmul.f32 %v1424, %v1964
    %v1981 = vmul.f32 %v1429, %v1965
    %v1982 = vmul.f32 %v1434, %v1966
    %v1983 = vmul.f32 %v1439, %v1967
    %v1984 = vmul.f32 %v1444, %v1968
    %v1985 = vmul.f32 %v1449, %v1969
    %v1986 = vmul.f32 %v1454, %v1970
    %v1987 = vmul.f32 %v1459, %v1971
    %v1988 = vmul.f32 %v1464, %v1972
    %v1989 = vmul.f32 %v1469, %v1973
    %v1990 = vmul.f32 %v1474, %v1974
    %v1991 = vmul.f32 %v1479, %v1975
    %v1992 = vmul.f32 %v1484, %v1976
    %v1993 = vmul.f32 %v1489, %v1977
    %v1994 = vmul.f32 %v1494, %v1978
    %v1995 = vmul.f32 %v1499, %v1979
    %v1996 = vadd.f32 %v1980, %v1981
    %v1997 = vadd.f32 %v1996, %v1982
    %v1998 = vadd.f32 %v1997, %v1983
    %v1999 = vadd.f32 %v1998, %v1984
    %v2000 = vadd.f32 %v1999, %v1985
    %v2001 = vadd.f32 %v2000, %v1986
    %v2002 = vadd.f32 %v2001, %v1987
    %v2003 = vadd.f32 %v2002, %v1988
    %v2004 = vadd.f32 %v2003, %v1989
    %v2005 = vadd.f32 %v2004, %v1990
    %v2006 = vadd.f32 %v2005, %v1991
    %v2007 = vadd.f32 %v2006, %v1992
    %v2008 = vadd.f32 %v2007, %v1993
    %v2009 = vadd.f32 %v2008, %v1994
    %v2010 = vadd.f32 %v2009, %v1995
    %v2011 = vrot.slane %v2010, 4
    %v2012 = vadd.f32 %v2010, %v2011
    %v2013 = vrot.slane %v2012, 2
    %v2014 = vadd.f32 %v2012, %v2013
    %v2015 = vrot.slane %v2014, 1
    %v2016 = vadd.f32 %v2014, %v2015
    %v2017 = vmul.f32 %v2016, %v1523
    %v2018 = vxor.u32 %v2017, 2147483648
    %v2019 = vmul.f32 %v2018, 1.442695
    %v2020 = vpow.pop %v2019
    %v2021 = vadd.f32 %v2020, 1.0
    %v2022 = vrcp.pop %v2021
    %v2023 = vmul.f32 1.0, %v2022
    %v2024 = vmul.f32 %v1980, %v1535
    %v2025 = vmul.f32 %v1981, %v1535
    %v2026 = vmul.f32 %v1982, %v1535
    %v2027 = vmul.f32 %v1983, %v1535
    %v2028 = vmul.f32 %v1984, %v1535
    %v2029 = vmul.f32 %v1985, %v1535
    %v2030 = vmul.f32 %v1986, %v1535
    %v2031 = vmul.f32 %v1987, %v1535
    %v2032 = vmul.f32 %v1988, %v1535
    %v2033 = vmul.f32 %v1989, %v1535
    %v2034 = vmul.f32 %v1990, %v1535
    %v2035 = vmul.f32 %v1991, %v1535
    %v2036 = vmul.f32 %v1992, %v1535
    %v2037 = vmul.f32 %v1993, %v1535
    %v2038 = vmul.f32 %v1994, %v1535
    %v2039 = vmul.f32 %v1995, %v1535
    %2040 = vadd.xlane.f32.xlu0 %v2024
    %v2041 = vpop.xlane.xlu0 %2040
    %2042 = vadd.xlane.f32.xlu0 %v2025
    %v2043 = vpop.xlane.xlu0 %2042
    %2044 = vadd.xlane.f32.xlu0 %v2026
    %v2045 = vpop.xlane.xlu0 %2044
    %2046 = vadd.xlane.f32.xlu0 %v2027
    %v2047 = vpop.xlane.xlu0 %2046
    %2048 = vadd.xlane.f32.xlu0 %v2028
    %v2049 = vpop.xlane.xlu0 %2048
    %2050 = vadd.xlane.f32.xlu0 %v2029
    %v2051 = vpop.xlane.xlu0 %2050
    %2052 = vadd.xlane.f32.xlu0 %v2030
    %v2053 = vpop.xlane.xlu0 %2052
    %2054 = vadd.xlane.f32.xlu0 %v2031
    %v2055 = vpop.xlane.xlu0 %2054
    %2056 = vadd.xlane.f32.xlu0 %v2032
    %v2057 = vpop.xlane.xlu0 %2056
    %2058 = vadd.xlane.f32.xlu0 %v2033
    %v2059 = vpop.xlane.xlu0 %2058
    %2060 = vadd.xlane.f32.xlu0 %v2034
    %v2061 = vpop.xlane.xlu0 %2060
    %2062 = vadd.xlane.f32.xlu0 %v2035
    %v2063 = vpop.xlane.xlu0 %2062
    %2064 = vadd.xlane.f32.xlu0 %v2036
    %v2065 = vpop.xlane.xlu0 %2064
    %2066 = vadd.xlane.f32.xlu0 %v2037
    %v2067 = vpop.xlane.xlu0 %2066
    %2068 = vadd.xlane.f32.xlu0 %v2038
    %v2069 = vpop.xlane.xlu0 %2068
    %2070 = vadd.xlane.f32.xlu0 %v2039
    %v2071 = vpop.xlane.xlu0 %2070
    %v2072 = vmul.f32 %v2041, 0.015625
    %v2073 = vmul.f32 %v2043, 0.015625
    %v2074 = vmul.f32 %v2045, 0.015625
    %v2075 = vmul.f32 %v2047, 0.015625
    %v2076 = vmul.f32 %v2049, 0.015625
    %v2077 = vmul.f32 %v2051, 0.015625
    %v2078 = vmul.f32 %v2053, 0.015625
    %v2079 = vmul.f32 %v2055, 0.015625
    %v2080 = vmul.f32 %v2057, 0.015625
    %v2081 = vmul.f32 %v2059, 0.015625
    %v2082 = vmul.f32 %v2061, 0.015625
    %v2083 = vmul.f32 %v2063, 0.015625
    %v2084 = vmul.f32 %v2065, 0.015625
    %v2085 = vmul.f32 %v2067, 0.015625
    %v2086 = vmul.f32 %v2069, 0.015625
    %v2087 = vmul.f32 %v2071, 0.015625
    %v2088 = vxor.u32 %v2072, 2147483648
    %v2089 = vxor.u32 %v2073, 2147483648
    %v2090 = vxor.u32 %v2074, 2147483648
    %v2091 = vxor.u32 %v2075, 2147483648
    %v2092 = vxor.u32 %v2076, 2147483648
    %v2093 = vxor.u32 %v2077, 2147483648
    %v2094 = vxor.u32 %v2078, 2147483648
    %v2095 = vxor.u32 %v2079, 2147483648
    %v2096 = vxor.u32 %v2080, 2147483648
    %v2097 = vxor.u32 %v2081, 2147483648
    %v2098 = vxor.u32 %v2082, 2147483648
    %v2099 = vxor.u32 %v2083, 2147483648
    %v2100 = vxor.u32 %v2084, 2147483648
    %v2101 = vxor.u32 %v2085, 2147483648
    %v2102 = vxor.u32 %v2086, 2147483648
    %v2103 = vxor.u32 %v2087, 2147483648
    %v2104 = vmul.f32 %v2088, 1.442695
    %v2105 = vpow.pop %v2104
    %v2106 = vmul.f32 %v2089, 1.442695
    %v2107 = vpow.pop %v2106
    %v2108 = vmul.f32 %v2090, 1.442695
    %v2109 = vpow.pop %v2108
    %v2110 = vmul.f32 %v2091, 1.442695
    %v2111 = vpow.pop %v2110
    %v2112 = vmul.f32 %v2092, 1.442695
    %v2113 = vpow.pop %v2112
    %v2114 = vmul.f32 %v2093, 1.442695
    %v2115 = vpow.pop %v2114
    %v2116 = vmul.f32 %v2094, 1.442695
    %v2117 = vpow.pop %v2116
    %v2118 = vmul.f32 %v2095, 1.442695
    %v2119 = vpow.pop %v2118
    %v2120 = vmul.f32 %v2096, 1.442695
    %v2121 = vpow.pop %v2120
    %v2122 = vmul.f32 %v2097, 1.442695
    %v2123 = vpow.pop %v2122
    %v2124 = vmul.f32 %v2098, 1.442695
    %v2125 = vpow.pop %v2124
    %v2126 = vmul.f32 %v2099, 1.442695
    %v2127 = vpow.pop %v2126
    %v2128 = vmul.f32 %v2100, 1.442695
    %v2129 = vpow.pop %v2128
    %v2130 = vmul.f32 %v2101, 1.442695
    %v2131 = vpow.pop %v2130
    %v2132 = vmul.f32 %v2102, 1.442695
    %v2133 = vpow.pop %v2132
    %v2134 = vmul.f32 %v2103, 1.442695
    %v2135 = vpow.pop %v2134
    %v2136 = vadd.f32 %v2105, 1.0
    %v2137 = vadd.f32 %v2107, 1.0
    %v2138 = vadd.f32 %v2109, 1.0
    %v2139 = vadd.f32 %v2111, 1.0
    %v2140 = vadd.f32 %v2113, 1.0
    %v2141 = vadd.f32 %v2115, 1.0
    %v2142 = vadd.f32 %v2117, 1.0
    %v2143 = vadd.f32 %v2119, 1.0
    %v2144 = vadd.f32 %v2121, 1.0
    %v2145 = vadd.f32 %v2123, 1.0
    %v2146 = vadd.f32 %v2125, 1.0
    %v2147 = vadd.f32 %v2127, 1.0
    %v2148 = vadd.f32 %v2129, 1.0
    %v2149 = vadd.f32 %v2131, 1.0
    %v2150 = vadd.f32 %v2133, 1.0
    %v2151 = vadd.f32 %v2135, 1.0
    %v2152 = vrcp.pop %v2136
    %v2153 = vmul.f32 1.0, %v2152
    %v2154 = vrcp.pop %v2137
    %v2155 = vmul.f32 1.0, %v2154
    %v2156 = vrcp.pop %v2138
    %v2157 = vmul.f32 1.0, %v2156
    %v2158 = vrcp.pop %v2139
    %v2159 = vmul.f32 1.0, %v2158
    %v2160 = vrcp.pop %v2140
    %v2161 = vmul.f32 1.0, %v2160
    %v2162 = vrcp.pop %v2141
    %v2163 = vmul.f32 1.0, %v2162
    %v2164 = vrcp.pop %v2142
    %v2165 = vmul.f32 1.0, %v2164
    %v2166 = vrcp.pop %v2143
    %v2167 = vmul.f32 1.0, %v2166
    %v2168 = vrcp.pop %v2144
    %v2169 = vmul.f32 1.0, %v2168
    %v2170 = vrcp.pop %v2145
    %v2171 = vmul.f32 1.0, %v2170
    %v2172 = vrcp.pop %v2146
    %v2173 = vmul.f32 1.0, %v2172
    %v2174 = vrcp.pop %v2147
    %v2175 = vmul.f32 1.0, %v2174
    %v2176 = vrcp.pop %v2148
    %v2177 = vmul.f32 1.0, %v2176
    %v2178 = vrcp.pop %v2149
    %v2179 = vmul.f32 1.0, %v2178
    %v2180 = vrcp.pop %v2150
    %v2181 = vmul.f32 1.0, %v2180
    %v2182 = vrcp.pop %v2151
    %v2183 = vmul.f32 1.0, %v2182
    %v2184 = vmul.f32 %v2153, %v1535
    %v2185 = vmul.f32 %v2155, %v1535
    %v2186 = vmul.f32 %v2157, %v1535
    %v2187 = vmul.f32 %v2159, %v1535
    %v2188 = vmul.f32 %v2161, %v1535
    %v2189 = vmul.f32 %v2163, %v1535
    %v2190 = vmul.f32 %v2165, %v1535
    %v2191 = vmul.f32 %v2167, %v1535
    %v2192 = vmul.f32 %v2169, %v1535
    %v2193 = vmul.f32 %v2171, %v1535
    %v2194 = vmul.f32 %v2173, %v1535
    %v2195 = vmul.f32 %v2175, %v1535
    %v2196 = vmul.f32 %v2177, %v1535
    %v2197 = vmul.f32 %v2179, %v1535
    %v2198 = vmul.f32 %v2181, %v1535
    %v2199 = vmul.f32 %v2183, %v1535
    %v2200 = vadd.f32 %v2184, 0.0
    %v2201 = vadd.f32 %v2185, 0.0
    %v2202 = vadd.f32 %v2186, 0.0
    %v2203 = vadd.f32 %v2187, 0.0
    %v2204 = vadd.f32 %v2188, 0.0
    %v2205 = vadd.f32 %v2189, 0.0
    %v2206 = vadd.f32 %v2190, 0.0
    %v2207 = vadd.f32 %v2191, 0.0
    %v2208 = vadd.f32 %v2192, 0.0
    %v2209 = vadd.f32 %v2193, 0.0
    %v2210 = vadd.f32 %v2194, 0.0
    %v2211 = vadd.f32 %v2195, 0.0
    %v2212 = vadd.f32 %v2196, 0.0
    %v2213 = vadd.f32 %v2197, 0.0
    %v2214 = vadd.f32 %v2198, 0.0
    %v2215 = vadd.f32 %v2199, 0.0
    %v2216 = vmul.f32 %v1980, %v1732
    %v2217 = vmul.f32 %v1981, %v1732
    %v2218 = vmul.f32 %v1982, %v1732
    %v2219 = vmul.f32 %v1983, %v1732
    %v2220 = vmul.f32 %v1984, %v1732
    %v2221 = vmul.f32 %v1985, %v1732
    %v2222 = vmul.f32 %v1986, %v1732
    %v2223 = vmul.f32 %v1987, %v1732
    %v2224 = vmul.f32 %v1988, %v1732
    %v2225 = vmul.f32 %v1989, %v1732
    %v2226 = vmul.f32 %v1990, %v1732
    %v2227 = vmul.f32 %v1991, %v1732
    %v2228 = vmul.f32 %v1992, %v1732
    %v2229 = vmul.f32 %v1993, %v1732
    %v2230 = vmul.f32 %v1994, %v1732
    %v2231 = vmul.f32 %v1995, %v1732
    %2232 = vadd.xlane.f32.xlu0 %v2216
    %v2233 = vpop.xlane.xlu0 %2232
    %2234 = vadd.xlane.f32.xlu0 %v2217
    %v2235 = vpop.xlane.xlu0 %2234
    %2236 = vadd.xlane.f32.xlu0 %v2218
    %v2237 = vpop.xlane.xlu0 %2236
    %2238 = vadd.xlane.f32.xlu0 %v2219
    %v2239 = vpop.xlane.xlu0 %2238
    %2240 = vadd.xlane.f32.xlu0 %v2220
    %v2241 = vpop.xlane.xlu0 %2240
    %2242 = vadd.xlane.f32.xlu0 %v2221
    %v2243 = vpop.xlane.xlu0 %2242
    %2244 = vadd.xlane.f32.xlu0 %v2222
    %v2245 = vpop.xlane.xlu0 %2244
    %2246 = vadd.xlane.f32.xlu0 %v2223
    %v2247 = vpop.xlane.xlu0 %2246
    %2248 = vadd.xlane.f32.xlu0 %v2224
    %v2249 = vpop.xlane.xlu0 %2248
    %2250 = vadd.xlane.f32.xlu0 %v2225
    %v2251 = vpop.xlane.xlu0 %2250
    %2252 = vadd.xlane.f32.xlu0 %v2226
    %v2253 = vpop.xlane.xlu0 %2252
    %2254 = vadd.xlane.f32.xlu0 %v2227
    %v2255 = vpop.xlane.xlu0 %2254
    %2256 = vadd.xlane.f32.xlu0 %v2228
    %v2257 = vpop.xlane.xlu0 %2256
    %2258 = vadd.xlane.f32.xlu0 %v2229
    %v2259 = vpop.xlane.xlu0 %2258
    %2260 = vadd.xlane.f32.xlu0 %v2230
    %v2261 = vpop.xlane.xlu0 %2260
    %2262 = vadd.xlane.f32.xlu0 %v2231
    %v2263 = vpop.xlane.xlu0 %2262
    %v2264 = vmul.f32 %v2233, 0.015625
    %v2265 = vmul.f32 %v2235, 0.015625
    %v2266 = vmul.f32 %v2237, 0.015625
    %v2267 = vmul.f32 %v2239, 0.015625
    %v2268 = vmul.f32 %v2241, 0.015625
    %v2269 = vmul.f32 %v2243, 0.015625
    %v2270 = vmul.f32 %v2245, 0.015625
    %v2271 = vmul.f32 %v2247, 0.015625
    %v2272 = vmul.f32 %v2249, 0.015625
    %v2273 = vmul.f32 %v2251, 0.015625
    %v2274 = vmul.f32 %v2253, 0.015625
    %v2275 = vmul.f32 %v2255, 0.015625
    %v2276 = vmul.f32 %v2257, 0.015625
    %v2277 = vmul.f32 %v2259, 0.015625
    %v2278 = vmul.f32 %v2261, 0.015625
    %v2279 = vmul.f32 %v2263, 0.015625
    %v2280 = vxor.u32 %v2264, 2147483648
    %v2281 = vxor.u32 %v2265, 2147483648
    %v2282 = vxor.u32 %v2266, 2147483648
    %v2283 = vxor.u32 %v2267, 2147483648
    %v2284 = vxor.u32 %v2268, 2147483648
    %v2285 = vxor.u32 %v2269, 2147483648
    %v2286 = vxor.u32 %v2270, 2147483648
    %v2287 = vxor.u32 %v2271, 2147483648
    %v2288 = vxor.u32 %v2272, 2147483648
    %v2289 = vxor.u32 %v2273, 2147483648
    %v2290 = vxor.u32 %v2274, 2147483648
    %v2291 = vxor.u32 %v2275, 2147483648
    %v2292 = vxor.u32 %v2276, 2147483648
    %v2293 = vxor.u32 %v2277, 2147483648
    %v2294 = vxor.u32 %v2278, 2147483648
    %v2295 = vxor.u32 %v2279, 2147483648
    %v2296 = vmul.f32 %v2280, 1.442695
    %v2297 = vpow.pop %v2296
    %v2298 = vmul.f32 %v2281, 1.442695
    %v2299 = vpow.pop %v2298
    %v2300 = vmul.f32 %v2282, 1.442695
    %v2301 = vpow.pop %v2300
    %v2302 = vmul.f32 %v2283, 1.442695
    %v2303 = vpow.pop %v2302
    %v2304 = vmul.f32 %v2284, 1.442695
    %v2305 = vpow.pop %v2304
    %v2306 = vmul.f32 %v2285, 1.442695
    %v2307 = vpow.pop %v2306
    %v2308 = vmul.f32 %v2286, 1.442695
    %v2309 = vpow.pop %v2308
    %v2310 = vmul.f32 %v2287, 1.442695
    %v2311 = vpow.pop %v2310
    %v2312 = vmul.f32 %v2288, 1.442695
    %v2313 = vpow.pop %v2312
    %v2314 = vmul.f32 %v2289, 1.442695
    %v2315 = vpow.pop %v2314
    %v2316 = vmul.f32 %v2290, 1.442695
    %v2317 = vpow.pop %v2316
    %v2318 = vmul.f32 %v2291, 1.442695
    %v2319 = vpow.pop %v2318
    %v2320 = vmul.f32 %v2292, 1.442695
    %v2321 = vpow.pop %v2320
    %v2322 = vmul.f32 %v2293, 1.442695
    %v2323 = vpow.pop %v2322
    %v2324 = vmul.f32 %v2294, 1.442695
    %v2325 = vpow.pop %v2324
    %v2326 = vmul.f32 %v2295, 1.442695
    %v2327 = vpow.pop %v2326
    %v2328 = vadd.f32 %v2297, 1.0
    %v2329 = vadd.f32 %v2299, 1.0
    %v2330 = vadd.f32 %v2301, 1.0
    %v2331 = vadd.f32 %v2303, 1.0
    %v2332 = vadd.f32 %v2305, 1.0
    %v2333 = vadd.f32 %v2307, 1.0
    %v2334 = vadd.f32 %v2309, 1.0
    %v2335 = vadd.f32 %v2311, 1.0
    %v2336 = vadd.f32 %v2313, 1.0
    %v2337 = vadd.f32 %v2315, 1.0
    %v2338 = vadd.f32 %v2317, 1.0
    %v2339 = vadd.f32 %v2319, 1.0
    %v2340 = vadd.f32 %v2321, 1.0
    %v2341 = vadd.f32 %v2323, 1.0
    %v2342 = vadd.f32 %v2325, 1.0
    %v2343 = vadd.f32 %v2327, 1.0
    %v2344 = vrcp.pop %v2328
    %v2345 = vmul.f32 1.0, %v2344
    %v2346 = vrcp.pop %v2329
    %v2347 = vmul.f32 1.0, %v2346
    %v2348 = vrcp.pop %v2330
    %v2349 = vmul.f32 1.0, %v2348
    %v2350 = vrcp.pop %v2331
    %v2351 = vmul.f32 1.0, %v2350
    %v2352 = vrcp.pop %v2332
    %v2353 = vmul.f32 1.0, %v2352
    %v2354 = vrcp.pop %v2333
    %v2355 = vmul.f32 1.0, %v2354
    %v2356 = vrcp.pop %v2334
    %v2357 = vmul.f32 1.0, %v2356
    %v2358 = vrcp.pop %v2335
    %v2359 = vmul.f32 1.0, %v2358
    %v2360 = vrcp.pop %v2336
    %v2361 = vmul.f32 1.0, %v2360
    %v2362 = vrcp.pop %v2337
    %v2363 = vmul.f32 1.0, %v2362
    %v2364 = vrcp.pop %v2338
    %v2365 = vmul.f32 1.0, %v2364
    %v2366 = vrcp.pop %v2339
    %v2367 = vmul.f32 1.0, %v2366
    %v2368 = vrcp.pop %v2340
    %v2369 = vmul.f32 1.0, %v2368
    %v2370 = vrcp.pop %v2341
    %v2371 = vmul.f32 1.0, %v2370
    %v2372 = vrcp.pop %v2342
    %v2373 = vmul.f32 1.0, %v2372
    %v2374 = vrcp.pop %v2343
    %v2375 = vmul.f32 1.0, %v2374
    %v2376 = vmul.f32 %v2345, %v1732
    %v2377 = vmul.f32 %v2347, %v1732
    %v2378 = vmul.f32 %v2349, %v1732
    %v2379 = vmul.f32 %v2351, %v1732
    %v2380 = vmul.f32 %v2353, %v1732
    %v2381 = vmul.f32 %v2355, %v1732
    %v2382 = vmul.f32 %v2357, %v1732
    %v2383 = vmul.f32 %v2359, %v1732
    %v2384 = vmul.f32 %v2361, %v1732
    %v2385 = vmul.f32 %v2363, %v1732
    %v2386 = vmul.f32 %v2365, %v1732
    %v2387 = vmul.f32 %v2367, %v1732
    %v2388 = vmul.f32 %v2369, %v1732
    %v2389 = vmul.f32 %v2371, %v1732
    %v2390 = vmul.f32 %v2373, %v1732
    %v2391 = vmul.f32 %v2375, %v1732
    %v2392 = vadd.f32 %v2200, %v2376
    %v2393 = vadd.f32 %v2201, %v2377
    %v2394 = vadd.f32 %v2202, %v2378
    %v2395 = vadd.f32 %v2203, %v2379
    %v2396 = vadd.f32 %v2204, %v2380
    %v2397 = vadd.f32 %v2205, %v2381
    %v2398 = vadd.f32 %v2206, %v2382
    %v2399 = vadd.f32 %v2207, %v2383
    %v2400 = vadd.f32 %v2208, %v2384
    %v2401 = vadd.f32 %v2209, %v2385
    %v2402 = vadd.f32 %v2210, %v2386
    %v2403 = vadd.f32 %v2211, %v2387
    %v2404 = vadd.f32 %v2212, %v2388
    %v2405 = vadd.f32 %v2213, %v2389
    %v2406 = vadd.f32 %v2214, %v2390
    %v2407 = vadd.f32 %v2215, %v2391
    %s2408 = sld [smem:[#allocation3 + $0x80]]
    %s2409 = sld [smem:[#allocation3 + $0x81]]
    %s2410 = sld [smem:[#allocation3 + $0x82]]
    %v2411 = vstv %s2409
    %v2412 = vmul.f32 %v2411, %v1909
    %v2413 = vmul.f32 %v2411, %v1910
    %v2414 = vmul.f32 %v2411, %v1911
    %v2415 = vmul.f32 %v2411, %v1912
    %v2416 = vmul.f32 %v2411, %v1913
    %v2417 = vmul.f32 %v2411, %v1914
    %v2418 = vmul.f32 %v2411, %v1915
    %v2419 = vmul.f32 %v2411, %v1916
    %v2420 = vmul.f32 %v2411, %v1917
    %v2421 = vmul.f32 %v2411, %v1918
    %v2422 = vmul.f32 %v2411, %v1919
    %v2423 = vmul.f32 %v2411, %v1920
    %v2424 = vmul.f32 %v2411, %v1921
    %v2425 = vmul.f32 %v2411, %v1922
    %v2426 = vmul.f32 %v2411, %v1923
    %v2427 = vmul.f32 %v2411, %v1924
    %v2428 = vstv %s2408
    %v2429 = vadd.f32 %v2428, %v2412
    %v2430 = vadd.f32 %v2428, %v2413
    %v2431 = vadd.f32 %v2428, %v2414
    %v2432 = vadd.f32 %v2428, %v2415
    %v2433 = vadd.f32 %v2428, %v2416
    %v2434 = vadd.f32 %v2428, %v2417
    %v2435 = vadd.f32 %v2428, %v2418
    %v2436 = vadd.f32 %v2428, %v2419
    %v2437 = vadd.f32 %v2428, %v2420
    %v2438 = vadd.f32 %v2428, %v2421
    %v2439 = vadd.f32 %v2428, %v2422
    %v2440 = vadd.f32 %v2428, %v2423
    %v2441 = vadd.f32 %v2428, %v2424
    %v2442 = vadd.f32 %v2428, %v2425
    %v2443 = vadd.f32 %v2428, %v2426
    %v2444 = vadd.f32 %v2428, %v2427
    %v2445 = vstv %s2410
    %v2446 = vmul.f32 %v2445, %v1530
    %v2447 = vadd.f32 %v2429, %v2446
    %v2448 = vadd.f32 %v2430, %v2446
    %v2449 = vadd.f32 %v2431, %v2446
    %v2450 = vadd.f32 %v2432, %v2446
    %v2451 = vadd.f32 %v2433, %v2446
    %v2452 = vadd.f32 %v2434, %v2446
    %v2453 = vadd.f32 %v2435, %v2446
    %v2454 = vadd.f32 %v2436, %v2446
    %v2455 = vadd.f32 %v2437, %v2446
    %v2456 = vadd.f32 %v2438, %v2446
    %v2457 = vadd.f32 %v2439, %v2446
    %v2458 = vadd.f32 %v2440, %v2446
    %v2459 = vadd.f32 %v2441, %v2446
    %v2460 = vadd.f32 %v2442, %v2446
    %v2461 = vadd.f32 %v2443, %v2446
    %v2462 = vadd.f32 %v2444, %v2446
    %v2463 = vmul.f32 %v1424, %v2447
    %v2464 = vmul.f32 %v1429, %v2448
    %v2465 = vmul.f32 %v1434, %v2449
    %v2466 = vmul.f32 %v1439, %v2450
    %v2467 = vmul.f32 %v1444, %v2451
    %v2468 = vmul.f32 %v1449, %v2452
    %v2469 = vmul.f32 %v1454, %v2453
    %v2470 = vmul.f32 %v1459, %v2454
    %v2471 = vmul.f32 %v1464, %v2455
    %v2472 = vmul.f32 %v1469, %v2456
    %v2473 = vmul.f32 %v1474, %v2457
    %v2474 = vmul.f32 %v1479, %v2458
    %v2475 = vmul.f32 %v1484, %v2459
    %v2476 = vmul.f32 %v1489, %v2460
    %v2477 = vmul.f32 %v1494, %v2461
    %v2478 = vmul.f32 %v1499, %v2462
    %s2479 = sld [smem:[#allocation3 + $0x100]]
    %s2480 = sld [smem:[#allocation3 + $0x101]]
    %s2481 = sld [smem:[#allocation3 + $0x102]]
    %v2482 = vstv %s2480
    %v2483 = vmul.f32 %v2482, %v2392
    %v2484 = vmul.f32 %v2482, %v2393
    %v2485 = vmul.f32 %v2482, %v2394
    %v2486 = vmul.f32 %v2482, %v2395
    %v2487 = vmul.f32 %v2482, %v2396
    %v2488 = vmul.f32 %v2482, %v2397
    %v2489 = vmul.f32 %v2482, %v2398
    %v2490 = vmul.f32 %v2482, %v2399
    %v2491 = vmul.f32 %v2482, %v2400
    %v2492 = vmul.f32 %v2482, %v2401
    %v2493 = vmul.f32 %v2482, %v2402
    %v2494 = vmul.f32 %v2482, %v2403
    %v2495 = vmul.f32 %v2482, %v2404
    %v2496 = vmul.f32 %v2482, %v2405
    %v2497 = vmul.f32 %v2482, %v2406
    %v2498 = vmul.f32 %v2482, %v2407
    %v2499 = vstv %s2479
    %v2500 = vadd.f32 %v2499, %v2483
    %v2501 = vadd.f32 %v2499, %v2484
    %v2502 = vadd.f32 %v2499, %v2485
    %v2503 = vadd.f32 %v2499, %v2486
    %v2504 = vadd.f32 %v2499, %v2487
    %v2505 = vadd.f32 %v2499, %v2488
    %v2506 = vadd.f32 %v2499, %v2489
    %v2507 = vadd.f32 %v2499, %v2490
    %v2508 = vadd.f32 %v2499, %v2491
    %v2509 = vadd.f32 %v2499, %v2492
    %v2510 = vadd.f32 %v2499, %v2493
    %v2511 = vadd.f32 %v2499, %v2494
    %v2512 = vadd.f32 %v2499, %v2495
    %v2513 = vadd.f32 %v2499, %v2496
    %v2514 = vadd.f32 %v2499, %v2497
    %v2515 = vadd.f32 %v2499, %v2498
    %v2516 = vstv %s2481
    %v2517 = vmul.f32 %v2516, %v2023
    %v2518 = vadd.f32 %v2500, %v2517
    %v2519 = vadd.f32 %v2501, %v2517
    %v2520 = vadd.f32 %v2502, %v2517
    %v2521 = vadd.f32 %v2503, %v2517
    %v2522 = vadd.f32 %v2504, %v2517
    %v2523 = vadd.f32 %v2505, %v2517
    %v2524 = vadd.f32 %v2506, %v2517
    %v2525 = vadd.f32 %v2507, %v2517
    %v2526 = vadd.f32 %v2508, %v2517
    %v2527 = vadd.f32 %v2509, %v2517
    %v2528 = vadd.f32 %v2510, %v2517
    %v2529 = vadd.f32 %v2511, %v2517
    %v2530 = vadd.f32 %v2512, %v2517
    %v2531 = vadd.f32 %v2513, %v2517
    %v2532 = vadd.f32 %v2514, %v2517
    %v2533 = vadd.f32 %v2515, %v2517
    %v2534 = vmul.f32 %v1980, %v2518
    %v2535 = vmul.f32 %v1981, %v2519
    %v2536 = vmul.f32 %v1982, %v2520
    %v2537 = vmul.f32 %v1983, %v2521
    %v2538 = vmul.f32 %v1984, %v2522
    %v2539 = vmul.f32 %v1985, %v2523
    %v2540 = vmul.f32 %v1986, %v2524
    %v2541 = vmul.f32 %v1987, %v2525
    %v2542 = vmul.f32 %v1988, %v2526
    %v2543 = vmul.f32 %v1989, %v2527
    %v2544 = vmul.f32 %v1990, %v2528
    %v2545 = vmul.f32 %v1991, %v2529
    %v2546 = vmul.f32 %v1992, %v2530
    %v2547 = vmul.f32 %v1993, %v2531
    %v2548 = vmul.f32 %v1994, %v2532
    %v2549 = vmul.f32 %v1995, %v2533
    %v2550 = vadd.f32 %v2463, %v2534
    %v2551 = vadd.f32 %v2464, %v2535
    %v2552 = vadd.f32 %v2465, %v2536
    %v2553 = vadd.f32 %v2466, %v2537
    %v2554 = vadd.f32 %v2467, %v2538
    %v2555 = vadd.f32 %v2468, %v2539
    %v2556 = vadd.f32 %v2469, %v2540
    %v2557 = vadd.f32 %v2470, %v2541
    %v2558 = vadd.f32 %v2471, %v2542
    %v2559 = vadd.f32 %v2472, %v2543
    %v2560 = vadd.f32 %v2473, %v2544
    %v2561 = vadd.f32 %v2474, %v2545
    %v2562 = vadd.f32 %v2475, %v2546
    %v2563 = vadd.f32 %v2476, %v2547
    %v2564 = vadd.f32 %v2477, %v2548
    %v2565 = vadd.f32 %v2478, %v2549
    %v2566 = vadd.f32 %v2550, %v2551
    %v2567 = vadd.f32 %v2566, %v2552
    %v2568 = vadd.f32 %v2567, %v2553
    %v2569 = vadd.f32 %v2568, %v2554
    %v2570 = vadd.f32 %v2569, %v2555
    %v2571 = vadd.f32 %v2570, %v2556
    %v2572 = vadd.f32 %v2571, %v2557
    %v2573 = vadd.f32 %v2572, %v2558
    %v2574 = vadd.f32 %v2573, %v2559
    %v2575 = vadd.f32 %v2574, %v2560
    %v2576 = vadd.f32 %v2575, %v2561
    %v2577 = vadd.f32 %v2576, %v2562
    %v2578 = vadd.f32 %v2577, %v2563
    %v2579 = vadd.f32 %v2578, %v2564
    %v2580 = vadd.f32 %v2579, %v2565
    %v2581 = vrot.slane %v2580, 4
    %v2582 = vadd.f32 %v2580, %v2581
    %v2583 = vrot.slane %v2582, 2
    %v2584 = vadd.f32 %v2582, %v2583
    %v2585 = vrot.slane %v2584, 1
    %v2586 = vadd.f32 %v2584, %v2585
    %v2587 = vmul.f32 %v2586, %v1523
    %v2588 = vxor.u32 %v2587, 2147483648
    %v2589 = vmul.f32 %v2588, 1.442695
    %v2590 = vpow.pop %v2589
    %v2591 = vadd.f32 %v2590, 1.0
    %v2592 = vrcp.pop %v2591
    %v2593 = vmul.f32 1.0, %v2592
    %v2594 = vmul.f32 %v2550, %v1535
    %v2595 = vmul.f32 %v2551, %v1535
    %v2596 = vmul.f32 %v2552, %v1535
    %v2597 = vmul.f32 %v2553, %v1535
    %v2598 = vmul.f32 %v2554, %v1535
    %v2599 = vmul.f32 %v2555, %v1535
    %v2600 = vmul.f32 %v2556, %v1535
    %v2601 = vmul.f32 %v2557, %v1535
    %v2602 = vmul.f32 %v2558, %v1535
    %v2603 = vmul.f32 %v2559, %v1535
    %v2604 = vmul.f32 %v2560, %v1535
    %v2605 = vmul.f32 %v2561, %v1535
    %v2606 = vmul.f32 %v2562, %v1535
    %v2607 = vmul.f32 %v2563, %v1535
    %v2608 = vmul.f32 %v2564, %v1535
    %v2609 = vmul.f32 %v2565, %v1535
    %2610 = vadd.xlane.f32.xlu0 %v2594
    %v2611 = vpop.xlane.xlu0 %2610
    %2612 = vadd.xlane.f32.xlu0 %v2595
    %v2613 = vpop.xlane.xlu0 %2612
    %2614 = vadd.xlane.f32.xlu0 %v2596
    %v2615 = vpop.xlane.xlu0 %2614
    %2616 = vadd.xlane.f32.xlu0 %v2597
    %v2617 = vpop.xlane.xlu0 %2616
    %2618 = vadd.xlane.f32.xlu0 %v2598
    %v2619 = vpop.xlane.xlu0 %2618
    %2620 = vadd.xlane.f32.xlu0 %v2599
    %v2621 = vpop.xlane.xlu0 %2620
    %2622 = vadd.xlane.f32.xlu0 %v2600
    %v2623 = vpop.xlane.xlu0 %2622
    %2624 = vadd.xlane.f32.xlu0 %v2601
    %v2625 = vpop.xlane.xlu0 %2624
    %2626 = vadd.xlane.f32.xlu0 %v2602
    %v2627 = vpop.xlane.xlu0 %2626
    %2628 = vadd.xlane.f32.xlu0 %v2603
    %v2629 = vpop.xlane.xlu0 %2628
    %2630 = vadd.xlane.f32.xlu0 %v2604
    %v2631 = vpop.xlane.xlu0 %2630
    %2632 = vadd.xlane.f32.xlu0 %v2605
    %v2633 = vpop.xlane.xlu0 %2632
    %2634 = vadd.xlane.f32.xlu0 %v2606
    %v2635 = vpop.xlane.xlu0 %2634
    %2636 = vadd.xlane.f32.xlu0 %v2607
    %v2637 = vpop.xlane.xlu0 %2636
    %2638 = vadd.xlane.f32.xlu0 %v2608
    %v2639 = vpop.xlane.xlu0 %2638
    %2640 = vadd.xlane.f32.xlu0 %v2609
    %v2641 = vpop.xlane.xlu0 %2640
    %v2642 = vmul.f32 %v2611, 0.015625
    %v2643 = vmul.f32 %v2613, 0.015625
    %v2644 = vmul.f32 %v2615, 0.015625
    %v2645 = vmul.f32 %v2617, 0.015625
    %v2646 = vmul.f32 %v2619, 0.015625
    %v2647 = vmul.f32 %v2621, 0.015625
    %v2648 = vmul.f32 %v2623, 0.015625
    %v2649 = vmul.f32 %v2625, 0.015625
    %v2650 = vmul.f32 %v2627, 0.015625
    %v2651 = vmul.f32 %v2629, 0.015625
    %v2652 = vmul.f32 %v2631, 0.015625
    %v2653 = vmul.f32 %v2633, 0.015625
    %v2654 = vmul.f32 %v2635, 0.015625
    %v2655 = vmul.f32 %v2637, 0.015625
    %v2656 = vmul.f32 %v2639, 0.015625
    %v2657 = vmul.f32 %v2641, 0.015625
    %v2658 = vxor.u32 %v2642, 2147483648
    %v2659 = vxor.u32 %v2643, 2147483648
    %v2660 = vxor.u32 %v2644, 2147483648
    %v2661 = vxor.u32 %v2645, 2147483648
    %v2662 = vxor.u32 %v2646, 2147483648
    %v2663 = vxor.u32 %v2647, 2147483648
    %v2664 = vxor.u32 %v2648, 2147483648
    %v2665 = vxor.u32 %v2649, 2147483648
    %v2666 = vxor.u32 %v2650, 2147483648
    %v2667 = vxor.u32 %v2651, 2147483648
    %v2668 = vxor.u32 %v2652, 2147483648
    %v2669 = vxor.u32 %v2653, 2147483648
    %v2670 = vxor.u32 %v2654, 2147483648
    %v2671 = vxor.u32 %v2655, 2147483648
    %v2672 = vxor.u32 %v2656, 2147483648
    %v2673 = vxor.u32 %v2657, 2147483648
    %v2674 = vmul.f32 %v2658, 1.442695
    %v2675 = vpow.pop %v2674
    %v2676 = vmul.f32 %v2659, 1.442695
    %v2677 = vpow.pop %v2676
    %v2678 = vmul.f32 %v2660, 1.442695
    %v2679 = vpow.pop %v2678
    %v2680 = vmul.f32 %v2661, 1.442695
    %v2681 = vpow.pop %v2680
    %v2682 = vmul.f32 %v2662, 1.442695
    %v2683 = vpow.pop %v2682
    %v2684 = vmul.f32 %v2663, 1.442695
    %v2685 = vpow.pop %v2684
    %v2686 = vmul.f32 %v2664, 1.442695
    %v2687 = vpow.pop %v2686
    %v2688 = vmul.f32 %v2665, 1.442695
    %v2689 = vpow.pop %v2688
    %v2690 = vmul.f32 %v2666, 1.442695
    %v2691 = vpow.pop %v2690
    %v2692 = vmul.f32 %v2667, 1.442695
    %v2693 = vpow.pop %v2692
    %v2694 = vmul.f32 %v2668, 1.442695
    %v2695 = vpow.pop %v2694
    %v2696 = vmul.f32 %v2669, 1.442695
    %v2697 = vpow.pop %v2696
    %v2698 = vmul.f32 %v2670, 1.442695
    %v2699 = vpow.pop %v2698
    %v2700 = vmul.f32 %v2671, 1.442695
    %v2701 = vpow.pop %v2700
    %v2702 = vmul.f32 %v2672, 1.442695
    %v2703 = vpow.pop %v2702
    %v2704 = vmul.f32 %v2673, 1.442695
    %v2705 = vpow.pop %v2704
    %v2706 = vadd.f32 %v2675, 1.0
    %v2707 = vadd.f32 %v2677, 1.0
    %v2708 = vadd.f32 %v2679, 1.0
    %v2709 = vadd.f32 %v2681, 1.0
    %v2710 = vadd.f32 %v2683, 1.0
    %v2711 = vadd.f32 %v2685, 1.0
    %v2712 = vadd.f32 %v2687, 1.0
    %v2713 = vadd.f32 %v2689, 1.0
    %v2714 = vadd.f32 %v2691, 1.0
    %v2715 = vadd.f32 %v2693, 1.0
    %v2716 = vadd.f32 %v2695, 1.0
    %v2717 = vadd.f32 %v2697, 1.0
    %v2718 = vadd.f32 %v2699, 1.0
    %v2719 = vadd.f32 %v2701, 1.0
    %v2720 = vadd.f32 %v2703, 1.0
    %v2721 = vadd.f32 %v2705, 1.0
    %v2722 = vrcp.pop %v2706
    %v2723 = vmul.f32 1.0, %v2722
    %v2724 = vrcp.pop %v2707
    %v2725 = vmul.f32 1.0, %v2724
    %v2726 = vrcp.pop %v2708
    %v2727 = vmul.f32 1.0, %v2726
    %v2728 = vrcp.pop %v2709
    %v2729 = vmul.f32 1.0, %v2728
    %v2730 = vrcp.pop %v2710
    %v2731 = vmul.f32 1.0, %v2730
    %v2732 = vrcp.pop %v2711
    %v2733 = vmul.f32 1.0, %v2732
    %v2734 = vrcp.pop %v2712
    %v2735 = vmul.f32 1.0, %v2734
    %v2736 = vrcp.pop %v2713
    %v2737 = vmul.f32 1.0, %v2736
    %v2738 = vrcp.pop %v2714
    %v2739 = vmul.f32 1.0, %v2738
    %v2740 = vrcp.pop %v2715
    %v2741 = vmul.f32 1.0, %v2740
    %v2742 = vrcp.pop %v2716
    %v2743 = vmul.f32 1.0, %v2742
    %v2744 = vrcp.pop %v2717
    %v2745 = vmul.f32 1.0, %v2744
    %v2746 = vrcp.pop %v2718
    %v2747 = vmul.f32 1.0, %v2746
    %v2748 = vrcp.pop %v2719
    %v2749 = vmul.f32 1.0, %v2748
    %v2750 = vrcp.pop %v2720
    %v2751 = vmul.f32 1.0, %v2750
    %v2752 = vrcp.pop %v2721
    %v2753 = vmul.f32 1.0, %v2752
    %v2754 = vmul.f32 %v2723, %v1535
    %v2755 = vmul.f32 %v2725, %v1535
    %v2756 = vmul.f32 %v2727, %v1535
    %v2757 = vmul.f32 %v2729, %v1535
    %v2758 = vmul.f32 %v2731, %v1535
    %v2759 = vmul.f32 %v2733, %v1535
    %v2760 = vmul.f32 %v2735, %v1535
    %v2761 = vmul.f32 %v2737, %v1535
    %v2762 = vmul.f32 %v2739, %v1535
    %v2763 = vmul.f32 %v2741, %v1535
    %v2764 = vmul.f32 %v2743, %v1535
    %v2765 = vmul.f32 %v2745, %v1535
    %v2766 = vmul.f32 %v2747, %v1535
    %v2767 = vmul.f32 %v2749, %v1535
    %v2768 = vmul.f32 %v2751, %v1535
    %v2769 = vmul.f32 %v2753, %v1535
    %v2770 = vadd.f32 %v2754, 0.0
    %v2771 = vadd.f32 %v2755, 0.0
    %v2772 = vadd.f32 %v2756, 0.0
    %v2773 = vadd.f32 %v2757, 0.0
    %v2774 = vadd.f32 %v2758, 0.0
    %v2775 = vadd.f32 %v2759, 0.0
    %v2776 = vadd.f32 %v2760, 0.0
    %v2777 = vadd.f32 %v2761, 0.0
    %v2778 = vadd.f32 %v2762, 0.0
    %v2779 = vadd.f32 %v2763, 0.0
    %v2780 = vadd.f32 %v2764, 0.0
    %v2781 = vadd.f32 %v2765, 0.0
    %v2782 = vadd.f32 %v2766, 0.0
    %v2783 = vadd.f32 %v2767, 0.0
    %v2784 = vadd.f32 %v2768, 0.0
    %v2785 = vadd.f32 %v2769, 0.0
    %v2786 = vmul.f32 %v2550, %v1732
    %v2787 = vmul.f32 %v2551, %v1732
    %v2788 = vmul.f32 %v2552, %v1732
    %v2789 = vmul.f32 %v2553, %v1732
    %v2790 = vmul.f32 %v2554, %v1732
    %v2791 = vmul.f32 %v2555, %v1732
    %v2792 = vmul.f32 %v2556, %v1732
    %v2793 = vmul.f32 %v2557, %v1732
    %v2794 = vmul.f32 %v2558, %v1732
    %v2795 = vmul.f32 %v2559, %v1732
    %v2796 = vmul.f32 %v2560, %v1732
    %v2797 = vmul.f32 %v2561, %v1732
    %v2798 = vmul.f32 %v2562, %v1732
    %v2799 = vmul.f32 %v2563, %v1732
    %v2800 = vmul.f32 %v2564, %v1732
    %v2801 = vmul.f32 %v2565, %v1732
    %2802 = vadd.xlane.f32.xlu0 %v2786
    %v2803 = vpop.xlane.xlu0 %2802
    %2804 = vadd.xlane.f32.xlu0 %v2787
    %v2805 = vpop.xlane.xlu0 %2804
    %2806 = vadd.xlane.f32.xlu0 %v2788
    %v2807 = vpop.xlane.xlu0 %2806
    %2808 = vadd.xlane.f32.xlu0 %v2789
    %v2809 = vpop.xlane.xlu0 %2808
    %2810 = vadd.xlane.f32.xlu0 %v2790
    %v2811 = vpop.xlane.xlu0 %2810
    %2812 = vadd.xlane.f32.xlu0 %v2791
    %v2813 = vpop.xlane.xlu0 %2812
    %2814 = vadd.xlane.f32.xlu0 %v2792
    %v2815 = vpop.xlane.xlu0 %2814
    %2816 = vadd.xlane.f32.xlu0 %v2793
    %v2817 = vpop.xlane.xlu0 %2816
    %2818 = vadd.xlane.f32.xlu0 %v2794
    %v2819 = vpop.xlane.xlu0 %2818
    %2820 = vadd.xlane.f32.xlu0 %v2795
    %v2821 = vpop.xlane.xlu0 %2820
    %2822 = vadd.xlane.f32.xlu0 %v2796
    %v2823 = vpop.xlane.xlu0 %2822
    %2824 = vadd.xlane.f32.xlu0 %v2797
    %v2825 = vpop.xlane.xlu0 %2824
    %2826 = vadd.xlane.f32.xlu0 %v2798
    %v2827 = vpop.xlane.xlu0 %2826
    %2828 = vadd.xlane.f32.xlu0 %v2799
    %v2829 = vpop.xlane.xlu0 %2828
    %2830 = vadd.xlane.f32.xlu0 %v2800
    %v2831 = vpop.xlane.xlu0 %2830
    %2832 = vadd.xlane.f32.xlu0 %v2801
    %v2833 = vpop.xlane.xlu0 %2832
    %v2834 = vmul.f32 %v2803, 0.015625
    %v2835 = vmul.f32 %v2805, 0.015625
    %v2836 = vmul.f32 %v2807, 0.015625
    %v2837 = vmul.f32 %v2809, 0.015625
    %v2838 = vmul.f32 %v2811, 0.015625
    %v2839 = vmul.f32 %v2813, 0.015625
    %v2840 = vmul.f32 %v2815, 0.015625
    %v2841 = vmul.f32 %v2817, 0.015625
    %v2842 = vmul.f32 %v2819, 0.015625
    %v2843 = vmul.f32 %v2821, 0.015625
    %v2844 = vmul.f32 %v2823, 0.015625
    %v2845 = vmul.f32 %v2825, 0.015625
    %v2846 = vmul.f32 %v2827, 0.015625
    %v2847 = vmul.f32 %v2829, 0.015625
    %v2848 = vmul.f32 %v2831, 0.015625
    %v2849 = vmul.f32 %v2833, 0.015625
    %v2850 = vxor.u32 %v2834, 2147483648
    %v2851 = vxor.u32 %v2835, 2147483648
    %v2852 = vxor.u32 %v2836, 2147483648
    %v2853 = vxor.u32 %v2837, 2147483648
    %v2854 = vxor.u32 %v2838, 2147483648
    %v2855 = vxor.u32 %v2839, 2147483648
    %v2856 = vxor.u32 %v2840, 2147483648
    %v2857 = vxor.u32 %v2841, 2147483648
    %v2858 = vxor.u32 %v2842, 2147483648
    %v2859 = vxor.u32 %v2843, 2147483648
    %v2860 = vxor.u32 %v2844, 2147483648
    %v2861 = vxor.u32 %v2845, 2147483648
    %v2862 = vxor.u32 %v2846, 2147483648
    %v2863 = vxor.u32 %v2847, 2147483648
    %v2864 = vxor.u32 %v2848, 2147483648
    %v2865 = vxor.u32 %v2849, 2147483648
    %v2866 = vmul.f32 %v2850, 1.442695
    %v2867 = vpow.pop %v2866
    %v2868 = vmul.f32 %v2851, 1.442695
    %v2869 = vpow.pop %v2868
    %v2870 = vmul.f32 %v2852, 1.442695
    %v2871 = vpow.pop %v2870
    %v2872 = vmul.f32 %v2853, 1.442695
    %v2873 = vpow.pop %v2872
    %v2874 = vmul.f32 %v2854, 1.442695
    %v2875 = vpow.pop %v2874
    %v2876 = vmul.f32 %v2855, 1.442695
    %v2877 = vpow.pop %v2876
    %v2878 = vmul.f32 %v2856, 1.442695
    %v2879 = vpow.pop %v2878
    %v2880 = vmul.f32 %v2857, 1.442695
    %v2881 = vpow.pop %v2880
    %v2882 = vmul.f32 %v2858, 1.442695
    %v2883 = vpow.pop %v2882
    %v2884 = vmul.f32 %v2859, 1.442695
    %v2885 = vpow.pop %v2884
    %v2886 = vmul.f32 %v2860, 1.442695
    %v2887 = vpow.pop %v2886
    %v2888 = vmul.f32 %v2861, 1.442695
    %v2889 = vpow.pop %v2888
    %v2890 = vmul.f32 %v2862, 1.442695
    %v2891 = vpow.pop %v2890
    %v2892 = vmul.f32 %v2863, 1.442695
    %v2893 = vpow.pop %v2892
    %v2894 = vmul.f32 %v2864, 1.442695
    %v2895 = vpow.pop %v2894
    %v2896 = vmul.f32 %v2865, 1.442695
    %v2897 = vpow.pop %v2896
    %v2898 = vadd.f32 %v2867, 1.0
    %v2899 = vadd.f32 %v2869, 1.0
    %v2900 = vadd.f32 %v2871, 1.0
    %v2901 = vadd.f32 %v2873, 1.0
    %v2902 = vadd.f32 %v2875, 1.0
    %v2903 = vadd.f32 %v2877, 1.0
    %v2904 = vadd.f32 %v2879, 1.0
    %v2905 = vadd.f32 %v2881, 1.0
    %v2906 = vadd.f32 %v2883, 1.0
    %v2907 = vadd.f32 %v2885, 1.0
    %v2908 = vadd.f32 %v2887, 1.0
    %v2909 = vadd.f32 %v2889, 1.0
    %v2910 = vadd.f32 %v2891, 1.0
    %v2911 = vadd.f32 %v2893, 1.0
    %v2912 = vadd.f32 %v2895, 1.0
    %v2913 = vadd.f32 %v2897, 1.0
    %v2914 = vrcp.pop %v2898
    %v2915 = vmul.f32 1.0, %v2914
    %v2916 = vrcp.pop %v2899
    %v2917 = vmul.f32 1.0, %v2916
    %v2918 = vrcp.pop %v2900
    %v2919 = vmul.f32 1.0, %v2918
    %v2920 = vrcp.pop %v2901
    %v2921 = vmul.f32 1.0, %v2920
    %v2922 = vrcp.pop %v2902
    %v2923 = vmul.f32 1.0, %v2922
    %v2924 = vrcp.pop %v2903
    %v2925 = vmul.f32 1.0, %v2924
    %v2926 = vrcp.pop %v2904
    %v2927 = vmul.f32 1.0, %v2926
    %v2928 = vrcp.pop %v2905
    %v2929 = vmul.f32 1.0, %v2928
    %v2930 = vrcp.pop %v2906
    %v2931 = vmul.f32 1.0, %v2930
    %v2932 = vrcp.pop %v2907
    %v2933 = vmul.f32 1.0, %v2932
    %v2934 = vrcp.pop %v2908
    %v2935 = vmul.f32 1.0, %v2934
    %v2936 = vrcp.pop %v2909
    %v2937 = vmul.f32 1.0, %v2936
    %v2938 = vrcp.pop %v2910
    %v2939 = vmul.f32 1.0, %v2938
    %v2940 = vrcp.pop %v2911
    %v2941 = vmul.f32 1.0, %v2940
    %v2942 = vrcp.pop %v2912
    %v2943 = vmul.f32 1.0, %v2942
    %v2944 = vrcp.pop %v2913
    %v2945 = vmul.f32 1.0, %v2944
    %v2946 = vmul.f32 %v2915, %v1732
    %v2947 = vmul.f32 %v2917, %v1732
    %v2948 = vmul.f32 %v2919, %v1732
    %v2949 = vmul.f32 %v2921, %v1732
    %v2950 = vmul.f32 %v2923, %v1732
    %v2951 = vmul.f32 %v2925, %v1732
    %v2952 = vmul.f32 %v2927, %v1732
    %v2953 = vmul.f32 %v2929, %v1732
    %v2954 = vmul.f32 %v2931, %v1732
    %v2955 = vmul.f32 %v2933, %v1732
    %v2956 = vmul.f32 %v2935, %v1732
    %v2957 = vmul.f32 %v2937, %v1732
    %v2958 = vmul.f32 %v2939, %v1732
    %v2959 = vmul.f32 %v2941, %v1732
    %v2960 = vmul.f32 %v2943, %v1732
    %v2961 = vmul.f32 %v2945, %v1732
    %v2962 = vadd.f32 %v2770, %v2946
    %v2963 = vadd.f32 %v2771, %v2947
    %v2964 = vadd.f32 %v2772, %v2948
    %v2965 = vadd.f32 %v2773, %v2949
    %v2966 = vadd.f32 %v2774, %v2950
    %v2967 = vadd.f32 %v2775, %v2951
    %v2968 = vadd.f32 %v2776, %v2952
    %v2969 = vadd.f32 %v2777, %v2953
    %v2970 = vadd.f32 %v2778, %v2954
    %v2971 = vadd.f32 %v2779, %v2955
    %v2972 = vadd.f32 %v2780, %v2956
    %v2973 = vadd.f32 %v2781, %v2957
    %v2974 = vadd.f32 %v2782, %v2958
    %v2975 = vadd.f32 %v2783, %v2959
    %v2976 = vadd.f32 %v2784, %v2960
    %v2977 = vadd.f32 %v2785, %v2961
    %s2978 = sld [smem:[#allocation3 + $0x180]]
    %s2979 = sld [smem:[#allocation3 + $0x181]]
    %s2980 = sld [smem:[#allocation3 + $0x182]]
    %v2981 = vstv %s2979
    %v2982 = vmul.f32 %v2981, %v1909
    %v2983 = vmul.f32 %v2981, %v1910
    %v2984 = vmul.f32 %v2981, %v1911
    %v2985 = vmul.f32 %v2981, %v1912
    %v2986 = vmul.f32 %v2981, %v1913
    %v2987 = vmul.f32 %v2981, %v1914
    %v2988 = vmul.f32 %v2981, %v1915
    %v2989 = vmul.f32 %v2981, %v1916
    %v2990 = vmul.f32 %v2981, %v1917
    %v2991 = vmul.f32 %v2981, %v1918
    %v2992 = vmul.f32 %v2981, %v1919
    %v2993 = vmul.f32 %v2981, %v1920
    %v2994 = vmul.f32 %v2981, %v1921
    %v2995 = vmul.f32 %v2981, %v1922
    %v2996 = vmul.f32 %v2981, %v1923
    %v2997 = vmul.f32 %v2981, %v1924
    %v2998 = vstv %s2978
    %v2999 = vadd.f32 %v2998, %v2982
    %v3000 = vadd.f32 %v2998, %v2983
    %v3001 = vadd.f32 %v2998, %v2984
    %v3002 = vadd.f32 %v2998, %v2985
    %v3003 = vadd.f32 %v2998, %v2986
    %v3004 = vadd.f32 %v2998, %v2987
    %v3005 = vadd.f32 %v2998, %v2988
    %v3006 = vadd.f32 %v2998, %v2989
    %v3007 = vadd.f32 %v2998, %v2990
    %v3008 = vadd.f32 %v2998, %v2991
    %v3009 = vadd.f32 %v2998, %v2992
    %v3010 = vadd.f32 %v2998, %v2993
    %v3011 = vadd.f32 %v2998, %v2994
    %v3012 = vadd.f32 %v2998, %v2995
    %v3013 = vadd.f32 %v2998, %v2996
    %v3014 = vadd.f32 %v2998, %v2997
    %v3015 = vstv %s2980
    %v3016 = vmul.f32 %v3015, %v1530
    %v3017 = vadd.f32 %v2999, %v3016
    %v3018 = vadd.f32 %v3000, %v3016
    %v3019 = vadd.f32 %v3001, %v3016
    %v3020 = vadd.f32 %v3002, %v3016
    %v3021 = vadd.f32 %v3003, %v3016
    %v3022 = vadd.f32 %v3004, %v3016
    %v3023 = vadd.f32 %v3005, %v3016
    %v3024 = vadd.f32 %v3006, %v3016
    %v3025 = vadd.f32 %v3007, %v3016
    %v3026 = vadd.f32 %v3008, %v3016
    %v3027 = vadd.f32 %v3009, %v3016
    %v3028 = vadd.f32 %v3010, %v3016
    %v3029 = vadd.f32 %v3011, %v3016
    %v3030 = vadd.f32 %v3012, %v3016
    %v3031 = vadd.f32 %v3013, %v3016
    %v3032 = vadd.f32 %v3014, %v3016
    %v3033 = vmul.f32 %v1424, %v3017
    %v3034 = vmul.f32 %v1429, %v3018
    %v3035 = vmul.f32 %v1434, %v3019
    %v3036 = vmul.f32 %v1439, %v3020
    %v3037 = vmul.f32 %v1444, %v3021
    %v3038 = vmul.f32 %v1449, %v3022
    %v3039 = vmul.f32 %v1454, %v3023
    %v3040 = vmul.f32 %v1459, %v3024
    %v3041 = vmul.f32 %v1464, %v3025
    %v3042 = vmul.f32 %v1469, %v3026
    %v3043 = vmul.f32 %v1474, %v3027
    %v3044 = vmul.f32 %v1479, %v3028
    %v3045 = vmul.f32 %v1484, %v3029
    %v3046 = vmul.f32 %v1489, %v3030
    %v3047 = vmul.f32 %v1494, %v3031
    %v3048 = vmul.f32 %v1499, %v3032
    %s3049 = sld [smem:[#allocation3 + $0x200]]
    %s3050 = sld [smem:[#allocation3 + $0x201]]
    %s3051 = sld [smem:[#allocation3 + $0x202]]
    %v3052 = vstv %s3050
    %v3053 = vmul.f32 %v3052, %v2392
    %v3054 = vmul.f32 %v3052, %v2393
    %v3055 = vmul.f32 %v3052, %v2394
    %v3056 = vmul.f32 %v3052, %v2395
    %v3057 = vmul.f32 %v3052, %v2396
    %v3058 = vmul.f32 %v3052, %v2397
    %v3059 = vmul.f32 %v3052, %v2398
    %v3060 = vmul.f32 %v3052, %v2399
    %v3061 = vmul.f32 %v3052, %v2400
    %v3062 = vmul.f32 %v3052, %v2401
    %v3063 = vmul.f32 %v3052, %v2402
    %v3064 = vmul.f32 %v3052, %v2403
    %v3065 = vmul.f32 %v3052, %v2404
    %v3066 = vmul.f32 %v3052, %v2405
    %v3067 = vmul.f32 %v3052, %v2406
    %v3068 = vmul.f32 %v3052, %v2407
    %v3069 = vstv %s3049
    %v3070 = vadd.f32 %v3069, %v3053
    %v3071 = vadd.f32 %v3069, %v3054
    %v3072 = vadd.f32 %v3069, %v3055
    %v3073 = vadd.f32 %v3069, %v3056
    %v3074 = vadd.f32 %v3069, %v3057
    %v3075 = vadd.f32 %v3069, %v3058
    %v3076 = vadd.f32 %v3069, %v3059
    %v3077 = vadd.f32 %v3069, %v3060
    %v3078 = vadd.f32 %v3069, %v3061
    %v3079 = vadd.f32 %v3069, %v3062
    %v3080 = vadd.f32 %v3069, %v3063
    %v3081 = vadd.f32 %v3069, %v3064
    %v3082 = vadd.f32 %v3069, %v3065
    %v3083 = vadd.f32 %v3069, %v3066
    %v3084 = vadd.f32 %v3069, %v3067
    %v3085 = vadd.f32 %v3069, %v3068
    %v3086 = vstv %s3051
    %v3087 = vmul.f32 %v3086, %v2023
    %v3088 = vadd.f32 %v3070, %v3087
    %v3089 = vadd.f32 %v3071, %v3087
    %v3090 = vadd.f32 %v3072, %v3087
    %v3091 = vadd.f32 %v3073, %v3087
    %v3092 = vadd.f32 %v3074, %v3087
    %v3093 = vadd.f32 %v3075, %v3087
    %v3094 = vadd.f32 %v3076, %v3087
    %v3095 = vadd.f32 %v3077, %v3087
    %v3096 = vadd.f32 %v3078, %v3087
    %v3097 = vadd.f32 %v3079, %v3087
    %v3098 = vadd.f32 %v3080, %v3087
    %v3099 = vadd.f32 %v3081, %v3087
    %v3100 = vadd.f32 %v3082, %v3087
    %v3101 = vadd.f32 %v3083, %v3087
    %v3102 = vadd.f32 %v3084, %v3087
    %v3103 = vadd.f32 %v3085, %v3087
    %v3104 = vmul.f32 %v1980, %v3088
    %v3105 = vmul.f32 %v1981, %v3089
    %v3106 = vmul.f32 %v1982, %v3090
    %v3107 = vmul.f32 %v1983, %v3091
    %v3108 = vmul.f32 %v1984, %v3092
    %v3109 = vmul.f32 %v1985, %v3093
    %v3110 = vmul.f32 %v1986, %v3094
    %v3111 = vmul.f32 %v1987, %v3095
    %v3112 = vmul.f32 %v1988, %v3096
    %v3113 = vmul.f32 %v1989, %v3097
    %v3114 = vmul.f32 %v1990, %v3098
    %v3115 = vmul.f32 %v1991, %v3099
    %v3116 = vmul.f32 %v1992, %v3100
    %v3117 = vmul.f32 %v1993, %v3101
    %v3118 = vmul.f32 %v1994, %v3102
    %v3119 = vmul.f32 %v1995, %v3103
    %v3120 = vadd.f32 %v3033, %v3104
    %v3121 = vadd.f32 %v3034, %v3105
    %v3122 = vadd.f32 %v3035, %v3106
    %v3123 = vadd.f32 %v3036, %v3107
    %v3124 = vadd.f32 %v3037, %v3108
    %v3125 = vadd.f32 %v3038, %v3109
    %v3126 = vadd.f32 %v3039, %v3110
    %v3127 = vadd.f32 %v3040, %v3111
    %v3128 = vadd.f32 %v3041, %v3112
    %v3129 = vadd.f32 %v3042, %v3113
    %v3130 = vadd.f32 %v3043, %v3114
    %v3131 = vadd.f32 %v3044, %v3115
    %v3132 = vadd.f32 %v3045, %v3116
    %v3133 = vadd.f32 %v3046, %v3117
    %v3134 = vadd.f32 %v3047, %v3118
    %v3135 = vadd.f32 %v3048, %v3119
    %s3136 = sld [smem:[#allocation3 + $0x280]]
    %s3137 = sld [smem:[#allocation3 + $0x281]]
    %s3138 = sld [smem:[#allocation3 + $0x282]]
    %v3139 = vstv %s3137
    %v3140 = vmul.f32 %v3139, %v2962
    %v3141 = vmul.f32 %v3139, %v2963
    %v3142 = vmul.f32 %v3139, %v2964
    %v3143 = vmul.f32 %v3139, %v2965
    %v3144 = vmul.f32 %v3139, %v2966
    %v3145 = vmul.f32 %v3139, %v2967
    %v3146 = vmul.f32 %v3139, %v2968
    %v3147 = vmul.f32 %v3139, %v2969
    %v3148 = vmul.f32 %v3139, %v2970
    %v3149 = vmul.f32 %v3139, %v2971
    %v3150 = vmul.f32 %v3139, %v2972
    %v3151 = vmul.f32 %v3139, %v2973
    %v3152 = vmul.f32 %v3139, %v2974
    %v3153 = vmul.f32 %v3139, %v2975
    %v3154 = vmul.f32 %v3139, %v2976
    %v3155 = vmul.f32 %v3139, %v2977
    %v3156 = vstv %s3136
    %v3157 = vadd.f32 %v3156, %v3140
    %v3158 = vadd.f32 %v3156, %v3141
    %v3159 = vadd.f32 %v3156, %v3142
    %v3160 = vadd.f32 %v3156, %v3143
    %v3161 = vadd.f32 %v3156, %v3144
    %v3162 = vadd.f32 %v3156, %v3145
    %v3163 = vadd.f32 %v3156, %v3146
    %v3164 = vadd.f32 %v3156, %v3147
    %v3165 = vadd.f32 %v3156, %v3148
    %v3166 = vadd.f32 %v3156, %v3149
    %v3167 = vadd.f32 %v3156, %v3150
    %v3168 = vadd.f32 %v3156, %v3151
    %v3169 = vadd.f32 %v3156, %v3152
    %v3170 = vadd.f32 %v3156, %v3153
    %v3171 = vadd.f32 %v3156, %v3154
    %v3172 = vadd.f32 %v3156, %v3155
    %v3173 = vstv %s3138
    %v3174 = vmul.f32 %v3173, %v2593
    %v3175 = vadd.f32 %v3157, %v3174
    %v3176 = vadd.f32 %v3158, %v3174
    %v3177 = vadd.f32 %v3159, %v3174
    %v3178 = vadd.f32 %v3160, %v3174
    %v3179 = vadd.f32 %v3161, %v3174
    %v3180 = vadd.f32 %v3162, %v3174
    %v3181 = vadd.f32 %v3163, %v3174
    %v3182 = vadd.f32 %v3164, %v3174
    %v3183 = vadd.f32 %v3165, %v3174
    %v3184 = vadd.f32 %v3166, %v3174
    %v3185 = vadd.f32 %v3167, %v3174
    %v3186 = vadd.f32 %v3168, %v3174
    %v3187 = vadd.f32 %v3169, %v3174
    %v3188 = vadd.f32 %v3170, %v3174
    %v3189 = vadd.f32 %v3171, %v3174
    %v3190 = vadd.f32 %v3172, %v3174
    %v3191 = vmul.f32 %v2550, %v3175
    %v3192 = vmul.f32 %v2551, %v3176
    %v3193 = vmul.f32 %v2552, %v3177
    %v3194 = vmul.f32 %v2553, %v3178
    %v3195 = vmul.f32 %v2554, %v3179
    %v3196 = vmul.f32 %v2555, %v3180
    %v3197 = vmul.f32 %v2556, %v3181
    %v3198 = vmul.f32 %v2557, %v3182
    %v3199 = vmul.f32 %v2558, %v3183
    %v3200 = vmul.f32 %v2559, %v3184
    %v3201 = vmul.f32 %v2560, %v3185
    %v3202 = vmul.f32 %v2561, %v3186
    %v3203 = vmul.f32 %v2562, %v3187
    %v3204 = vmul.f32 %v2563, %v3188
    %v3205 = vmul.f32 %v2564, %v3189
    %v3206 = vmul.f32 %v2565, %v3190
    %v3207 = vadd.f32 %v3120, %v3191
    %v3208 = vadd.f32 %v3121, %v3192
    %v3209 = vadd.f32 %v3122, %v3193
    %v3210 = vadd.f32 %v3123, %v3194
    %v3211 = vadd.f32 %v3124, %v3195
    %v3212 = vadd.f32 %v3125, %v3196
    %v3213 = vadd.f32 %v3126, %v3197
    %v3214 = vadd.f32 %v3127, %v3198
    %v3215 = vadd.f32 %v3128, %v3199
    %v3216 = vadd.f32 %v3129, %v3200
    %v3217 = vadd.f32 %v3130, %v3201
    %v3218 = vadd.f32 %v3131, %v3202
    %v3219 = vadd.f32 %v3132, %v3203
    %v3220 = vadd.f32 %v3133, %v3204
    %v3221 = vadd.f32 %v3134, %v3205
    %v3222 = vadd.f32 %v3135, %v3206
    %v3223 = vld [vmem:[%s1] sm:$0xff]
    %v3224 = vld [vmem:[%s1 + $0x8] sm:$0xff]
    %v3225 = vld [vmem:[%s1 + $0x10] sm:$0xff]
    %v3226 = vld [vmem:[%s1 + $0x18] sm:$0xff]
    %v3227 = vld [vmem:[%s1 + $0x20] sm:$0xff]
    %v3228 = vld [vmem:[%s1 + $0x28] sm:$0xff]
    %v3229 = vld [vmem:[%s1 + $0x30] sm:$0xff]
    %v3230 = vld [vmem:[%s1 + $0x38] sm:$0xff]
    %v3231 = vld [vmem:[%s1 + $0x40] sm:$0xff]
    %v3232 = vld [vmem:[%s1 + $0x48] sm:$0xff]
    %v3233 = vld [vmem:[%s1 + $0x50] sm:$0xff]
    %v3234 = vld [vmem:[%s1 + $0x58] sm:$0xff]
    %v3235 = vld [vmem:[%s1 + $0x60] sm:$0xff]
    %v3236 = vld [vmem:[%s1 + $0x68] sm:$0xff]
    %v3237 = vld [vmem:[%s1 + $0x70] sm:$0xff]
    %v3238 = vld [vmem:[%s1 + $0x78] sm:$0xff]
    %v3239 = vadd.f32 %v3223, %v3207
    %v3240 = vadd.f32 %v3224, %v3208
    %v3241 = vadd.f32 %v3225, %v3209
    %v3242 = vadd.f32 %v3226, %v3210
    %v3243 = vadd.f32 %v3227, %v3211
    %v3244 = vadd.f32 %v3228, %v3212
    %v3245 = vadd.f32 %v3229, %v3213
    %v3246 = vadd.f32 %v3230, %v3214
    %v3247 = vadd.f32 %v3231, %v3215
    %v3248 = vadd.f32 %v3232, %v3216
    %v3249 = vadd.f32 %v3233, %v3217
    %v3250 = vadd.f32 %v3234, %v3218
    %v3251 = vadd.f32 %v3235, %v3219
    %v3252 = vadd.f32 %v3236, %v3220
    %v3253 = vadd.f32 %v3237, %v3221
    %v3254 = vadd.f32 %v3238, %v3222
    %3255 = vst [vmem:[%s7] sm:$0xff] %v3239
    %3256 = vst [vmem:[%s7 + $0x8] sm:$0xff] %v3240
    %3257 = vst [vmem:[%s7 + $0x10] sm:$0xff] %v3241
    %3258 = vst [vmem:[%s7 + $0x18] sm:$0xff] %v3242
    %3259 = vst [vmem:[%s7 + $0x20] sm:$0xff] %v3243
    %3260 = vst [vmem:[%s7 + $0x28] sm:$0xff] %v3244
    %3261 = vst [vmem:[%s7 + $0x30] sm:$0xff] %v3245
    %3262 = vst [vmem:[%s7 + $0x38] sm:$0xff] %v3246
    %3263 = vst [vmem:[%s7 + $0x40] sm:$0xff] %v3247
    %3264 = vst [vmem:[%s7 + $0x48] sm:$0xff] %v3248
    %3265 = vst [vmem:[%s7 + $0x50] sm:$0xff] %v3249
    %3266 = vst [vmem:[%s7 + $0x58] sm:$0xff] %v3250
    %3267 = vst [vmem:[%s7 + $0x60] sm:$0xff] %v3251
    %3268 = vst [vmem:[%s7 + $0x68] sm:$0xff] %v3252
    %3269 = vst [vmem:[%s7 + $0x70] sm:$0xff] %v3253
    %3270 = vst [vmem:[%s7 + $0x78] sm:$0xff] %v3254
    // Predicated region
    $region34: #{nas_cell_forward.1} parent=1 // pred_check
      _
    $region35: #{nas_cell_forward.1} parent=1 // pred_check_branch
      %3272 = sbr.rel (0) target = $region37
    $region36: #{nas_cell_forward.1} parent=1 // pred_region
      _
    $region37: #{nas_cell_forward.1} parent=1 // pred_fallthru
      _
    // Predicated region
    $region38: #{nas_cell_forward.1} parent=1 // pred_check
      _
    $region39: #{nas_cell_forward.1} parent=1 // pred_check_branch
      %3274 = sbr.rel (0) target = $region41
    $region40: #{nas_cell_forward.1} parent=1 // pred_region
      _
    $region41: #{nas_cell_forward.1} parent=1 // pred_fallthru
      _
    %3275 = vsyncpa [#allocation4], 1

</llo_original>
